<compile_context>
chip_gen: v6e
topology: v6e:2x2x1
jax: 0.10.0
libtpu: 0.0.40
codegen_flags: <defaults>
</compile_context>

<pallas_src>
import jax
import jax.numpy as jnp
from jax.experimental import pallas as pl
from jax.experimental.pallas import tpu as pltpu


def graph_attention_kernel(p_ref, x_ref, mask_ref, wv_ref, rows_ref, sc_ref, out_ref):
    TB, C, H = p_ref.shape
    L = x_ref.shape[1]

    p3 = p_ref[...]                                   # (TB, C, H) f32
    x_bf = x_ref[...]                                 # (TB, L, H) bf16

    wk_s = rows_ref[0:1, :]                           # (1, H)  Wk @ ws_k (folded K proj)
    wg_o = rows_ref[1:2, :]                           # (1, H)  wg[:H]
    wg_op = rows_ref[2:3, :]                          # (1, H)  wg[:H] + wg[H:]
    bv = rows_ref[3:4, :]                             # (1, H)  value bias row
    c0 = sc_ref[0, 0]                                 # bk·ws_k + bs   (SMEM scalar)
    bg = sc_ref[0, 1]                                 # gate bias      (SMEM scalar)

    # ---- key-side additive score (VPU rank-1, f32).  The query-side score is
    # constant along L and cancels under the softmax, so Q is never computed. ----
    sk = jnp.sum(x_bf.astype(jnp.float32) * wk_s, axis=-1) + c0          # (TB, L)
    mask2 = mask_ref[...].reshape(TB, L)
    logits = jnp.where(mask2 > 0.5, sk, jnp.float32(-1e9))

    # ---- softmax over L (f32, lane-axis reductions); reciprocal on the EUP ----
    logits = logits - jnp.max(logits, axis=-1, keepdims=True)
    e = jnp.exp(logits)
    attn = e * pl.reciprocal(jnp.sum(e, axis=-1, keepdims=True), approx=True)  # (TB, L)

    # ---- weighted value: sum_l attn*(x Wv + bv) == (attn @ x) Wv + bv ----
    xw = jnp.einsum('bcl,blh->bch',
                    attn[:, None, :].astype(jnp.bfloat16), x_bf,
                    preferred_element_type=jnp.float32).reshape(TB, H)   # (TB, H) f32
    ctx = jnp.dot(xw.astype(jnp.bfloat16), wv_ref[...],
                  preferred_element_type=jnp.float32) + bv               # (TB, H) f32

    # ---- gated residual: g = sigmoid((ctx+p)·wg_o + p·wg_p + bg)
    #                        = sigmoid(ctx·wg_o + p·(wg_o+wg_p) + bg) ----
    ctx_g = jnp.sum(ctx * wg_o, axis=-1, keepdims=True)                  # (TB, 1)
    p_g = jnp.sum(p3 * wg_op, axis=-1, keepdims=True)                    # (TB, C, 1)
    g = jax.nn.sigmoid(ctx_g[:, :, None] + p_g + bg)                     # (TB, C, 1)

    # out = g*(ctx + p) + (1-g)*p = p + g*ctx
    out_ref[...] = p3 + g * ctx[:, None, :]


def _tpu_caps():
    """Best-effort generation query: (physical VMEM bytes, is this a 2-TC chip?)."""
    phys_vmem = 64 * 1024 * 1024          # conservative fallback (v7x per-TC VMEM)
    two_tc = False
    try:
        info = pltpu.get_tpu_info()
        phys_vmem = int(getattr(info, "vmem_capacity_bytes", phys_vmem))
    except Exception:
        pass
    try:
        two_tc = "v7" in jax.devices()[0].device_kind.lower()
    except Exception:
        pass
    return phys_vmem, two_tc


def _pick_tb(B, C, L, H, vmem_budget, two_tc):
    """Batch tile.  Single-TC chips (v5e/v6e): one big step (TB=B) — extra grid steps
    are just a serial loop adding ~0.35us each on an overhead-bound kernel.  v7x
    (2 TCs, 'parallel' axis sharded): keep an even step count >= 4 so each core gets
    >= 2 pipelined iterations.  The budget counts double-buffered pipeline blocks,
    the (double-buffered) constant weight blocks and the f32 in-kernel intermediates."""
    def fits(d):
        blocks = d * (2 * C * H * 4 + L * H * 2 + L * 4)     # p/out f32 + x bf16 + mask
        weights = H * H * 2 + 4 * H * 4                      # Wv bf16 + rank-1 rows f32
        inter = d * (L * H * 4 + 2 * C * H * 4) + 2 * H * 4  # f32 score/ctx/gate temps
        return 2 * (blocks + weights) + inter <= int(vmem_budget * 0.9)

    divs = [d for d in range(1, B + 1) if B % d == 0 and fits(d)] or [1]
    if two_tc:
        pref = ([d for d in divs if (B // d) >= 4 and (B // d) % 2 == 0]
                or [d for d in divs if (B // d) % 2 == 0] or divs)
        return pref[-1]
    return divs[-1]


def graph_attention(p, x, mask, params, tb=None):
    B, C, H = p.shape
    L = x.shape[1]
    # wq / bq are unused: the query-side additive score cancels under the softmax.
    _wq, _bq, wk, bk, wv, bv, ws, bs, wg, bg = params

    # One-time parameter folding / packing (exact algebra, no per-step compute).
    ws_k = ws[H:]                                          # (H, 1)
    wk_s = (wk @ ws_k).reshape(1, H)                       # folded K projection row
    c0 = (bk @ ws_k) + bs                                  # (1, 1) scalar key-score part
    rows = jnp.concatenate(
        [wk_s, wg[:H].reshape(1, H), (wg[:H] + wg[H:]).reshape(1, H), bv],
        axis=0).astype(jnp.float32)                        # (4, H)
    sc = jnp.concatenate([c0.reshape(1, 1), bg.reshape(1, 1)],
                         axis=1).astype(jnp.float32)       # (1, 2) SMEM scalars
    wv_bf = wv.astype(jnp.bfloat16)                        # (H, H) MXU RHS
    x_bf = x.astype(jnp.bfloat16)                          # halve x's DMA bytes

    if mask is None:
        mask = jnp.ones((B, L), jnp.float32)
    mask3 = mask.astype(jnp.float32).reshape(B, 1, L)      # tb-agnostic block shape

    phys_vmem, two_tc = _tpu_caps()
    vmem_limit = max(16 * 1024 * 1024, min(48 * 1024 * 1024, (phys_vmem * 3) // 4))
    if tb is None:
        tb = _pick_tb(B, C, L, H, vmem_limit, two_tc)
    assert B % tb == 0, "batch tile must divide B"

    const = lambda shape: pl.BlockSpec(shape, lambda b: (0,) * len(shape))

    return pl.pallas_call(
        graph_attention_kernel,
        out_shape=jax.ShapeDtypeStruct((B, C, H), jnp.float32),
        grid_spec=pltpu.PrefetchScalarGridSpec(
            num_scalar_prefetch=0,
            grid=(B // tb,),
            in_specs=[
                pl.BlockSpec((tb, C, H), lambda b: (b, 0, 0)),      # p    (f32)
                pl.BlockSpec((tb, L, H), lambda b: (b, 0, 0)),      # x    (bf16)
                pl.BlockSpec((tb, 1, L), lambda b: (b, 0, 0)),      # mask (f32)
                const((H, H)),                                      # Wv   (bf16)
                const((4, H)),                                      # folded rank-1 rows
                pl.BlockSpec(memory_space=pltpu.MemorySpace.SMEM),  # [c0, bg] scalars
            ],
            out_specs=pl.BlockSpec((tb, C, H), lambda b: (b, 0, 0)),
        ),
        compiler_params=pltpu.CompilerParams(
            dimension_semantics=("parallel",),
            vmem_limit_bytes=vmem_limit),
    )(p, x_bf, mask3, wv_bf, rows, sc)


def graph_attention_reference(p, x, mask, params):
    """Pure-JAX fp32 reference mirroring the PyTorch forward."""
    wq, bq, wk, bk, wv, bv, ws, bs, wg, bg = params
    H = p.shape[-1]
    q = p @ wq + bq
    k = x @ wk + bk
    v = x @ wv + bv
    sq = q @ ws[:H]
    sk = k @ ws[H:]
    score = sq + jnp.swapaxes(sk, 1, 2) + bs
    score = jnp.where(mask[:, None, :] == 0.0, -1e9, score)
    score = jax.nn.softmax(score, axis=2)
    out = jnp.einsum('bcl,bld->bcd', score, v) + p
    g = jax.nn.sigmoid(out @ wg[:H] + p @ wg[H:] + bg)
    return g * out + (1.0 - g) * p


if __name__ == "__main__":
    B, C, L, H = 16, 8, 16, 128   # batch, p-seq, x-seq, hidden_size

    key = jax.random.PRNGKey(0)
    keys = jax.random.split(key, 12)

    scale = 0.1
    wq = scale * jax.random.normal(keys[0], (H, H), jnp.float32)
    bq = scale * jax.random.normal(keys[1], (1, H), jnp.float32)
    wk = scale * jax.random.normal(keys[2], (H, H), jnp.float32)
    bk = scale * jax.random.normal(keys[3], (1, H), jnp.float32)
    wv = scale * jax.random.normal(keys[4], (H, H), jnp.float32)
    bv = scale * jax.random.normal(keys[5], (1, H), jnp.float32)
    ws = scale * jax.random.normal(keys[6], (2 * H, 1), jnp.float32)
    bs = scale * jax.random.normal(keys[7], (1, 1), jnp.float32)
    wg = scale * jax.random.normal(keys[8], (2 * H, 1), jnp.float32)
    bg = scale * jax.random.normal(keys[9], (1, 1), jnp.float32)
    params = (wq, bq, wk, bk, wv, bv, ws, bs, wg, bg)

    p = jax.random.normal(keys[10], (B, C, H), jnp.float32)
    x = jax.random.normal(keys[11], (B, L, H), jnp.float32)
    # mask: 1 = valid, 0 = padded (some key positions masked out in two batch rows)
    mask = jnp.ones((B, L), jnp.float32).at[1, L - 5:].set(0.0).at[7, L - 2:].set(0.0)

    out = graph_attention(p, x, mask, params)
    out = jax.block_until_ready(out)

    ref = graph_attention_reference(p, x, mask, params)
    assert out.shape == (B, C, H)
    # bf16 MXU inputs + approx reciprocal -> compare against the fp32 reference loosely
    assert jnp.allclose(out, ref, rtol=5e-2, atol=5e-2), "mismatch vs reference"

    print("KERNEL_OK")
</pallas_src>

<mosaic_0001>
module attributes {stable_mosaic.version = 11 : i64} {
  func.func @graph_attention_kernel(%arg0: i32, %arg1: memref<16x8x128xf32, #tpu.memory_space<vmem>>, %arg2: memref<16x16x128xbf16, #tpu.memory_space<vmem>>, %arg3: memref<16x1x16xf32, #tpu.memory_space<vmem>>, %arg4: memref<128x128xbf16, #tpu.memory_space<vmem>>, %arg5: memref<4x128xf32, #tpu.memory_space<vmem>>, %arg6: memref<1x2xf32, #tpu.memory_space<smem>>, %arg7: memref<16x8x128xf32, #tpu.memory_space<vmem>>) attributes {dimension_semantics = [#tpu.dimension_semantics<parallel>], iteration_bounds = array<i64: 1>, scalar_prefetch = 0 : i64, scratch_operands = 0 : i64, tpu.core_type = #tpu.core_type<tc>, window_params = [{transform_indices = @transform_0, window_bounds = array<i64: 16, 8, 128>}, {transform_indices = @transform_1, window_bounds = array<i64: 16, 16, 128>}, {transform_indices = @transform_2, window_bounds = array<i64: 16, 1, 16>}, {pipeline_mode = #tpu.pipeline_mode<synchronous>, transform_indices = @transform_3, window_bounds = array<i64: 128, 128>}, {pipeline_mode = #tpu.pipeline_mode<synchronous>, transform_indices = @transform_4, window_bounds = array<i64: 4, 128>}, {transform_indices = @transform_5, window_bounds = array<i64: 1, 2>}, {transform_indices = @transform_6, window_bounds = array<i64: 16, 8, 128>}]} {
    %c0 = arith.constant 0 : index
    %c0_0 = arith.constant 0 : index
    %c0_1 = arith.constant 0 : index
    %0 = vector.load %arg1[%c0, %c0_0, %c0_1] : memref<16x8x128xf32, #tpu.memory_space<vmem>>, vector<16x8x128xf32>
    %c0_2 = arith.constant 0 : index
    %c0_3 = arith.constant 0 : index
    %c0_4 = arith.constant 0 : index
    %1 = vector.load %arg2[%c0_2, %c0_3, %c0_4] : memref<16x16x128xbf16, #tpu.memory_space<vmem>>, vector<16x16x128xbf16>
    %c0_5 = arith.constant 0 : index
    %c0_6 = arith.constant 0 : index
    %2 = vector.load %arg5[%c0_5, %c0_6] : memref<4x128xf32, #tpu.memory_space<vmem>>, vector<1x128xf32>
    %c1 = arith.constant 1 : index
    %c0_7 = arith.constant 0 : index
    %3 = vector.load %arg5[%c1, %c0_7] : memref<4x128xf32, #tpu.memory_space<vmem>>, vector<1x128xf32>
    %c2 = arith.constant 2 : index
    %c0_8 = arith.constant 0 : index
    %4 = vector.load %arg5[%c2, %c0_8] : memref<4x128xf32, #tpu.memory_space<vmem>>, vector<1x128xf32>
    %c3 = arith.constant 3 : index
    %c0_9 = arith.constant 0 : index
    %5 = vector.load %arg5[%c3, %c0_9] : memref<4x128xf32, #tpu.memory_space<vmem>>, vector<1x128xf32>
    %c0_10 = arith.constant 0 : index
    %c0_11 = arith.constant 0 : index
    %6 = memref.load %arg6[%c0_10, %c0_11] : memref<1x2xf32, #tpu.memory_space<smem>>
    %c0_12 = arith.constant 0 : index
    %c1_13 = arith.constant 1 : index
    %7 = memref.load %arg6[%c0_12, %c1_13] : memref<1x2xf32, #tpu.memory_space<smem>>
    %8 = arith.extf %1 : vector<16x16x128xbf16> to vector<16x16x128xf32>
    %9 = vector.shape_cast %2 : vector<1x128xf32> to vector<1x1x128xf32>
    %10 = vector.broadcast %9 : vector<1x1x128xf32> to vector<16x16x128xf32>
    %11 = arith.mulf %8, %10 : vector<16x16x128xf32>
    %cst = arith.constant dense<0.000000e+00> : vector<16x16xf32>
    %12 = vector.multi_reduction <add>, %11, %cst [2] : vector<16x16x128xf32> to vector<16x16xf32>
    %13 = vector.broadcast %6 : f32 to vector<16x16xf32>
    %14 = arith.addf %12, %13 : vector<16x16xf32>
    %c0_14 = arith.constant 0 : index
    %c0_15 = arith.constant 0 : index
    %c0_16 = arith.constant 0 : index
    %15 = vector.load %arg3[%c0_14, %c0_15, %c0_16] : memref<16x1x16xf32, #tpu.memory_space<vmem>>, vector<16x1x16xf32>
    %16 = vector.shape_cast %15 : vector<16x1x16xf32> to vector<16x16xf32>
    %cst_17 = arith.constant 5.000000e-01 : f32
    %17 = vector.broadcast %cst_17 : f32 to vector<16x16xf32>
    %18 = arith.cmpf ogt, %16, %17 : vector<16x16xf32>
    %cst_18 = arith.constant -1.000000e+09 : f32
    %19 = vector.broadcast %cst_18 : f32 to vector<16x16xf32>
    %20 = arith.select %18, %14, %19 : vector<16x16xi1>, vector<16x16xf32>
    %cst_19 = arith.constant dense<0xFF800000> : vector<16xf32>
    %21 = vector.multi_reduction <maximumf>, %20, %cst_19 [1] : vector<16x16xf32> to vector<16xf32>
    %22 = vector.shape_cast %21 : vector<16xf32> to vector<16x1xf32>
    %23 = vector.broadcast %22 : vector<16x1xf32> to vector<16x16xf32>
    %24 = arith.subf %20, %23 : vector<16x16xf32>
    %25 = math.exp %24 : vector<16x16xf32>
    %cst_20 = arith.constant dense<0.000000e+00> : vector<16xf32>
    %26 = vector.multi_reduction <add>, %25, %cst_20 [1] : vector<16x16xf32> to vector<16xf32>
    %27 = vector.shape_cast %26 : vector<16xf32> to vector<16x1xf32>
    %28 = tpu.reciprocal %27 {approx = true} : vector<16x1xf32> -> vector<16x1xf32>
    %29 = vector.broadcast %28 : vector<16x1xf32> to vector<16x16xf32>
    %30 = arith.mulf %25, %29 : vector<16x16xf32>
    %31 = vector.shape_cast %30 : vector<16x16xf32> to vector<16x1x16xf32>
    %32 = arith.truncf %31 : vector<16x1x16xf32> to vector<16x1x16xbf16>
    "tpu.trace_start"() <{level = 10 : i32, message = "bcl,blh->bch"}> : () -> ()
    %cst_21 = arith.constant dense<0.000000e+00> : vector<16x1x128xf32>
    %33 = tpu.matmul %32, %1, %cst_21 {dimension_numbers = #tpu.dot_dimension_numbers<[2], [1], [1], [2], [0, 0, 0, 1, 1, 2], [0], [0]>} : vector<16x1x16xbf16>, vector<16x16x128xbf16>, vector<16x1x128xf32> -> vector<16x1x128xf32>
    "tpu.trace_stop"() : () -> ()
    %34 = vector.shape_cast %33 : vector<16x1x128xf32> to vector<16x128xf32>
    %35 = arith.truncf %34 : vector<16x128xf32> to vector<16x128xbf16>
    %c0_22 = arith.constant 0 : index
    %c0_23 = arith.constant 0 : index
    %36 = vector.load %arg4[%c0_22, %c0_23] : memref<128x128xbf16, #tpu.memory_space<vmem>>, vector<128x128xbf16>
    %cst_24 = arith.constant dense<0.000000e+00> : vector<16x128xf32>
    %37 = tpu.matmul %35, %36, %cst_24 {dimension_numbers = #tpu.dot_dimension_numbers<[1], [0], [0], [1], [0, 0, 1, 1], [], []>} : vector<16x128xbf16>, vector<128x128xbf16>, vector<16x128xf32> -> vector<16x128xf32>
    %38 = vector.broadcast %5 : vector<1x128xf32> to vector<16x128xf32>
    %39 = arith.addf %37, %38 : vector<16x128xf32>
    %40 = vector.broadcast %3 : vector<1x128xf32> to vector<16x128xf32>
    %41 = arith.mulf %39, %40 : vector<16x128xf32>
    %cst_25 = arith.constant dense<0.000000e+00> : vector<16xf32>
    %42 = vector.multi_reduction <add>, %41, %cst_25 [1] : vector<16x128xf32> to vector<16xf32>
    %43 = vector.shape_cast %42 : vector<16xf32> to vector<16x1xf32>
    %44 = vector.shape_cast %4 : vector<1x128xf32> to vector<1x1x128xf32>
    %45 = vector.broadcast %44 : vector<1x1x128xf32> to vector<16x8x128xf32>
    %46 = arith.mulf %0, %45 : vector<16x8x128xf32>
    %cst_26 = arith.constant dense<0.000000e+00> : vector<16x8xf32>
    %47 = vector.multi_reduction <add>, %46, %cst_26 [2] : vector<16x8x128xf32> to vector<16x8xf32>
    %48 = vector.shape_cast %47 : vector<16x8xf32> to vector<16x8x1xf32>
    %49 = vector.shape_cast %43 : vector<16x1xf32> to vector<16x1x1xf32>
    %50 = vector.broadcast %49 : vector<16x1x1xf32> to vector<16x8x1xf32>
    %51 = arith.addf %50, %48 : vector<16x8x1xf32>
    %52 = vector.broadcast %7 : f32 to vector<16x8x1xf32>
    %53 = arith.addf %51, %52 : vector<16x8x1xf32>
    %54 = arith.negf %53 : vector<16x8x1xf32>
    %55 = math.exp %54 : vector<16x8x1xf32>
    %cst_27 = arith.constant 1.000000e+00 : f32
    %56 = vector.broadcast %cst_27 : f32 to vector<16x8x1xf32>
    %57 = arith.addf %56, %55 : vector<16x8x1xf32>
    %58 = arith.divf %56, %57 : vector<16x8x1xf32>
    %59 = vector.shape_cast %39 : vector<16x128xf32> to vector<16x1x128xf32>
    %60 = vector.broadcast %58 : vector<16x8x1xf32> to vector<16x8x128xf32>
    %61 = vector.broadcast %59 : vector<16x1x128xf32> to vector<16x8x128xf32>
    %62 = arith.mulf %60, %61 : vector<16x8x128xf32>
    %63 = arith.addf %0, %62 : vector<16x8x128xf32>
    %c0_28 = arith.constant 0 : index
    %c0_29 = arith.constant 0 : index
    %c0_30 = arith.constant 0 : index
    %64 = vector.load %arg7[%c0_28, %c0_29, %c0_30] : memref<16x8x128xf32, #tpu.memory_space<vmem>>, vector<16x8x128xf32>
    tpu.vector_store %arg7[%c0_28, %c0_29, %c0_30], %63 {strides = array<i32>} : memref<16x8x128xf32, #tpu.memory_space<vmem>>, vector<16x8x128xf32>,
    return
  }
  func.func @transform_0(%arg0: i32) -> (i32, i32, i32) {
    %c0_i32 = arith.constant 0 : i32
    %c0_i32_0 = arith.constant 0 : i32
    %c0_i32_1 = arith.constant 0 : i32
    return %arg0, %c0_i32, %c0_i32_0 : i32, i32, i32
  }
  func.func @transform_1(%arg0: i32) -> (i32, i32, i32) {
    %c0_i32 = arith.constant 0 : i32
    %c0_i32_0 = arith.constant 0 : i32
    %c0_i32_1 = arith.constant 0 : i32
    return %arg0, %c0_i32, %c0_i32_0 : i32, i32, i32
  }
  func.func @transform_2(%arg0: i32) -> (i32, i32, i32) {
    %c0_i32 = arith.constant 0 : i32
    %c0_i32_0 = arith.constant 0 : i32
    %c0_i32_1 = arith.constant 0 : i32
    return %arg0, %c0_i32, %c0_i32_0 : i32, i32, i32
  }
  func.func @transform_3(%arg0: i32) -> (i32, i32) {
    %c0_i32 = arith.constant 0 : i32
    %c0_i32_0 = arith.constant 0 : i32
    %c0_i32_1 = arith.constant 0 : i32
    return %c0_i32, %c0_i32_0 : i32, i32
  }
  func.func @transform_4(%arg0: i32) -> (i32, i32) {
    %c0_i32 = arith.constant 0 : i32
    %c0_i32_0 = arith.constant 0 : i32
    %c0_i32_1 = arith.constant 0 : i32
    return %c0_i32, %c0_i32_0 : i32, i32
  }
  func.func @transform_5(%arg0: i32) -> (i32, i32) {
    %c0_i32 = arith.constant 0 : i32
    %c0_i32_0 = arith.constant 0 : i32
    %c0_i32_1 = arith.constant 0 : i32
    return %c0_i32, %c0_i32_0 : i32, i32
  }
  func.func @transform_6(%arg0: i32) -> (i32, i32, i32) {
    %c0_i32 = arith.constant 0 : i32
    %c0_i32_0 = arith.constant 0 : i32
    %c0_i32_1 = arith.constant 0 : i32
    return %arg0, %c0_i32, %c0_i32_0 : i32, i32, i32
  }
}

</mosaic_0001>

<llo_original>
// kernel: tpu_custom_call.1
$region0: #{tpu_custom_call.1}
  #allocation0 [shape = 'u32[]', space=smem, size = 0x4, offset = 0x4, fixed_abs, tag = 'smem constant byte address 0x4 - core index']
  #allocation1 [shape = 'u32[144,128]{1,0:T(1,128)}', space=vmem, size = 0x12000, scoped, tag = 'internal scratch']
  %s0 = inlined_call_operand.hbm [shape: f32[16,8,128], index: 0, kind: input, shape index: {}]
  %s1 = inlined_call_operand.hbm [shape: bf16[16,16,128], index: 1, kind: input, shape index: {}]
  %s2 = inlined_call_operand.hbm [shape: f32[16,1,16], index: 2, kind: input, shape index: {}]
  %s3 = inlined_call_operand.hbm [shape: bf16[128,128], index: 3, kind: input, shape index: {}]
  %s4 = inlined_call_operand.vmem [shape: f32[4,128], index: 4, kind: input, shape index: {}]
  %s5 = inlined_call_operand.vmem [shape: f32[1,2], index: 5, kind: input, shape index: {}]
  %s6 = inlined_call_operand.hbm [shape: f32[16,8,128], index: 6, kind: output, shape index: {}]
  %s7 = sld [smem:[#allocation0]]
  $region54: #{tpu_custom_call.1} parent=0
    _
  %s9 = ssub.s32 1, %s7
  %s10 = scalar_select 0, %s9, %s7
  $region1: #{tpu_custom_call.1} parent=0
    #allocation2 [shape = 'u8[65536]{0}', space=vmem, size = 0x10000, scoped, tag = 'input window, operand 0, single buffered']
    #allocation3 [shape = 's32[1]{0}', space=sflag, size = 0x4, scoped, tag = 'scoped memory for tpu_custom_call.1']
    #allocation4 [shape = 's32[1]{0}', space=sflag, size = 0x4, scoped, tag = 'scoped memory for tpu_custom_call.1']
    #allocation5 [shape = 's32[1]{0}', space=sflag, size = 0x4, scoped, tag = 'scoped memory for tpu_custom_call.1']
    #allocation6 [shape = 'u8[65536]{0}', space=vmem, size = 0x10000, scoped, tag = 'input window, operand 1, single buffered']
    #allocation7 [shape = 's32[1]{0}', space=sflag, size = 0x4, scoped, tag = 'scoped memory for tpu_custom_call.1']
    #allocation8 [shape = 'u8[8192]{0}', space=vmem, size = 0x2000, scoped, tag = 'input window, operand 2, single buffered']
    #allocation9 [shape = 'u8[32768]{0}', space=vmem, size = 0x8000, scoped, tag = 'input window, operand 3, single buffered']
    #allocation10 [shape = 's32[1]{0}', space=sflag, size = 0x4, scoped, tag = 'scoped memory for tpu_custom_call.1']
    #allocation11 [shape = 'u8[512]{0}', space=smem, size = 0x200, scoped, tag = 'input window, operand 5, single buffered']
    #allocation12 [shape = 'u8[65536]{0}', space=vmem, size = 0x10000, scoped, tag = 'output window, operand 0, single buffered']
    %11 = vsyncpa [#allocation3], 0
    %12 = vsyncpa [#allocation7], 0
    %13 = vsyncpa [#allocation10], 0
    %14 = vsyncpa [#allocation5], 0
    %15 = vsyncpa [#allocation4], 0
    // Predicated region
    $region2: #{tpu_custom_call.1} parent=1 // pred_check
      _
    $region3: #{tpu_custom_call.1} parent=1 // pred_check_branch
      %17 = sbr.rel (0) target = $region5
    $region4: #{tpu_custom_call.1} parent=1 // pred_region
      %s19 = ssub.s32 2048, 2048
      %20 = vsyncadd [#allocation3], %s19
      %s21 = sshll.u32 [#allocation2], 4
      %s22 = int_to_ptr.vmem [resolvable:$true] %s21
      %27 = dma.hbm_to_vmem [thread:$0]  %s0, 2048, %s22, [#allocation3], 128, 128, 8
    $region5: #{tpu_custom_call.1} parent=1 // pred_fallthru
      _
    // Predicated region
    $region6: #{tpu_custom_call.1} parent=1 // pred_check
      _
    $region7: #{tpu_custom_call.1} parent=1 // pred_check_branch
      %29 = sbr.rel (0) target = $region9
    $region8: #{tpu_custom_call.1} parent=1 // pred_region
      %s31 = ssub.s32 2048, 2048
      %32 = vsyncadd [#allocation7], %s31
      %s33 = sshll.u32 [#allocation6], 4
      %s34 = int_to_ptr.vmem [resolvable:$true] %s33
      %39 = dma.hbm_to_vmem [thread:$0]  %s1, 2048, %s34, [#allocation7], 64, 64, 4
    $region9: #{tpu_custom_call.1} parent=1 // pred_fallthru
      _
    // Predicated region
    $region10: #{tpu_custom_call.1} parent=1 // pred_check
      _
    $region11: #{tpu_custom_call.1} parent=1 // pred_check_branch
      %41 = sbr.rel (0) target = $region13
    $region12: #{tpu_custom_call.1} parent=1 // pred_region
      %s43 = ssub.s32 256, 256
      %44 = vsyncadd [#allocation7], %s43
      %s45 = sshll.u32 [#allocation8], 4
      %s46 = int_to_ptr.vmem [resolvable:$true] %s45
      %51 = dma.hbm_to_vmem [thread:$0]  %s2, 256, %s46, [#allocation7], 16, 16, 1
    $region13: #{tpu_custom_call.1} parent=1 // pred_fallthru
      _
    // Predicated region
    $region14: #{tpu_custom_call.1} parent=1 // pred_check
      _
    $region15: #{tpu_custom_call.1} parent=1 // pred_check_branch
      %53 = sbr.rel (0) target = $region17
    $region16: #{tpu_custom_call.1} parent=1 // pred_region
      %s55 = ssub.s32 1024, 1024
      %56 = vsyncadd [#allocation10], %s55
      %s57 = sshll.u32 [#allocation9], 4
      %s58 = int_to_ptr.vmem [resolvable:$true] %s57
      %63 = dma.hbm_to_vmem [thread:$0]  %s3, 1024, %s58, [#allocation10], 64, 64, 4
    $region17: #{tpu_custom_call.1} parent=1 // pred_fallthru
      _
    // Predicated region
    $region18: #{tpu_custom_call.1} parent=1 // pred_check
      _
    $region19: #{tpu_custom_call.1} parent=1 // pred_check_branch
      %65 = sbr.rel (0) target = $region21
    $region20: #{tpu_custom_call.1} parent=1 // pred_region
      _
    $region21: #{tpu_custom_call.1} parent=1 // pred_fallthru
      _
    // Predicated region
    $region22: #{tpu_custom_call.1} parent=1 // pred_check
      _
    $region23: #{tpu_custom_call.1} parent=1 // pred_check_branch
      %67 = sbr.rel (0) target = $region25
    $region24: #{tpu_custom_call.1} parent=1 // pred_region
      %s69 = ssub.s32 16, 16
      %70 = vsyncadd [#allocation5], %s69
      %s72 = sshll.u32 %s5, 4
      %s73 = int_to_ptr.vmem [resolvable:$true] %s72
      %75 = dma.vmem_to_smem %s73, 16, [#allocation11], [#allocation5]
    $region25: #{tpu_custom_call.1} parent=1 // pred_fallthru
      _
    // Predicated region
    $region26: #{tpu_custom_call.1} parent=1 // pred_check
      _
    $region27: #{tpu_custom_call.1} parent=1 // pred_check_branch
      %77 = sbr.rel (0) target = $region29
    $region28: #{tpu_custom_call.1} parent=1 // pred_region
      %78 = dma.done [#allocation3], 2048
    $region29: #{tpu_custom_call.1} parent=1 // pred_fallthru
      _
    // Predicated region
    $region30: #{tpu_custom_call.1} parent=1 // pred_check
      _
    $region31: #{tpu_custom_call.1} parent=1 // pred_check_branch
      %80 = sbr.rel (0) target = $region33
    $region32: #{tpu_custom_call.1} parent=1 // pred_region
      %81 = dma.done [#allocation7], 2048
    $region33: #{tpu_custom_call.1} parent=1 // pred_fallthru
      _
    // Predicated region
    $region34: #{tpu_custom_call.1} parent=1 // pred_check
      _
    $region35: #{tpu_custom_call.1} parent=1 // pred_check_branch
      %83 = sbr.rel (0) target = $region37
    $region36: #{tpu_custom_call.1} parent=1 // pred_region
      %84 = dma.done [#allocation7], 256
    $region37: #{tpu_custom_call.1} parent=1 // pred_fallthru
      _
    // Predicated region
    $region38: #{tpu_custom_call.1} parent=1 // pred_check
      _
    $region39: #{tpu_custom_call.1} parent=1 // pred_check_branch
      %86 = sbr.rel (0) target = $region41
    $region40: #{tpu_custom_call.1} parent=1 // pred_region
      %87 = dma.done [#allocation10], 1024
    $region41: #{tpu_custom_call.1} parent=1 // pred_fallthru
      _
    // Predicated region
    $region42: #{tpu_custom_call.1} parent=1 // pred_check
      _
    $region43: #{tpu_custom_call.1} parent=1 // pred_check_branch
      %89 = sbr.rel (0) target = $region45
    $region44: #{tpu_custom_call.1} parent=1 // pred_region
      %90 = dma.done [#allocation5], 16
    $region45: #{tpu_custom_call.1} parent=1 // pred_fallthru
      _
    %91 = sfence
    %v93 = vld [vmem:[#allocation2] sm:$0xff]
    %v94 = vld [vmem:[#allocation2 + $0x8] sm:$0xff]
    %v95 = vld [vmem:[#allocation2 + $0x10] sm:$0xff]
    %v96 = vld [vmem:[#allocation2 + $0x18] sm:$0xff]
    %v97 = vld [vmem:[#allocation2 + $0x20] sm:$0xff]
    %v98 = vld [vmem:[#allocation2 + $0x28] sm:$0xff]
    %v99 = vld [vmem:[#allocation2 + $0x30] sm:$0xff]
    %v100 = vld [vmem:[#allocation2 + $0x38] sm:$0xff]
    %v101 = vld [vmem:[#allocation2 + $0x40] sm:$0xff]
    %v102 = vld [vmem:[#allocation2 + $0x48] sm:$0xff]
    %v103 = vld [vmem:[#allocation2 + $0x50] sm:$0xff]
    %v104 = vld [vmem:[#allocation2 + $0x58] sm:$0xff]
    %v105 = vld [vmem:[#allocation2 + $0x60] sm:$0xff]
    %v106 = vld [vmem:[#allocation2 + $0x68] sm:$0xff]
    %v107 = vld [vmem:[#allocation2 + $0x70] sm:$0xff]
    %v108 = vld [vmem:[#allocation2 + $0x78] sm:$0xff]
    %v109 = vld [vmem:[#allocation6] sm:$0xf]
    %v110 = vld [vmem:[#allocation6 + $0x4] sm:$0xf]
    %v111 = vld [vmem:[#allocation6 + $0x8] sm:$0xf]
    %v112 = vld [vmem:[#allocation6 + $0xc] sm:$0xf]
    %v113 = vld [vmem:[#allocation6 + $0x10] sm:$0xf]
    %v114 = vld [vmem:[#allocation6 + $0x14] sm:$0xf]
    %v115 = vld [vmem:[#allocation6 + $0x18] sm:$0xf]
    %v116 = vld [vmem:[#allocation6 + $0x1c] sm:$0xf]
    %v117 = vld [vmem:[#allocation6 + $0x20] sm:$0xf]
    %v118 = vld [vmem:[#allocation6 + $0x24] sm:$0xf]
    %v119 = vld [vmem:[#allocation6 + $0x28] sm:$0xf]
    %v120 = vld [vmem:[#allocation6 + $0x2c] sm:$0xf]
    %v121 = vld [vmem:[#allocation6 + $0x30] sm:$0xf]
    %v122 = vld [vmem:[#allocation6 + $0x34] sm:$0xf]
    %v123 = vld [vmem:[#allocation6 + $0x38] sm:$0xf]
    %v124 = vld [vmem:[#allocation6 + $0x3c] sm:$0xf]
    %v125 = vld [vmem:[#allocation6 + $0x40] sm:$0xf]
    %v126 = vld [vmem:[#allocation6 + $0x44] sm:$0xf]
    %v127 = vld [vmem:[#allocation6 + $0x48] sm:$0xf]
    %v128 = vld [vmem:[#allocation6 + $0x4c] sm:$0xf]
    %v129 = vld [vmem:[#allocation6 + $0x50] sm:$0xf]
    %v130 = vld [vmem:[#allocation6 + $0x54] sm:$0xf]
    %v131 = vld [vmem:[#allocation6 + $0x58] sm:$0xf]
    %v132 = vld [vmem:[#allocation6 + $0x5c] sm:$0xf]
    %v133 = vld [vmem:[#allocation6 + $0x60] sm:$0xf]
    %v134 = vld [vmem:[#allocation6 + $0x64] sm:$0xf]
    %v135 = vld [vmem:[#allocation6 + $0x68] sm:$0xf]
    %v136 = vld [vmem:[#allocation6 + $0x6c] sm:$0xf]
    %v137 = vld [vmem:[#allocation6 + $0x70] sm:$0xf]
    %v138 = vld [vmem:[#allocation6 + $0x74] sm:$0xf]
    %v139 = vld [vmem:[#allocation6 + $0x78] sm:$0xf]
    %v140 = vld [vmem:[#allocation6 + $0x7c] sm:$0xf]
    %v141 = vld [vmem:[%s4] sm:$0x1]
    %v142 = vld [vmem:[%s4 + $0x1] sm:$0x1]
    %v143 = vld [vmem:[%s4 + $0x2] sm:$0x1]
    %v144 = vld [vmem:[%s4 + $0x3] sm:$0x1]
    %s145 = sld [smem:[#allocation11]]
    %s146 = sld [smem:[#allocation11 + $0x1]]
    %v147 = vunpack.c.l.bf16 %v109
    %v148 = vunpack.c.l.bf16 %v110
    %v149 = vunpack.c.l.bf16 %v111
    %v150 = vunpack.c.l.bf16 %v112
    %v151 = vunpack.c.l.bf16 %v113
    %v152 = vunpack.c.l.bf16 %v114
    %v153 = vunpack.c.l.bf16 %v115
    %v154 = vunpack.c.l.bf16 %v116
    %v155 = vunpack.c.l.bf16 %v117
    %v156 = vunpack.c.l.bf16 %v118
    %v157 = vunpack.c.l.bf16 %v119
    %v158 = vunpack.c.l.bf16 %v120
    %v159 = vunpack.c.l.bf16 %v121
    %v160 = vunpack.c.l.bf16 %v122
    %v161 = vunpack.c.l.bf16 %v123
    %v162 = vunpack.c.l.bf16 %v124
    %v163 = vunpack.c.l.bf16 %v125
    %v164 = vunpack.c.l.bf16 %v126
    %v165 = vunpack.c.l.bf16 %v127
    %v166 = vunpack.c.l.bf16 %v128
    %v167 = vunpack.c.l.bf16 %v129
    %v168 = vunpack.c.l.bf16 %v130
    %v169 = vunpack.c.l.bf16 %v131
    %v170 = vunpack.c.l.bf16 %v132
    %v171 = vunpack.c.l.bf16 %v133
    %v172 = vunpack.c.l.bf16 %v134
    %v173 = vunpack.c.l.bf16 %v135
    %v174 = vunpack.c.l.bf16 %v136
    %v175 = vunpack.c.l.bf16 %v137
    %v176 = vunpack.c.l.bf16 %v138
    %v177 = vunpack.c.l.bf16 %v139
    %v178 = vunpack.c.l.bf16 %v140
    %v179 = vlaneseq
    %v180 = vshrl.u32 %v179, 7
    %v181 = vsub.s32 0, %v180
    %v182 = vrot.slane %v141, %v181
    %v183 = vmul.f32 %v147, %v182
    %v184 = vmul.f32 %v148, %v182
    %v185 = vmul.f32 %v149, %v182
    %v186 = vmul.f32 %v150, %v182
    %v187 = vmul.f32 %v151, %v182
    %v188 = vmul.f32 %v152, %v182
    %v189 = vmul.f32 %v153, %v182
    %v190 = vmul.f32 %v154, %v182
    %v191 = vmul.f32 %v155, %v182
    %v192 = vmul.f32 %v156, %v182
    %v193 = vmul.f32 %v157, %v182
    %v194 = vmul.f32 %v158, %v182
    %v195 = vmul.f32 %v159, %v182
    %v196 = vmul.f32 %v160, %v182
    %v197 = vmul.f32 %v161, %v182
    %v198 = vmul.f32 %v162, %v182
    %v199 = vmul.f32 %v163, %v182
    %v200 = vmul.f32 %v164, %v182
    %v201 = vmul.f32 %v165, %v182
    %v202 = vmul.f32 %v166, %v182
    %v203 = vmul.f32 %v167, %v182
    %v204 = vmul.f32 %v168, %v182
    %v205 = vmul.f32 %v169, %v182
    %v206 = vmul.f32 %v170, %v182
    %v207 = vmul.f32 %v171, %v182
    %v208 = vmul.f32 %v172, %v182
    %v209 = vmul.f32 %v173, %v182
    %v210 = vmul.f32 %v174, %v182
    %v211 = vmul.f32 %v175, %v182
    %v212 = vmul.f32 %v176, %v182
    %v213 = vmul.f32 %v177, %v182
    %v214 = vmul.f32 %v178, %v182
    %215 = vadd.xlane.f32.xlu0 %v183
    %v216 = vpop.xlane.xlu0 %215
    %217 = vadd.xlane.f32.xlu0 %v184
    %v218 = vpop.xlane.xlu0 %217
    %219 = vadd.xlane.f32.xlu0 %v185
    %v220 = vpop.xlane.xlu0 %219
    %221 = vadd.xlane.f32.xlu0 %v186
    %v222 = vpop.xlane.xlu0 %221
    %223 = vadd.xlane.f32.xlu0 %v187
    %v224 = vpop.xlane.xlu0 %223
    %225 = vadd.xlane.f32.xlu0 %v188
    %v226 = vpop.xlane.xlu0 %225
    %227 = vadd.xlane.f32.xlu0 %v189
    %v228 = vpop.xlane.xlu0 %227
    %229 = vadd.xlane.f32.xlu0 %v190
    %v230 = vpop.xlane.xlu0 %229
    %231 = vadd.xlane.f32.xlu0 %v191
    %v232 = vpop.xlane.xlu0 %231
    %233 = vadd.xlane.f32.xlu0 %v192
    %v234 = vpop.xlane.xlu0 %233
    %235 = vadd.xlane.f32.xlu0 %v193
    %v236 = vpop.xlane.xlu0 %235
    %237 = vadd.xlane.f32.xlu0 %v194
    %v238 = vpop.xlane.xlu0 %237
    %239 = vadd.xlane.f32.xlu0 %v195
    %v240 = vpop.xlane.xlu0 %239
    %241 = vadd.xlane.f32.xlu0 %v196
    %v242 = vpop.xlane.xlu0 %241
    %243 = vadd.xlane.f32.xlu0 %v197
    %v244 = vpop.xlane.xlu0 %243
    %245 = vadd.xlane.f32.xlu0 %v198
    %v246 = vpop.xlane.xlu0 %245
    %247 = vadd.xlane.f32.xlu0 %v199
    %v248 = vpop.xlane.xlu0 %247
    %249 = vadd.xlane.f32.xlu0 %v200
    %v250 = vpop.xlane.xlu0 %249
    %251 = vadd.xlane.f32.xlu0 %v201
    %v252 = vpop.xlane.xlu0 %251
    %253 = vadd.xlane.f32.xlu0 %v202
    %v254 = vpop.xlane.xlu0 %253
    %255 = vadd.xlane.f32.xlu0 %v203
    %v256 = vpop.xlane.xlu0 %255
    %257 = vadd.xlane.f32.xlu0 %v204
    %v258 = vpop.xlane.xlu0 %257
    %259 = vadd.xlane.f32.xlu0 %v205
    %v260 = vpop.xlane.xlu0 %259
    %261 = vadd.xlane.f32.xlu0 %v206
    %v262 = vpop.xlane.xlu0 %261
    %263 = vadd.xlane.f32.xlu0 %v207
    %v264 = vpop.xlane.xlu0 %263
    %265 = vadd.xlane.f32.xlu0 %v208
    %v266 = vpop.xlane.xlu0 %265
    %267 = vadd.xlane.f32.xlu0 %v209
    %v268 = vpop.xlane.xlu0 %267
    %269 = vadd.xlane.f32.xlu0 %v210
    %v270 = vpop.xlane.xlu0 %269
    %271 = vadd.xlane.f32.xlu0 %v211
    %v272 = vpop.xlane.xlu0 %271
    %273 = vadd.xlane.f32.xlu0 %v212
    %v274 = vpop.xlane.xlu0 %273
    %275 = vadd.xlane.f32.xlu0 %v213
    %v276 = vpop.xlane.xlu0 %275
    %277 = vadd.xlane.f32.xlu0 %v214
    %v278 = vpop.xlane.xlu0 %277
    %v279 = vstv %s145
    %v280 = vadd.f32 %v216, %v279
    %v281 = vadd.f32 %v218, %v279
    %v282 = vadd.f32 %v220, %v279
    %v283 = vadd.f32 %v222, %v279
    %v284 = vadd.f32 %v224, %v279
    %v285 = vadd.f32 %v226, %v279
    %v286 = vadd.f32 %v228, %v279
    %v287 = vadd.f32 %v230, %v279
    %v288 = vadd.f32 %v232, %v279
    %v289 = vadd.f32 %v234, %v279
    %v290 = vadd.f32 %v236, %v279
    %v291 = vadd.f32 %v238, %v279
    %v292 = vadd.f32 %v240, %v279
    %v293 = vadd.f32 %v242, %v279
    %v294 = vadd.f32 %v244, %v279
    %v295 = vadd.f32 %v246, %v279
    %v296 = vadd.f32 %v248, %v279
    %v297 = vadd.f32 %v250, %v279
    %v298 = vadd.f32 %v252, %v279
    %v299 = vadd.f32 %v254, %v279
    %v300 = vadd.f32 %v256, %v279
    %v301 = vadd.f32 %v258, %v279
    %v302 = vadd.f32 %v260, %v279
    %v303 = vadd.f32 %v262, %v279
    %v304 = vadd.f32 %v264, %v279
    %v305 = vadd.f32 %v266, %v279
    %v306 = vadd.f32 %v268, %v279
    %v307 = vadd.f32 %v270, %v279
    %v308 = vadd.f32 %v272, %v279
    %v309 = vadd.f32 %v274, %v279
    %v310 = vadd.f32 %v276, %v279
    %v311 = vadd.f32 %v278, %v279
    %v312 = vld [vmem:[#allocation8] sm:$0x1]
    %v313 = vld [vmem:[#allocation8 + $0x1] sm:$0x1]
    %v314 = vld [vmem:[#allocation8 + $0x2] sm:$0x1]
    %v315 = vld [vmem:[#allocation8 + $0x3] sm:$0x1]
    %v316 = vld [vmem:[#allocation8 + $0x4] sm:$0x1]
    %v317 = vld [vmem:[#allocation8 + $0x5] sm:$0x1]
    %v318 = vld [vmem:[#allocation8 + $0x6] sm:$0x1]
    %v319 = vld [vmem:[#allocation8 + $0x7] sm:$0x1]
    %v320 = vld [vmem:[#allocation8 + $0x8] sm:$0x1]
    %v321 = vld [vmem:[#allocation8 + $0x9] sm:$0x1]
    %v322 = vld [vmem:[#allocation8 + $0xa] sm:$0x1]
    %v323 = vld [vmem:[#allocation8 + $0xb] sm:$0x1]
    %v324 = vld [vmem:[#allocation8 + $0xc] sm:$0x1]
    %v325 = vld [vmem:[#allocation8 + $0xd] sm:$0x1]
    %v326 = vld [vmem:[#allocation8 + $0xe] sm:$0x1]
    %v327 = vld [vmem:[#allocation8 + $0xf] sm:$0x1]
    %vm328 = vcmp.gt.f32.partialorder %v312, 0.5
    %vm329 = vcmp.gt.f32.partialorder %v313, 0.5
    %vm330 = vcmp.gt.f32.partialorder %v314, 0.5
    %vm331 = vcmp.gt.f32.partialorder %v315, 0.5
    %vm332 = vcmp.gt.f32.partialorder %v316, 0.5
    %vm333 = vcmp.gt.f32.partialorder %v317, 0.5
    %vm334 = vcmp.gt.f32.partialorder %v318, 0.5
    %vm335 = vcmp.gt.f32.partialorder %v319, 0.5
    %vm336 = vcmp.gt.f32.partialorder %v320, 0.5
    %vm337 = vcmp.gt.f32.partialorder %v321, 0.5
    %vm338 = vcmp.gt.f32.partialorder %v322, 0.5
    %vm339 = vcmp.gt.f32.partialorder %v323, 0.5
    %vm340 = vcmp.gt.f32.partialorder %v324, 0.5
    %vm341 = vcmp.gt.f32.partialorder %v325, 0.5
    %vm342 = vcmp.gt.f32.partialorder %v326, 0.5
    %vm343 = vcmp.gt.f32.partialorder %v327, 0.5
    %v376 = vlaneseq
    %v377 = vshrl.u32 %v376, 7
    %v378 = vsub.s32 0, %v377
    %v379 = vrot.slane %v280, %v378
    %v380 = vlaneseq
    %v381 = vshrl.u32 %v380, 7
    %v382 = vsub.s32 1, %v381
    %v383 = vrot.slane %v280, %v382
    %v384 = vlaneseq
    %v385 = vshrl.u32 %v384, 7
    %v386 = vsub.s32 2, %v385
    %v387 = vrot.slane %v280, %v386
    %v388 = vlaneseq
    %v389 = vshrl.u32 %v388, 7
    %v390 = vsub.s32 3, %v389
    %v391 = vrot.slane %v280, %v390
    %v392 = vlaneseq
    %v393 = vshrl.u32 %v392, 7
    %v394 = vsub.s32 4, %v393
    %v395 = vrot.slane %v280, %v394
    %v396 = vlaneseq
    %v397 = vshrl.u32 %v396, 7
    %v398 = vsub.s32 5, %v397
    %v399 = vrot.slane %v280, %v398
    %v400 = vlaneseq
    %v401 = vshrl.u32 %v400, 7
    %v402 = vsub.s32 6, %v401
    %v403 = vrot.slane %v280, %v402
    %v404 = vlaneseq
    %v405 = vshrl.u32 %v404, 7
    %v406 = vsub.s32 7, %v405
    %v407 = vrot.slane %v280, %v406
    %v408 = vlaneseq
    %v409 = vshrl.u32 %v408, 7
    %v410 = vsub.s32 0, %v409
    %v411 = vrot.slane %v281, %v410
    %v412 = vlaneseq
    %v413 = vshrl.u32 %v412, 7
    %v414 = vsub.s32 1, %v413
    %v415 = vrot.slane %v281, %v414
    %v416 = vlaneseq
    %v417 = vshrl.u32 %v416, 7
    %v418 = vsub.s32 2, %v417
    %v419 = vrot.slane %v281, %v418
    %v420 = vlaneseq
    %v421 = vshrl.u32 %v420, 7
    %v422 = vsub.s32 3, %v421
    %v423 = vrot.slane %v281, %v422
    %v424 = vlaneseq
    %v425 = vshrl.u32 %v424, 7
    %v426 = vsub.s32 4, %v425
    %v427 = vrot.slane %v281, %v426
    %v428 = vlaneseq
    %v429 = vshrl.u32 %v428, 7
    %v430 = vsub.s32 5, %v429
    %v431 = vrot.slane %v281, %v430
    %v432 = vlaneseq
    %v433 = vshrl.u32 %v432, 7
    %v434 = vsub.s32 6, %v433
    %v435 = vrot.slane %v281, %v434
    %v436 = vlaneseq
    %v437 = vshrl.u32 %v436, 7
    %v438 = vsub.s32 7, %v437
    %v439 = vrot.slane %v281, %v438
    %v440 = vlaneseq
    %v441 = vshrl.u32 %v440, 7
    %v442 = vsub.s32 0, %v441
    %v443 = vrot.slane %v282, %v442
    %v444 = vlaneseq
    %v445 = vshrl.u32 %v444, 7
    %v446 = vsub.s32 1, %v445
    %v447 = vrot.slane %v282, %v446
    %v448 = vlaneseq
    %v449 = vshrl.u32 %v448, 7
    %v450 = vsub.s32 2, %v449
    %v451 = vrot.slane %v282, %v450
    %v452 = vlaneseq
    %v453 = vshrl.u32 %v452, 7
    %v454 = vsub.s32 3, %v453
    %v455 = vrot.slane %v282, %v454
    %v456 = vlaneseq
    %v457 = vshrl.u32 %v456, 7
    %v458 = vsub.s32 4, %v457
    %v459 = vrot.slane %v282, %v458
    %v460 = vlaneseq
    %v461 = vshrl.u32 %v460, 7
    %v462 = vsub.s32 5, %v461
    %v463 = vrot.slane %v282, %v462
    %v464 = vlaneseq
    %v465 = vshrl.u32 %v464, 7
    %v466 = vsub.s32 6, %v465
    %v467 = vrot.slane %v282, %v466
    %v468 = vlaneseq
    %v469 = vshrl.u32 %v468, 7
    %v470 = vsub.s32 7, %v469
    %v471 = vrot.slane %v282, %v470
    %v472 = vlaneseq
    %v473 = vshrl.u32 %v472, 7
    %v474 = vsub.s32 0, %v473
    %v475 = vrot.slane %v283, %v474
    %v476 = vlaneseq
    %v477 = vshrl.u32 %v476, 7
    %v478 = vsub.s32 1, %v477
    %v479 = vrot.slane %v283, %v478
    %v480 = vlaneseq
    %v481 = vshrl.u32 %v480, 7
    %v482 = vsub.s32 2, %v481
    %v483 = vrot.slane %v283, %v482
    %v484 = vlaneseq
    %v485 = vshrl.u32 %v484, 7
    %v486 = vsub.s32 3, %v485
    %v487 = vrot.slane %v283, %v486
    %v488 = vlaneseq
    %v489 = vshrl.u32 %v488, 7
    %v490 = vsub.s32 4, %v489
    %v491 = vrot.slane %v283, %v490
    %v492 = vlaneseq
    %v493 = vshrl.u32 %v492, 7
    %v494 = vsub.s32 5, %v493
    %v495 = vrot.slane %v283, %v494
    %v496 = vlaneseq
    %v497 = vshrl.u32 %v496, 7
    %v498 = vsub.s32 6, %v497
    %v499 = vrot.slane %v283, %v498
    %v500 = vlaneseq
    %v501 = vshrl.u32 %v500, 7
    %v502 = vsub.s32 7, %v501
    %v503 = vrot.slane %v283, %v502
    %v504 = vlaneseq
    %v505 = vshrl.u32 %v504, 7
    %v506 = vsub.s32 0, %v505
    %v507 = vrot.slane %v284, %v506
    %v508 = vlaneseq
    %v509 = vshrl.u32 %v508, 7
    %v510 = vsub.s32 1, %v509
    %v511 = vrot.slane %v284, %v510
    %v512 = vlaneseq
    %v513 = vshrl.u32 %v512, 7
    %v514 = vsub.s32 2, %v513
    %v515 = vrot.slane %v284, %v514
    %v516 = vlaneseq
    %v517 = vshrl.u32 %v516, 7
    %v518 = vsub.s32 3, %v517
    %v519 = vrot.slane %v284, %v518
    %v520 = vlaneseq
    %v521 = vshrl.u32 %v520, 7
    %v522 = vsub.s32 4, %v521
    %v523 = vrot.slane %v284, %v522
    %v524 = vlaneseq
    %v525 = vshrl.u32 %v524, 7
    %v526 = vsub.s32 5, %v525
    %v527 = vrot.slane %v284, %v526
    %v528 = vlaneseq
    %v529 = vshrl.u32 %v528, 7
    %v530 = vsub.s32 6, %v529
    %v531 = vrot.slane %v284, %v530
    %v532 = vlaneseq
    %v533 = vshrl.u32 %v532, 7
    %v534 = vsub.s32 7, %v533
    %v535 = vrot.slane %v284, %v534
    %v536 = vlaneseq
    %v537 = vshrl.u32 %v536, 7
    %v538 = vsub.s32 0, %v537
    %v539 = vrot.slane %v285, %v538
    %v540 = vlaneseq
    %v541 = vshrl.u32 %v540, 7
    %v542 = vsub.s32 1, %v541
    %v543 = vrot.slane %v285, %v542
    %v544 = vlaneseq
    %v545 = vshrl.u32 %v544, 7
    %v546 = vsub.s32 2, %v545
    %v547 = vrot.slane %v285, %v546
    %v548 = vlaneseq
    %v549 = vshrl.u32 %v548, 7
    %v550 = vsub.s32 3, %v549
    %v551 = vrot.slane %v285, %v550
    %v552 = vlaneseq
    %v553 = vshrl.u32 %v552, 7
    %v554 = vsub.s32 4, %v553
    %v555 = vrot.slane %v285, %v554
    %v556 = vlaneseq
    %v557 = vshrl.u32 %v556, 7
    %v558 = vsub.s32 5, %v557
    %v559 = vrot.slane %v285, %v558
    %v560 = vlaneseq
    %v561 = vshrl.u32 %v560, 7
    %v562 = vsub.s32 6, %v561
    %v563 = vrot.slane %v285, %v562
    %v564 = vlaneseq
    %v565 = vshrl.u32 %v564, 7
    %v566 = vsub.s32 7, %v565
    %v567 = vrot.slane %v285, %v566
    %v568 = vlaneseq
    %v569 = vshrl.u32 %v568, 7
    %v570 = vsub.s32 0, %v569
    %v571 = vrot.slane %v286, %v570
    %v572 = vlaneseq
    %v573 = vshrl.u32 %v572, 7
    %v574 = vsub.s32 1, %v573
    %v575 = vrot.slane %v286, %v574
    %v576 = vlaneseq
    %v577 = vshrl.u32 %v576, 7
    %v578 = vsub.s32 2, %v577
    %v579 = vrot.slane %v286, %v578
    %v580 = vlaneseq
    %v581 = vshrl.u32 %v580, 7
    %v582 = vsub.s32 3, %v581
    %v583 = vrot.slane %v286, %v582
    %v584 = vlaneseq
    %v585 = vshrl.u32 %v584, 7
    %v586 = vsub.s32 4, %v585
    %v587 = vrot.slane %v286, %v586
    %v588 = vlaneseq
    %v589 = vshrl.u32 %v588, 7
    %v590 = vsub.s32 5, %v589
    %v591 = vrot.slane %v286, %v590
    %v592 = vlaneseq
    %v593 = vshrl.u32 %v592, 7
    %v594 = vsub.s32 6, %v593
    %v595 = vrot.slane %v286, %v594
    %v596 = vlaneseq
    %v597 = vshrl.u32 %v596, 7
    %v598 = vsub.s32 7, %v597
    %v599 = vrot.slane %v286, %v598
    %v600 = vlaneseq
    %v601 = vshrl.u32 %v600, 7
    %v602 = vsub.s32 0, %v601
    %v603 = vrot.slane %v287, %v602
    %v604 = vlaneseq
    %v605 = vshrl.u32 %v604, 7
    %v606 = vsub.s32 1, %v605
    %v607 = vrot.slane %v287, %v606
    %v608 = vlaneseq
    %v609 = vshrl.u32 %v608, 7
    %v610 = vsub.s32 2, %v609
    %v611 = vrot.slane %v287, %v610
    %v612 = vlaneseq
    %v613 = vshrl.u32 %v612, 7
    %v614 = vsub.s32 3, %v613
    %v615 = vrot.slane %v287, %v614
    %v616 = vlaneseq
    %v617 = vshrl.u32 %v616, 7
    %v618 = vsub.s32 4, %v617
    %v619 = vrot.slane %v287, %v618
    %v620 = vlaneseq
    %v621 = vshrl.u32 %v620, 7
    %v622 = vsub.s32 5, %v621
    %v623 = vrot.slane %v287, %v622
    %v624 = vlaneseq
    %v625 = vshrl.u32 %v624, 7
    %v626 = vsub.s32 6, %v625
    %v627 = vrot.slane %v287, %v626
    %v628 = vlaneseq
    %v629 = vshrl.u32 %v628, 7
    %v630 = vsub.s32 7, %v629
    %v631 = vrot.slane %v287, %v630
    %v632 = vlaneseq
    %v633 = vshrl.u32 %v632, 7
    %v634 = vsub.s32 0, %v633
    %v635 = vrot.slane %v288, %v634
    %v636 = vlaneseq
    %v637 = vshrl.u32 %v636, 7
    %v638 = vsub.s32 1, %v637
    %v639 = vrot.slane %v288, %v638
    %v640 = vlaneseq
    %v641 = vshrl.u32 %v640, 7
    %v642 = vsub.s32 2, %v641
    %v643 = vrot.slane %v288, %v642
    %v644 = vlaneseq
    %v645 = vshrl.u32 %v644, 7
    %v646 = vsub.s32 3, %v645
    %v647 = vrot.slane %v288, %v646
    %v648 = vlaneseq
    %v649 = vshrl.u32 %v648, 7
    %v650 = vsub.s32 4, %v649
    %v651 = vrot.slane %v288, %v650
    %v652 = vlaneseq
    %v653 = vshrl.u32 %v652, 7
    %v654 = vsub.s32 5, %v653
    %v655 = vrot.slane %v288, %v654
    %v656 = vlaneseq
    %v657 = vshrl.u32 %v656, 7
    %v658 = vsub.s32 6, %v657
    %v659 = vrot.slane %v288, %v658
    %v660 = vlaneseq
    %v661 = vshrl.u32 %v660, 7
    %v662 = vsub.s32 7, %v661
    %v663 = vrot.slane %v288, %v662
    %v664 = vlaneseq
    %v665 = vshrl.u32 %v664, 7
    %v666 = vsub.s32 0, %v665
    %v667 = vrot.slane %v289, %v666
    %v668 = vlaneseq
    %v669 = vshrl.u32 %v668, 7
    %v670 = vsub.s32 1, %v669
    %v671 = vrot.slane %v289, %v670
    %v672 = vlaneseq
    %v673 = vshrl.u32 %v672, 7
    %v674 = vsub.s32 2, %v673
    %v675 = vrot.slane %v289, %v674
    %v676 = vlaneseq
    %v677 = vshrl.u32 %v676, 7
    %v678 = vsub.s32 3, %v677
    %v679 = vrot.slane %v289, %v678
    %v680 = vlaneseq
    %v681 = vshrl.u32 %v680, 7
    %v682 = vsub.s32 4, %v681
    %v683 = vrot.slane %v289, %v682
    %v684 = vlaneseq
    %v685 = vshrl.u32 %v684, 7
    %v686 = vsub.s32 5, %v685
    %v687 = vrot.slane %v289, %v686
    %v688 = vlaneseq
    %v689 = vshrl.u32 %v688, 7
    %v690 = vsub.s32 6, %v689
    %v691 = vrot.slane %v289, %v690
    %v692 = vlaneseq
    %v693 = vshrl.u32 %v692, 7
    %v694 = vsub.s32 7, %v693
    %v695 = vrot.slane %v289, %v694
    %v696 = vlaneseq
    %v697 = vshrl.u32 %v696, 7
    %v698 = vsub.s32 0, %v697
    %v699 = vrot.slane %v290, %v698
    %v700 = vlaneseq
    %v701 = vshrl.u32 %v700, 7
    %v702 = vsub.s32 1, %v701
    %v703 = vrot.slane %v290, %v702
    %v704 = vlaneseq
    %v705 = vshrl.u32 %v704, 7
    %v706 = vsub.s32 2, %v705
    %v707 = vrot.slane %v290, %v706
    %v708 = vlaneseq
    %v709 = vshrl.u32 %v708, 7
    %v710 = vsub.s32 3, %v709
    %v711 = vrot.slane %v290, %v710
    %v712 = vlaneseq
    %v713 = vshrl.u32 %v712, 7
    %v714 = vsub.s32 4, %v713
    %v715 = vrot.slane %v290, %v714
    %v716 = vlaneseq
    %v717 = vshrl.u32 %v716, 7
    %v718 = vsub.s32 5, %v717
    %v719 = vrot.slane %v290, %v718
    %v720 = vlaneseq
    %v721 = vshrl.u32 %v720, 7
    %v722 = vsub.s32 6, %v721
    %v723 = vrot.slane %v290, %v722
    %v724 = vlaneseq
    %v725 = vshrl.u32 %v724, 7
    %v726 = vsub.s32 7, %v725
    %v727 = vrot.slane %v290, %v726
    %v728 = vlaneseq
    %v729 = vshrl.u32 %v728, 7
    %v730 = vsub.s32 0, %v729
    %v731 = vrot.slane %v291, %v730
    %v732 = vlaneseq
    %v733 = vshrl.u32 %v732, 7
    %v734 = vsub.s32 1, %v733
    %v735 = vrot.slane %v291, %v734
    %v736 = vlaneseq
    %v737 = vshrl.u32 %v736, 7
    %v738 = vsub.s32 2, %v737
    %v739 = vrot.slane %v291, %v738
    %v740 = vlaneseq
    %v741 = vshrl.u32 %v740, 7
    %v742 = vsub.s32 3, %v741
    %v743 = vrot.slane %v291, %v742
    %v744 = vlaneseq
    %v745 = vshrl.u32 %v744, 7
    %v746 = vsub.s32 4, %v745
    %v747 = vrot.slane %v291, %v746
    %v748 = vlaneseq
    %v749 = vshrl.u32 %v748, 7
    %v750 = vsub.s32 5, %v749
    %v751 = vrot.slane %v291, %v750
    %v752 = vlaneseq
    %v753 = vshrl.u32 %v752, 7
    %v754 = vsub.s32 6, %v753
    %v755 = vrot.slane %v291, %v754
    %v756 = vlaneseq
    %v757 = vshrl.u32 %v756, 7
    %v758 = vsub.s32 7, %v757
    %v759 = vrot.slane %v291, %v758
    %v760 = vlaneseq
    %v761 = vshrl.u32 %v760, 7
    %v762 = vsub.s32 0, %v761
    %v763 = vrot.slane %v292, %v762
    %v764 = vlaneseq
    %v765 = vshrl.u32 %v764, 7
    %v766 = vsub.s32 1, %v765
    %v767 = vrot.slane %v292, %v766
    %v768 = vlaneseq
    %v769 = vshrl.u32 %v768, 7
    %v770 = vsub.s32 2, %v769
    %v771 = vrot.slane %v292, %v770
    %v772 = vlaneseq
    %v773 = vshrl.u32 %v772, 7
    %v774 = vsub.s32 3, %v773
    %v775 = vrot.slane %v292, %v774
    %v776 = vlaneseq
    %v777 = vshrl.u32 %v776, 7
    %v778 = vsub.s32 4, %v777
    %v779 = vrot.slane %v292, %v778
    %v780 = vlaneseq
    %v781 = vshrl.u32 %v780, 7
    %v782 = vsub.s32 5, %v781
    %v783 = vrot.slane %v292, %v782
    %v784 = vlaneseq
    %v785 = vshrl.u32 %v784, 7
    %v786 = vsub.s32 6, %v785
    %v787 = vrot.slane %v292, %v786
    %v788 = vlaneseq
    %v789 = vshrl.u32 %v788, 7
    %v790 = vsub.s32 7, %v789
    %v791 = vrot.slane %v292, %v790
    %v792 = vlaneseq
    %v793 = vshrl.u32 %v792, 7
    %v794 = vsub.s32 0, %v793
    %v795 = vrot.slane %v293, %v794
    %v796 = vlaneseq
    %v797 = vshrl.u32 %v796, 7
    %v798 = vsub.s32 1, %v797
    %v799 = vrot.slane %v293, %v798
    %v800 = vlaneseq
    %v801 = vshrl.u32 %v800, 7
    %v802 = vsub.s32 2, %v801
    %v803 = vrot.slane %v293, %v802
    %v804 = vlaneseq
    %v805 = vshrl.u32 %v804, 7
    %v806 = vsub.s32 3, %v805
    %v807 = vrot.slane %v293, %v806
    %v808 = vlaneseq
    %v809 = vshrl.u32 %v808, 7
    %v810 = vsub.s32 4, %v809
    %v811 = vrot.slane %v293, %v810
    %v812 = vlaneseq
    %v813 = vshrl.u32 %v812, 7
    %v814 = vsub.s32 5, %v813
    %v815 = vrot.slane %v293, %v814
    %v816 = vlaneseq
    %v817 = vshrl.u32 %v816, 7
    %v818 = vsub.s32 6, %v817
    %v819 = vrot.slane %v293, %v818
    %v820 = vlaneseq
    %v821 = vshrl.u32 %v820, 7
    %v822 = vsub.s32 7, %v821
    %v823 = vrot.slane %v293, %v822
    %v824 = vlaneseq
    %v825 = vshrl.u32 %v824, 7
    %v826 = vsub.s32 0, %v825
    %v827 = vrot.slane %v294, %v826
    %v828 = vlaneseq
    %v829 = vshrl.u32 %v828, 7
    %v830 = vsub.s32 1, %v829
    %v831 = vrot.slane %v294, %v830
    %v832 = vlaneseq
    %v833 = vshrl.u32 %v832, 7
    %v834 = vsub.s32 2, %v833
    %v835 = vrot.slane %v294, %v834
    %v836 = vlaneseq
    %v837 = vshrl.u32 %v836, 7
    %v838 = vsub.s32 3, %v837
    %v839 = vrot.slane %v294, %v838
    %v840 = vlaneseq
    %v841 = vshrl.u32 %v840, 7
    %v842 = vsub.s32 4, %v841
    %v843 = vrot.slane %v294, %v842
    %v844 = vlaneseq
    %v845 = vshrl.u32 %v844, 7
    %v846 = vsub.s32 5, %v845
    %v847 = vrot.slane %v294, %v846
    %v848 = vlaneseq
    %v849 = vshrl.u32 %v848, 7
    %v850 = vsub.s32 6, %v849
    %v851 = vrot.slane %v294, %v850
    %v852 = vlaneseq
    %v853 = vshrl.u32 %v852, 7
    %v854 = vsub.s32 7, %v853
    %v855 = vrot.slane %v294, %v854
    %v856 = vlaneseq
    %v857 = vshrl.u32 %v856, 7
    %v858 = vsub.s32 0, %v857
    %v859 = vrot.slane %v295, %v858
    %v860 = vlaneseq
    %v861 = vshrl.u32 %v860, 7
    %v862 = vsub.s32 1, %v861
    %v863 = vrot.slane %v295, %v862
    %v864 = vlaneseq
    %v865 = vshrl.u32 %v864, 7
    %v866 = vsub.s32 2, %v865
    %v867 = vrot.slane %v295, %v866
    %v868 = vlaneseq
    %v869 = vshrl.u32 %v868, 7
    %v870 = vsub.s32 3, %v869
    %v871 = vrot.slane %v295, %v870
    %v872 = vlaneseq
    %v873 = vshrl.u32 %v872, 7
    %v874 = vsub.s32 4, %v873
    %v875 = vrot.slane %v295, %v874
    %v876 = vlaneseq
    %v877 = vshrl.u32 %v876, 7
    %v878 = vsub.s32 5, %v877
    %v879 = vrot.slane %v295, %v878
    %v880 = vlaneseq
    %v881 = vshrl.u32 %v880, 7
    %v882 = vsub.s32 6, %v881
    %v883 = vrot.slane %v295, %v882
    %v884 = vlaneseq
    %v885 = vshrl.u32 %v884, 7
    %v886 = vsub.s32 7, %v885
    %v887 = vrot.slane %v295, %v886
    %v888 = vlaneseq
    %v889 = vshrl.u32 %v888, 7
    %v890 = vsub.s32 0, %v889
    %v891 = vrot.slane %v296, %v890
    %v892 = vlaneseq
    %v893 = vshrl.u32 %v892, 7
    %v894 = vsub.s32 1, %v893
    %v895 = vrot.slane %v296, %v894
    %v896 = vlaneseq
    %v897 = vshrl.u32 %v896, 7
    %v898 = vsub.s32 2, %v897
    %v899 = vrot.slane %v296, %v898
    %v900 = vlaneseq
    %v901 = vshrl.u32 %v900, 7
    %v902 = vsub.s32 3, %v901
    %v903 = vrot.slane %v296, %v902
    %v904 = vlaneseq
    %v905 = vshrl.u32 %v904, 7
    %v906 = vsub.s32 4, %v905
    %v907 = vrot.slane %v296, %v906
    %v908 = vlaneseq
    %v909 = vshrl.u32 %v908, 7
    %v910 = vsub.s32 5, %v909
    %v911 = vrot.slane %v296, %v910
    %v912 = vlaneseq
    %v913 = vshrl.u32 %v912, 7
    %v914 = vsub.s32 6, %v913
    %v915 = vrot.slane %v296, %v914
    %v916 = vlaneseq
    %v917 = vshrl.u32 %v916, 7
    %v918 = vsub.s32 7, %v917
    %v919 = vrot.slane %v296, %v918
    %v920 = vlaneseq
    %v921 = vshrl.u32 %v920, 7
    %v922 = vsub.s32 0, %v921
    %v923 = vrot.slane %v297, %v922
    %v924 = vlaneseq
    %v925 = vshrl.u32 %v924, 7
    %v926 = vsub.s32 1, %v925
    %v927 = vrot.slane %v297, %v926
    %v928 = vlaneseq
    %v929 = vshrl.u32 %v928, 7
    %v930 = vsub.s32 2, %v929
    %v931 = vrot.slane %v297, %v930
    %v932 = vlaneseq
    %v933 = vshrl.u32 %v932, 7
    %v934 = vsub.s32 3, %v933
    %v935 = vrot.slane %v297, %v934
    %v936 = vlaneseq
    %v937 = vshrl.u32 %v936, 7
    %v938 = vsub.s32 4, %v937
    %v939 = vrot.slane %v297, %v938
    %v940 = vlaneseq
    %v941 = vshrl.u32 %v940, 7
    %v942 = vsub.s32 5, %v941
    %v943 = vrot.slane %v297, %v942
    %v944 = vlaneseq
    %v945 = vshrl.u32 %v944, 7
    %v946 = vsub.s32 6, %v945
    %v947 = vrot.slane %v297, %v946
    %v948 = vlaneseq
    %v949 = vshrl.u32 %v948, 7
    %v950 = vsub.s32 7, %v949
    %v951 = vrot.slane %v297, %v950
    %v952 = vlaneseq
    %v953 = vshrl.u32 %v952, 7
    %v954 = vsub.s32 0, %v953
    %v955 = vrot.slane %v298, %v954
    %v956 = vlaneseq
    %v957 = vshrl.u32 %v956, 7
    %v958 = vsub.s32 1, %v957
    %v959 = vrot.slane %v298, %v958
    %v960 = vlaneseq
    %v961 = vshrl.u32 %v960, 7
    %v962 = vsub.s32 2, %v961
    %v963 = vrot.slane %v298, %v962
    %v964 = vlaneseq
    %v965 = vshrl.u32 %v964, 7
    %v966 = vsub.s32 3, %v965
    %v967 = vrot.slane %v298, %v966
    %v968 = vlaneseq
    %v969 = vshrl.u32 %v968, 7
    %v970 = vsub.s32 4, %v969
    %v971 = vrot.slane %v298, %v970
    %v972 = vlaneseq
    %v973 = vshrl.u32 %v972, 7
    %v974 = vsub.s32 5, %v973
    %v975 = vrot.slane %v298, %v974
    %v976 = vlaneseq
    %v977 = vshrl.u32 %v976, 7
    %v978 = vsub.s32 6, %v977
    %v979 = vrot.slane %v298, %v978
    %v980 = vlaneseq
    %v981 = vshrl.u32 %v980, 7
    %v982 = vsub.s32 7, %v981
    %v983 = vrot.slane %v298, %v982
    %v984 = vlaneseq
    %v985 = vshrl.u32 %v984, 7
    %v986 = vsub.s32 0, %v985
    %v987 = vrot.slane %v299, %v986
    %v988 = vlaneseq
    %v989 = vshrl.u32 %v988, 7
    %v990 = vsub.s32 1, %v989
    %v991 = vrot.slane %v299, %v990
    %v992 = vlaneseq
    %v993 = vshrl.u32 %v992, 7
    %v994 = vsub.s32 2, %v993
    %v995 = vrot.slane %v299, %v994
    %v996 = vlaneseq
    %v997 = vshrl.u32 %v996, 7
    %v998 = vsub.s32 3, %v997
    %v999 = vrot.slane %v299, %v998
    %v1000 = vlaneseq
    %v1001 = vshrl.u32 %v1000, 7
    %v1002 = vsub.s32 4, %v1001
    %v1003 = vrot.slane %v299, %v1002
    %v1004 = vlaneseq
    %v1005 = vshrl.u32 %v1004, 7
    %v1006 = vsub.s32 5, %v1005
    %v1007 = vrot.slane %v299, %v1006
    %v1008 = vlaneseq
    %v1009 = vshrl.u32 %v1008, 7
    %v1010 = vsub.s32 6, %v1009
    %v1011 = vrot.slane %v299, %v1010
    %v1012 = vlaneseq
    %v1013 = vshrl.u32 %v1012, 7
    %v1014 = vsub.s32 7, %v1013
    %v1015 = vrot.slane %v299, %v1014
    %v1016 = vlaneseq
    %v1017 = vshrl.u32 %v1016, 7
    %v1018 = vsub.s32 0, %v1017
    %v1019 = vrot.slane %v300, %v1018
    %v1020 = vlaneseq
    %v1021 = vshrl.u32 %v1020, 7
    %v1022 = vsub.s32 1, %v1021
    %v1023 = vrot.slane %v300, %v1022
    %v1024 = vlaneseq
    %v1025 = vshrl.u32 %v1024, 7
    %v1026 = vsub.s32 2, %v1025
    %v1027 = vrot.slane %v300, %v1026
    %v1028 = vlaneseq
    %v1029 = vshrl.u32 %v1028, 7
    %v1030 = vsub.s32 3, %v1029
    %v1031 = vrot.slane %v300, %v1030
    %v1032 = vlaneseq
    %v1033 = vshrl.u32 %v1032, 7
    %v1034 = vsub.s32 4, %v1033
    %v1035 = vrot.slane %v300, %v1034
    %v1036 = vlaneseq
    %v1037 = vshrl.u32 %v1036, 7
    %v1038 = vsub.s32 5, %v1037
    %v1039 = vrot.slane %v300, %v1038
    %v1040 = vlaneseq
    %v1041 = vshrl.u32 %v1040, 7
    %v1042 = vsub.s32 6, %v1041
    %v1043 = vrot.slane %v300, %v1042
    %v1044 = vlaneseq
    %v1045 = vshrl.u32 %v1044, 7
    %v1046 = vsub.s32 7, %v1045
    %v1047 = vrot.slane %v300, %v1046
    %v1048 = vlaneseq
    %v1049 = vshrl.u32 %v1048, 7
    %v1050 = vsub.s32 0, %v1049
    %v1051 = vrot.slane %v301, %v1050
    %v1052 = vlaneseq
    %v1053 = vshrl.u32 %v1052, 7
    %v1054 = vsub.s32 1, %v1053
    %v1055 = vrot.slane %v301, %v1054
    %v1056 = vlaneseq
    %v1057 = vshrl.u32 %v1056, 7
    %v1058 = vsub.s32 2, %v1057
    %v1059 = vrot.slane %v301, %v1058
    %v1060 = vlaneseq
    %v1061 = vshrl.u32 %v1060, 7
    %v1062 = vsub.s32 3, %v1061
    %v1063 = vrot.slane %v301, %v1062
    %v1064 = vlaneseq
    %v1065 = vshrl.u32 %v1064, 7
    %v1066 = vsub.s32 4, %v1065
    %v1067 = vrot.slane %v301, %v1066
    %v1068 = vlaneseq
    %v1069 = vshrl.u32 %v1068, 7
    %v1070 = vsub.s32 5, %v1069
    %v1071 = vrot.slane %v301, %v1070
    %v1072 = vlaneseq
    %v1073 = vshrl.u32 %v1072, 7
    %v1074 = vsub.s32 6, %v1073
    %v1075 = vrot.slane %v301, %v1074
    %v1076 = vlaneseq
    %v1077 = vshrl.u32 %v1076, 7
    %v1078 = vsub.s32 7, %v1077
    %v1079 = vrot.slane %v301, %v1078
    %v1080 = vlaneseq
    %v1081 = vshrl.u32 %v1080, 7
    %v1082 = vsub.s32 0, %v1081
    %v1083 = vrot.slane %v302, %v1082
    %v1084 = vlaneseq
    %v1085 = vshrl.u32 %v1084, 7
    %v1086 = vsub.s32 1, %v1085
    %v1087 = vrot.slane %v302, %v1086
    %v1088 = vlaneseq
    %v1089 = vshrl.u32 %v1088, 7
    %v1090 = vsub.s32 2, %v1089
    %v1091 = vrot.slane %v302, %v1090
    %v1092 = vlaneseq
    %v1093 = vshrl.u32 %v1092, 7
    %v1094 = vsub.s32 3, %v1093
    %v1095 = vrot.slane %v302, %v1094
    %v1096 = vlaneseq
    %v1097 = vshrl.u32 %v1096, 7
    %v1098 = vsub.s32 4, %v1097
    %v1099 = vrot.slane %v302, %v1098
    %v1100 = vlaneseq
    %v1101 = vshrl.u32 %v1100, 7
    %v1102 = vsub.s32 5, %v1101
    %v1103 = vrot.slane %v302, %v1102
    %v1104 = vlaneseq
    %v1105 = vshrl.u32 %v1104, 7
    %v1106 = vsub.s32 6, %v1105
    %v1107 = vrot.slane %v302, %v1106
    %v1108 = vlaneseq
    %v1109 = vshrl.u32 %v1108, 7
    %v1110 = vsub.s32 7, %v1109
    %v1111 = vrot.slane %v302, %v1110
    %v1112 = vlaneseq
    %v1113 = vshrl.u32 %v1112, 7
    %v1114 = vsub.s32 0, %v1113
    %v1115 = vrot.slane %v303, %v1114
    %v1116 = vlaneseq
    %v1117 = vshrl.u32 %v1116, 7
    %v1118 = vsub.s32 1, %v1117
    %v1119 = vrot.slane %v303, %v1118
    %v1120 = vlaneseq
    %v1121 = vshrl.u32 %v1120, 7
    %v1122 = vsub.s32 2, %v1121
    %v1123 = vrot.slane %v303, %v1122
    %v1124 = vlaneseq
    %v1125 = vshrl.u32 %v1124, 7
    %v1126 = vsub.s32 3, %v1125
    %v1127 = vrot.slane %v303, %v1126
    %v1128 = vlaneseq
    %v1129 = vshrl.u32 %v1128, 7
    %v1130 = vsub.s32 4, %v1129
    %v1131 = vrot.slane %v303, %v1130
    %v1132 = vlaneseq
    %v1133 = vshrl.u32 %v1132, 7
    %v1134 = vsub.s32 5, %v1133
    %v1135 = vrot.slane %v303, %v1134
    %v1136 = vlaneseq
    %v1137 = vshrl.u32 %v1136, 7
    %v1138 = vsub.s32 6, %v1137
    %v1139 = vrot.slane %v303, %v1138
    %v1140 = vlaneseq
    %v1141 = vshrl.u32 %v1140, 7
    %v1142 = vsub.s32 7, %v1141
    %v1143 = vrot.slane %v303, %v1142
    %v1144 = vlaneseq
    %v1145 = vshrl.u32 %v1144, 7
    %v1146 = vsub.s32 0, %v1145
    %v1147 = vrot.slane %v304, %v1146
    %v1148 = vlaneseq
    %v1149 = vshrl.u32 %v1148, 7
    %v1150 = vsub.s32 1, %v1149
    %v1151 = vrot.slane %v304, %v1150
    %v1152 = vlaneseq
    %v1153 = vshrl.u32 %v1152, 7
    %v1154 = vsub.s32 2, %v1153
    %v1155 = vrot.slane %v304, %v1154
    %v1156 = vlaneseq
    %v1157 = vshrl.u32 %v1156, 7
    %v1158 = vsub.s32 3, %v1157
    %v1159 = vrot.slane %v304, %v1158
    %v1160 = vlaneseq
    %v1161 = vshrl.u32 %v1160, 7
    %v1162 = vsub.s32 4, %v1161
    %v1163 = vrot.slane %v304, %v1162
    %v1164 = vlaneseq
    %v1165 = vshrl.u32 %v1164, 7
    %v1166 = vsub.s32 5, %v1165
    %v1167 = vrot.slane %v304, %v1166
    %v1168 = vlaneseq
    %v1169 = vshrl.u32 %v1168, 7
    %v1170 = vsub.s32 6, %v1169
    %v1171 = vrot.slane %v304, %v1170
    %v1172 = vlaneseq
    %v1173 = vshrl.u32 %v1172, 7
    %v1174 = vsub.s32 7, %v1173
    %v1175 = vrot.slane %v304, %v1174
    %v1176 = vlaneseq
    %v1177 = vshrl.u32 %v1176, 7
    %v1178 = vsub.s32 0, %v1177
    %v1179 = vrot.slane %v305, %v1178
    %v1180 = vlaneseq
    %v1181 = vshrl.u32 %v1180, 7
    %v1182 = vsub.s32 1, %v1181
    %v1183 = vrot.slane %v305, %v1182
    %v1184 = vlaneseq
    %v1185 = vshrl.u32 %v1184, 7
    %v1186 = vsub.s32 2, %v1185
    %v1187 = vrot.slane %v305, %v1186
    %v1188 = vlaneseq
    %v1189 = vshrl.u32 %v1188, 7
    %v1190 = vsub.s32 3, %v1189
    %v1191 = vrot.slane %v305, %v1190
    %v1192 = vlaneseq
    %v1193 = vshrl.u32 %v1192, 7
    %v1194 = vsub.s32 4, %v1193
    %v1195 = vrot.slane %v305, %v1194
    %v1196 = vlaneseq
    %v1197 = vshrl.u32 %v1196, 7
    %v1198 = vsub.s32 5, %v1197
    %v1199 = vrot.slane %v305, %v1198
    %v1200 = vlaneseq
    %v1201 = vshrl.u32 %v1200, 7
    %v1202 = vsub.s32 6, %v1201
    %v1203 = vrot.slane %v305, %v1202
    %v1204 = vlaneseq
    %v1205 = vshrl.u32 %v1204, 7
    %v1206 = vsub.s32 7, %v1205
    %v1207 = vrot.slane %v305, %v1206
    %v1208 = vlaneseq
    %v1209 = vshrl.u32 %v1208, 7
    %v1210 = vsub.s32 0, %v1209
    %v1211 = vrot.slane %v306, %v1210
    %v1212 = vlaneseq
    %v1213 = vshrl.u32 %v1212, 7
    %v1214 = vsub.s32 1, %v1213
    %v1215 = vrot.slane %v306, %v1214
    %v1216 = vlaneseq
    %v1217 = vshrl.u32 %v1216, 7
    %v1218 = vsub.s32 2, %v1217
    %v1219 = vrot.slane %v306, %v1218
    %v1220 = vlaneseq
    %v1221 = vshrl.u32 %v1220, 7
    %v1222 = vsub.s32 3, %v1221
    %v1223 = vrot.slane %v306, %v1222
    %v1224 = vlaneseq
    %v1225 = vshrl.u32 %v1224, 7
    %v1226 = vsub.s32 4, %v1225
    %v1227 = vrot.slane %v306, %v1226
    %v1228 = vlaneseq
    %v1229 = vshrl.u32 %v1228, 7
    %v1230 = vsub.s32 5, %v1229
    %v1231 = vrot.slane %v306, %v1230
    %v1232 = vlaneseq
    %v1233 = vshrl.u32 %v1232, 7
    %v1234 = vsub.s32 6, %v1233
    %v1235 = vrot.slane %v306, %v1234
    %v1236 = vlaneseq
    %v1237 = vshrl.u32 %v1236, 7
    %v1238 = vsub.s32 7, %v1237
    %v1239 = vrot.slane %v306, %v1238
    %v1240 = vlaneseq
    %v1241 = vshrl.u32 %v1240, 7
    %v1242 = vsub.s32 0, %v1241
    %v1243 = vrot.slane %v307, %v1242
    %v1244 = vlaneseq
    %v1245 = vshrl.u32 %v1244, 7
    %v1246 = vsub.s32 1, %v1245
    %v1247 = vrot.slane %v307, %v1246
    %v1248 = vlaneseq
    %v1249 = vshrl.u32 %v1248, 7
    %v1250 = vsub.s32 2, %v1249
    %v1251 = vrot.slane %v307, %v1250
    %v1252 = vlaneseq
    %v1253 = vshrl.u32 %v1252, 7
    %v1254 = vsub.s32 3, %v1253
    %v1255 = vrot.slane %v307, %v1254
    %v1256 = vlaneseq
    %v1257 = vshrl.u32 %v1256, 7
    %v1258 = vsub.s32 4, %v1257
    %v1259 = vrot.slane %v307, %v1258
    %v1260 = vlaneseq
    %v1261 = vshrl.u32 %v1260, 7
    %v1262 = vsub.s32 5, %v1261
    %v1263 = vrot.slane %v307, %v1262
    %v1264 = vlaneseq
    %v1265 = vshrl.u32 %v1264, 7
    %v1266 = vsub.s32 6, %v1265
    %v1267 = vrot.slane %v307, %v1266
    %v1268 = vlaneseq
    %v1269 = vshrl.u32 %v1268, 7
    %v1270 = vsub.s32 7, %v1269
    %v1271 = vrot.slane %v307, %v1270
    %v1272 = vlaneseq
    %v1273 = vshrl.u32 %v1272, 7
    %v1274 = vsub.s32 0, %v1273
    %v1275 = vrot.slane %v308, %v1274
    %v1276 = vlaneseq
    %v1277 = vshrl.u32 %v1276, 7
    %v1278 = vsub.s32 1, %v1277
    %v1279 = vrot.slane %v308, %v1278
    %v1280 = vlaneseq
    %v1281 = vshrl.u32 %v1280, 7
    %v1282 = vsub.s32 2, %v1281
    %v1283 = vrot.slane %v308, %v1282
    %v1284 = vlaneseq
    %v1285 = vshrl.u32 %v1284, 7
    %v1286 = vsub.s32 3, %v1285
    %v1287 = vrot.slane %v308, %v1286
    %v1288 = vlaneseq
    %v1289 = vshrl.u32 %v1288, 7
    %v1290 = vsub.s32 4, %v1289
    %v1291 = vrot.slane %v308, %v1290
    %v1292 = vlaneseq
    %v1293 = vshrl.u32 %v1292, 7
    %v1294 = vsub.s32 5, %v1293
    %v1295 = vrot.slane %v308, %v1294
    %v1296 = vlaneseq
    %v1297 = vshrl.u32 %v1296, 7
    %v1298 = vsub.s32 6, %v1297
    %v1299 = vrot.slane %v308, %v1298
    %v1300 = vlaneseq
    %v1301 = vshrl.u32 %v1300, 7
    %v1302 = vsub.s32 7, %v1301
    %v1303 = vrot.slane %v308, %v1302
    %v1304 = vlaneseq
    %v1305 = vshrl.u32 %v1304, 7
    %v1306 = vsub.s32 0, %v1305
    %v1307 = vrot.slane %v309, %v1306
    %v1308 = vlaneseq
    %v1309 = vshrl.u32 %v1308, 7
    %v1310 = vsub.s32 1, %v1309
    %v1311 = vrot.slane %v309, %v1310
    %v1312 = vlaneseq
    %v1313 = vshrl.u32 %v1312, 7
    %v1314 = vsub.s32 2, %v1313
    %v1315 = vrot.slane %v309, %v1314
    %v1316 = vlaneseq
    %v1317 = vshrl.u32 %v1316, 7
    %v1318 = vsub.s32 3, %v1317
    %v1319 = vrot.slane %v309, %v1318
    %v1320 = vlaneseq
    %v1321 = vshrl.u32 %v1320, 7
    %v1322 = vsub.s32 4, %v1321
    %v1323 = vrot.slane %v309, %v1322
    %v1324 = vlaneseq
    %v1325 = vshrl.u32 %v1324, 7
    %v1326 = vsub.s32 5, %v1325
    %v1327 = vrot.slane %v309, %v1326
    %v1328 = vlaneseq
    %v1329 = vshrl.u32 %v1328, 7
    %v1330 = vsub.s32 6, %v1329
    %v1331 = vrot.slane %v309, %v1330
    %v1332 = vlaneseq
    %v1333 = vshrl.u32 %v1332, 7
    %v1334 = vsub.s32 7, %v1333
    %v1335 = vrot.slane %v309, %v1334
    %v1336 = vlaneseq
    %v1337 = vshrl.u32 %v1336, 7
    %v1338 = vsub.s32 0, %v1337
    %v1339 = vrot.slane %v310, %v1338
    %v1340 = vlaneseq
    %v1341 = vshrl.u32 %v1340, 7
    %v1342 = vsub.s32 1, %v1341
    %v1343 = vrot.slane %v310, %v1342
    %v1344 = vlaneseq
    %v1345 = vshrl.u32 %v1344, 7
    %v1346 = vsub.s32 2, %v1345
    %v1347 = vrot.slane %v310, %v1346
    %v1348 = vlaneseq
    %v1349 = vshrl.u32 %v1348, 7
    %v1350 = vsub.s32 3, %v1349
    %v1351 = vrot.slane %v310, %v1350
    %v1352 = vlaneseq
    %v1353 = vshrl.u32 %v1352, 7
    %v1354 = vsub.s32 4, %v1353
    %v1355 = vrot.slane %v310, %v1354
    %v1356 = vlaneseq
    %v1357 = vshrl.u32 %v1356, 7
    %v1358 = vsub.s32 5, %v1357
    %v1359 = vrot.slane %v310, %v1358
    %v1360 = vlaneseq
    %v1361 = vshrl.u32 %v1360, 7
    %v1362 = vsub.s32 6, %v1361
    %v1363 = vrot.slane %v310, %v1362
    %v1364 = vlaneseq
    %v1365 = vshrl.u32 %v1364, 7
    %v1366 = vsub.s32 7, %v1365
    %v1367 = vrot.slane %v310, %v1366
    %v1368 = vlaneseq
    %v1369 = vshrl.u32 %v1368, 7
    %v1370 = vsub.s32 0, %v1369
    %v1371 = vrot.slane %v311, %v1370
    %v1372 = vlaneseq
    %v1373 = vshrl.u32 %v1372, 7
    %v1374 = vsub.s32 1, %v1373
    %v1375 = vrot.slane %v311, %v1374
    %v1376 = vlaneseq
    %v1377 = vshrl.u32 %v1376, 7
    %v1378 = vsub.s32 2, %v1377
    %v1379 = vrot.slane %v311, %v1378
    %v1380 = vlaneseq
    %v1381 = vshrl.u32 %v1380, 7
    %v1382 = vsub.s32 3, %v1381
    %v1383 = vrot.slane %v311, %v1382
    %v1384 = vlaneseq
    %v1385 = vshrl.u32 %v1384, 7
    %v1386 = vsub.s32 4, %v1385
    %v1387 = vrot.slane %v311, %v1386
    %v1388 = vlaneseq
    %v1389 = vshrl.u32 %v1388, 7
    %v1390 = vsub.s32 5, %v1389
    %v1391 = vrot.slane %v311, %v1390
    %v1392 = vlaneseq
    %v1393 = vshrl.u32 %v1392, 7
    %v1394 = vsub.s32 6, %v1393
    %v1395 = vrot.slane %v311, %v1394
    %v1396 = vlaneseq
    %v1397 = vshrl.u32 %v1396, 7
    %v1398 = vsub.s32 7, %v1397
    %v1399 = vrot.slane %v311, %v1398
    %v1400 = vcombine.low %v379, %v383
    %v1401 = vcombine.low %v387, %v391
    %v1402 = vcombine.low %v395, %v399
    %v1403 = vcombine.low %v403, %v407
    %v1405 = vunpack.c.l.s4 1966171168
    %v1406 = vunpack.c.0.s8 %v1405
    %v1407 = vlaneseq
    %v1408 = vshrl.u32 %v1407, 7
    %v1409 = vsub.s32 %v1406, %v1408
    %v1410 = vrot.slane %v1400, %v1409
    %v1412 = vunpack.c.l.s4 1966171168
    %v1413 = vunpack.c.0.s8 %v1412
    %v1414 = vlaneseq
    %v1415 = vshrl.u32 %v1414, 7
    %v1416 = vsub.s32 %v1413, %v1415
    %v1417 = vrot.slane %v1401, %v1416
    %v1419 = vunpack.c.l.s4 1966171168
    %v1420 = vunpack.c.0.s8 %v1419
    %v1421 = vlaneseq
    %v1422 = vshrl.u32 %v1421, 7
    %v1423 = vsub.s32 %v1420, %v1422
    %v1424 = vrot.slane %v1402, %v1423
    %v1426 = vunpack.c.l.s4 1966171168
    %v1427 = vunpack.c.0.s8 %v1426
    %v1428 = vlaneseq
    %v1429 = vshrl.u32 %v1428, 7
    %v1430 = vsub.s32 %v1427, %v1429
    %v1431 = vrot.slane %v1403, %v1430
    %v1432 = vcombine.low %v1410, %v1417
    %v1433 = vcombine.low %v1424, %v1431
    %v1435 = vunpack.c.l.s4 1966171168
    %v1436 = vunpack.c.0.s8 %v1435
    %v1437 = vlaneseq
    %v1438 = vshrl.u32 %v1437, 7
    %v1439 = vsub.s32 %v1436, %v1438
    %v1440 = vrot.slane %v1432, %v1439
    %v1442 = vunpack.c.l.s4 1966171168
    %v1443 = vunpack.c.0.s8 %v1442
    %v1444 = vlaneseq
    %v1445 = vshrl.u32 %v1444, 7
    %v1446 = vsub.s32 %v1443, %v1445
    %v1447 = vrot.slane %v1433, %v1446
    %v1448 = vcombine.low %v1440, %v1447
    %v1449 = vcombine.low %v411, %v415
    %v1450 = vcombine.low %v419, %v423
    %v1451 = vcombine.low %v427, %v431
    %v1452 = vcombine.low %v435, %v439
    %v1454 = vunpack.c.l.s4 1966171168
    %v1455 = vunpack.c.0.s8 %v1454
    %v1456 = vlaneseq
    %v1457 = vshrl.u32 %v1456, 7
    %v1458 = vsub.s32 %v1455, %v1457
    %v1459 = vrot.slane %v1449, %v1458
    %v1461 = vunpack.c.l.s4 1966171168
    %v1462 = vunpack.c.0.s8 %v1461
    %v1463 = vlaneseq
    %v1464 = vshrl.u32 %v1463, 7
    %v1465 = vsub.s32 %v1462, %v1464
    %v1466 = vrot.slane %v1450, %v1465
    %v1468 = vunpack.c.l.s4 1966171168
    %v1469 = vunpack.c.0.s8 %v1468
    %v1470 = vlaneseq
    %v1471 = vshrl.u32 %v1470, 7
    %v1472 = vsub.s32 %v1469, %v1471
    %v1473 = vrot.slane %v1451, %v1472
    %v1475 = vunpack.c.l.s4 1966171168
    %v1476 = vunpack.c.0.s8 %v1475
    %v1477 = vlaneseq
    %v1478 = vshrl.u32 %v1477, 7
    %v1479 = vsub.s32 %v1476, %v1478
    %v1480 = vrot.slane %v1452, %v1479
    %v1481 = vcombine.low %v1459, %v1466
    %v1482 = vcombine.low %v1473, %v1480
    %v1484 = vunpack.c.l.s4 1966171168
    %v1485 = vunpack.c.0.s8 %v1484
    %v1486 = vlaneseq
    %v1487 = vshrl.u32 %v1486, 7
    %v1488 = vsub.s32 %v1485, %v1487
    %v1489 = vrot.slane %v1481, %v1488
    %v1491 = vunpack.c.l.s4 1966171168
    %v1492 = vunpack.c.0.s8 %v1491
    %v1493 = vlaneseq
    %v1494 = vshrl.u32 %v1493, 7
    %v1495 = vsub.s32 %v1492, %v1494
    %v1496 = vrot.slane %v1482, %v1495
    %v1497 = vcombine.low %v1489, %v1496
    %v1498 = vcombine.low %v443, %v447
    %v1499 = vcombine.low %v451, %v455
    %v1500 = vcombine.low %v459, %v463
    %v1501 = vcombine.low %v467, %v471
    %v1503 = vunpack.c.l.s4 1966171168
    %v1504 = vunpack.c.0.s8 %v1503
    %v1505 = vlaneseq
    %v1506 = vshrl.u32 %v1505, 7
    %v1507 = vsub.s32 %v1504, %v1506
    %v1508 = vrot.slane %v1498, %v1507
    %v1510 = vunpack.c.l.s4 1966171168
    %v1511 = vunpack.c.0.s8 %v1510
    %v1512 = vlaneseq
    %v1513 = vshrl.u32 %v1512, 7
    %v1514 = vsub.s32 %v1511, %v1513
    %v1515 = vrot.slane %v1499, %v1514
    %v1517 = vunpack.c.l.s4 1966171168
    %v1518 = vunpack.c.0.s8 %v1517
    %v1519 = vlaneseq
    %v1520 = vshrl.u32 %v1519, 7
    %v1521 = vsub.s32 %v1518, %v1520
    %v1522 = vrot.slane %v1500, %v1521
    %v1524 = vunpack.c.l.s4 1966171168
    %v1525 = vunpack.c.0.s8 %v1524
    %v1526 = vlaneseq
    %v1527 = vshrl.u32 %v1526, 7
    %v1528 = vsub.s32 %v1525, %v1527
    %v1529 = vrot.slane %v1501, %v1528
    %v1530 = vcombine.low %v1508, %v1515
    %v1531 = vcombine.low %v1522, %v1529
    %v1533 = vunpack.c.l.s4 1966171168
    %v1534 = vunpack.c.0.s8 %v1533
    %v1535 = vlaneseq
    %v1536 = vshrl.u32 %v1535, 7
    %v1537 = vsub.s32 %v1534, %v1536
    %v1538 = vrot.slane %v1530, %v1537
    %v1540 = vunpack.c.l.s4 1966171168
    %v1541 = vunpack.c.0.s8 %v1540
    %v1542 = vlaneseq
    %v1543 = vshrl.u32 %v1542, 7
    %v1544 = vsub.s32 %v1541, %v1543
    %v1545 = vrot.slane %v1531, %v1544
    %v1546 = vcombine.low %v1538, %v1545
    %v1547 = vcombine.low %v475, %v479
    %v1548 = vcombine.low %v483, %v487
    %v1549 = vcombine.low %v491, %v495
    %v1550 = vcombine.low %v499, %v503
    %v1552 = vunpack.c.l.s4 1966171168
    %v1553 = vunpack.c.0.s8 %v1552
    %v1554 = vlaneseq
    %v1555 = vshrl.u32 %v1554, 7
    %v1556 = vsub.s32 %v1553, %v1555
    %v1557 = vrot.slane %v1547, %v1556
    %v1559 = vunpack.c.l.s4 1966171168
    %v1560 = vunpack.c.0.s8 %v1559
    %v1561 = vlaneseq
    %v1562 = vshrl.u32 %v1561, 7
    %v1563 = vsub.s32 %v1560, %v1562
    %v1564 = vrot.slane %v1548, %v1563
    %v1566 = vunpack.c.l.s4 1966171168
    %v1567 = vunpack.c.0.s8 %v1566
    %v1568 = vlaneseq
    %v1569 = vshrl.u32 %v1568, 7
    %v1570 = vsub.s32 %v1567, %v1569
    %v1571 = vrot.slane %v1549, %v1570
    %v1573 = vunpack.c.l.s4 1966171168
    %v1574 = vunpack.c.0.s8 %v1573
    %v1575 = vlaneseq
    %v1576 = vshrl.u32 %v1575, 7
    %v1577 = vsub.s32 %v1574, %v1576
    %v1578 = vrot.slane %v1550, %v1577
    %v1579 = vcombine.low %v1557, %v1564
    %v1580 = vcombine.low %v1571, %v1578
    %v1582 = vunpack.c.l.s4 1966171168
    %v1583 = vunpack.c.0.s8 %v1582
    %v1584 = vlaneseq
    %v1585 = vshrl.u32 %v1584, 7
    %v1586 = vsub.s32 %v1583, %v1585
    %v1587 = vrot.slane %v1579, %v1586
    %v1589 = vunpack.c.l.s4 1966171168
    %v1590 = vunpack.c.0.s8 %v1589
    %v1591 = vlaneseq
    %v1592 = vshrl.u32 %v1591, 7
    %v1593 = vsub.s32 %v1590, %v1592
    %v1594 = vrot.slane %v1580, %v1593
    %v1595 = vcombine.low %v1587, %v1594
    %v1596 = vcombine.low %v507, %v511
    %v1597 = vcombine.low %v515, %v519
    %v1598 = vcombine.low %v523, %v527
    %v1599 = vcombine.low %v531, %v535
    %v1601 = vunpack.c.l.s4 1966171168
    %v1602 = vunpack.c.0.s8 %v1601
    %v1603 = vlaneseq
    %v1604 = vshrl.u32 %v1603, 7
    %v1605 = vsub.s32 %v1602, %v1604
    %v1606 = vrot.slane %v1596, %v1605
    %v1608 = vunpack.c.l.s4 1966171168
    %v1609 = vunpack.c.0.s8 %v1608
    %v1610 = vlaneseq
    %v1611 = vshrl.u32 %v1610, 7
    %v1612 = vsub.s32 %v1609, %v1611
    %v1613 = vrot.slane %v1597, %v1612
    %v1615 = vunpack.c.l.s4 1966171168
    %v1616 = vunpack.c.0.s8 %v1615
    %v1617 = vlaneseq
    %v1618 = vshrl.u32 %v1617, 7
    %v1619 = vsub.s32 %v1616, %v1618
    %v1620 = vrot.slane %v1598, %v1619
    %v1622 = vunpack.c.l.s4 1966171168
    %v1623 = vunpack.c.0.s8 %v1622
    %v1624 = vlaneseq
    %v1625 = vshrl.u32 %v1624, 7
    %v1626 = vsub.s32 %v1623, %v1625
    %v1627 = vrot.slane %v1599, %v1626
    %v1628 = vcombine.low %v1606, %v1613
    %v1629 = vcombine.low %v1620, %v1627
    %v1631 = vunpack.c.l.s4 1966171168
    %v1632 = vunpack.c.0.s8 %v1631
    %v1633 = vlaneseq
    %v1634 = vshrl.u32 %v1633, 7
    %v1635 = vsub.s32 %v1632, %v1634
    %v1636 = vrot.slane %v1628, %v1635
    %v1638 = vunpack.c.l.s4 1966171168
    %v1639 = vunpack.c.0.s8 %v1638
    %v1640 = vlaneseq
    %v1641 = vshrl.u32 %v1640, 7
    %v1642 = vsub.s32 %v1639, %v1641
    %v1643 = vrot.slane %v1629, %v1642
    %v1644 = vcombine.low %v1636, %v1643
    %v1645 = vcombine.low %v539, %v543
    %v1646 = vcombine.low %v547, %v551
    %v1647 = vcombine.low %v555, %v559
    %v1648 = vcombine.low %v563, %v567
    %v1650 = vunpack.c.l.s4 1966171168
    %v1651 = vunpack.c.0.s8 %v1650
    %v1652 = vlaneseq
    %v1653 = vshrl.u32 %v1652, 7
    %v1654 = vsub.s32 %v1651, %v1653
    %v1655 = vrot.slane %v1645, %v1654
    %v1657 = vunpack.c.l.s4 1966171168
    %v1658 = vunpack.c.0.s8 %v1657
    %v1659 = vlaneseq
    %v1660 = vshrl.u32 %v1659, 7
    %v1661 = vsub.s32 %v1658, %v1660
    %v1662 = vrot.slane %v1646, %v1661
    %v1664 = vunpack.c.l.s4 1966171168
    %v1665 = vunpack.c.0.s8 %v1664
    %v1666 = vlaneseq
    %v1667 = vshrl.u32 %v1666, 7
    %v1668 = vsub.s32 %v1665, %v1667
    %v1669 = vrot.slane %v1647, %v1668
    %v1671 = vunpack.c.l.s4 1966171168
    %v1672 = vunpack.c.0.s8 %v1671
    %v1673 = vlaneseq
    %v1674 = vshrl.u32 %v1673, 7
    %v1675 = vsub.s32 %v1672, %v1674
    %v1676 = vrot.slane %v1648, %v1675
    %v1677 = vcombine.low %v1655, %v1662
    %v1678 = vcombine.low %v1669, %v1676
    %v1680 = vunpack.c.l.s4 1966171168
    %v1681 = vunpack.c.0.s8 %v1680
    %v1682 = vlaneseq
    %v1683 = vshrl.u32 %v1682, 7
    %v1684 = vsub.s32 %v1681, %v1683
    %v1685 = vrot.slane %v1677, %v1684
    %v1687 = vunpack.c.l.s4 1966171168
    %v1688 = vunpack.c.0.s8 %v1687
    %v1689 = vlaneseq
    %v1690 = vshrl.u32 %v1689, 7
    %v1691 = vsub.s32 %v1688, %v1690
    %v1692 = vrot.slane %v1678, %v1691
    %v1693 = vcombine.low %v1685, %v1692
    %v1694 = vcombine.low %v571, %v575
    %v1695 = vcombine.low %v579, %v583
    %v1696 = vcombine.low %v587, %v591
    %v1697 = vcombine.low %v595, %v599
    %v1699 = vunpack.c.l.s4 1966171168
    %v1700 = vunpack.c.0.s8 %v1699
    %v1701 = vlaneseq
    %v1702 = vshrl.u32 %v1701, 7
    %v1703 = vsub.s32 %v1700, %v1702
    %v1704 = vrot.slane %v1694, %v1703
    %v1706 = vunpack.c.l.s4 1966171168
    %v1707 = vunpack.c.0.s8 %v1706
    %v1708 = vlaneseq
    %v1709 = vshrl.u32 %v1708, 7
    %v1710 = vsub.s32 %v1707, %v1709
    %v1711 = vrot.slane %v1695, %v1710
    %v1713 = vunpack.c.l.s4 1966171168
    %v1714 = vunpack.c.0.s8 %v1713
    %v1715 = vlaneseq
    %v1716 = vshrl.u32 %v1715, 7
    %v1717 = vsub.s32 %v1714, %v1716
    %v1718 = vrot.slane %v1696, %v1717
    %v1720 = vunpack.c.l.s4 1966171168
    %v1721 = vunpack.c.0.s8 %v1720
    %v1722 = vlaneseq
    %v1723 = vshrl.u32 %v1722, 7
    %v1724 = vsub.s32 %v1721, %v1723
    %v1725 = vrot.slane %v1697, %v1724
    %v1726 = vcombine.low %v1704, %v1711
    %v1727 = vcombine.low %v1718, %v1725
    %v1729 = vunpack.c.l.s4 1966171168
    %v1730 = vunpack.c.0.s8 %v1729
    %v1731 = vlaneseq
    %v1732 = vshrl.u32 %v1731, 7
    %v1733 = vsub.s32 %v1730, %v1732
    %v1734 = vrot.slane %v1726, %v1733
    %v1736 = vunpack.c.l.s4 1966171168
    %v1737 = vunpack.c.0.s8 %v1736
    %v1738 = vlaneseq
    %v1739 = vshrl.u32 %v1738, 7
    %v1740 = vsub.s32 %v1737, %v1739
    %v1741 = vrot.slane %v1727, %v1740
    %v1742 = vcombine.low %v1734, %v1741
    %v1743 = vcombine.low %v603, %v607
    %v1744 = vcombine.low %v611, %v615
    %v1745 = vcombine.low %v619, %v623
    %v1746 = vcombine.low %v627, %v631
    %v1748 = vunpack.c.l.s4 1966171168
    %v1749 = vunpack.c.0.s8 %v1748
    %v1750 = vlaneseq
    %v1751 = vshrl.u32 %v1750, 7
    %v1752 = vsub.s32 %v1749, %v1751
    %v1753 = vrot.slane %v1743, %v1752
    %v1755 = vunpack.c.l.s4 1966171168
    %v1756 = vunpack.c.0.s8 %v1755
    %v1757 = vlaneseq
    %v1758 = vshrl.u32 %v1757, 7
    %v1759 = vsub.s32 %v1756, %v1758
    %v1760 = vrot.slane %v1744, %v1759
    %v1762 = vunpack.c.l.s4 1966171168
    %v1763 = vunpack.c.0.s8 %v1762
    %v1764 = vlaneseq
    %v1765 = vshrl.u32 %v1764, 7
    %v1766 = vsub.s32 %v1763, %v1765
    %v1767 = vrot.slane %v1745, %v1766
    %v1769 = vunpack.c.l.s4 1966171168
    %v1770 = vunpack.c.0.s8 %v1769
    %v1771 = vlaneseq
    %v1772 = vshrl.u32 %v1771, 7
    %v1773 = vsub.s32 %v1770, %v1772
    %v1774 = vrot.slane %v1746, %v1773
    %v1775 = vcombine.low %v1753, %v1760
    %v1776 = vcombine.low %v1767, %v1774
    %v1778 = vunpack.c.l.s4 1966171168
    %v1779 = vunpack.c.0.s8 %v1778
    %v1780 = vlaneseq
    %v1781 = vshrl.u32 %v1780, 7
    %v1782 = vsub.s32 %v1779, %v1781
    %v1783 = vrot.slane %v1775, %v1782
    %v1785 = vunpack.c.l.s4 1966171168
    %v1786 = vunpack.c.0.s8 %v1785
    %v1787 = vlaneseq
    %v1788 = vshrl.u32 %v1787, 7
    %v1789 = vsub.s32 %v1786, %v1788
    %v1790 = vrot.slane %v1776, %v1789
    %v1791 = vcombine.low %v1783, %v1790
    %v1792 = vcombine.low %v635, %v639
    %v1793 = vcombine.low %v643, %v647
    %v1794 = vcombine.low %v651, %v655
    %v1795 = vcombine.low %v659, %v663
    %v1797 = vunpack.c.l.s4 1966171168
    %v1798 = vunpack.c.0.s8 %v1797
    %v1799 = vlaneseq
    %v1800 = vshrl.u32 %v1799, 7
    %v1801 = vsub.s32 %v1798, %v1800
    %v1802 = vrot.slane %v1792, %v1801
    %v1804 = vunpack.c.l.s4 1966171168
    %v1805 = vunpack.c.0.s8 %v1804
    %v1806 = vlaneseq
    %v1807 = vshrl.u32 %v1806, 7
    %v1808 = vsub.s32 %v1805, %v1807
    %v1809 = vrot.slane %v1793, %v1808
    %v1811 = vunpack.c.l.s4 1966171168
    %v1812 = vunpack.c.0.s8 %v1811
    %v1813 = vlaneseq
    %v1814 = vshrl.u32 %v1813, 7
    %v1815 = vsub.s32 %v1812, %v1814
    %v1816 = vrot.slane %v1794, %v1815
    %v1818 = vunpack.c.l.s4 1966171168
    %v1819 = vunpack.c.0.s8 %v1818
    %v1820 = vlaneseq
    %v1821 = vshrl.u32 %v1820, 7
    %v1822 = vsub.s32 %v1819, %v1821
    %v1823 = vrot.slane %v1795, %v1822
    %v1824 = vcombine.low %v1802, %v1809
    %v1825 = vcombine.low %v1816, %v1823
    %v1827 = vunpack.c.l.s4 1966171168
    %v1828 = vunpack.c.0.s8 %v1827
    %v1829 = vlaneseq
    %v1830 = vshrl.u32 %v1829, 7
    %v1831 = vsub.s32 %v1828, %v1830
    %v1832 = vrot.slane %v1824, %v1831
    %v1834 = vunpack.c.l.s4 1966171168
    %v1835 = vunpack.c.0.s8 %v1834
    %v1836 = vlaneseq
    %v1837 = vshrl.u32 %v1836, 7
    %v1838 = vsub.s32 %v1835, %v1837
    %v1839 = vrot.slane %v1825, %v1838
    %v1840 = vcombine.low %v1832, %v1839
    %v1841 = vcombine.low %v667, %v671
    %v1842 = vcombine.low %v675, %v679
    %v1843 = vcombine.low %v683, %v687
    %v1844 = vcombine.low %v691, %v695
    %v1846 = vunpack.c.l.s4 1966171168
    %v1847 = vunpack.c.0.s8 %v1846
    %v1848 = vlaneseq
    %v1849 = vshrl.u32 %v1848, 7
    %v1850 = vsub.s32 %v1847, %v1849
    %v1851 = vrot.slane %v1841, %v1850
    %v1853 = vunpack.c.l.s4 1966171168
    %v1854 = vunpack.c.0.s8 %v1853
    %v1855 = vlaneseq
    %v1856 = vshrl.u32 %v1855, 7
    %v1857 = vsub.s32 %v1854, %v1856
    %v1858 = vrot.slane %v1842, %v1857
    %v1860 = vunpack.c.l.s4 1966171168
    %v1861 = vunpack.c.0.s8 %v1860
    %v1862 = vlaneseq
    %v1863 = vshrl.u32 %v1862, 7
    %v1864 = vsub.s32 %v1861, %v1863
    %v1865 = vrot.slane %v1843, %v1864
    %v1867 = vunpack.c.l.s4 1966171168
    %v1868 = vunpack.c.0.s8 %v1867
    %v1869 = vlaneseq
    %v1870 = vshrl.u32 %v1869, 7
    %v1871 = vsub.s32 %v1868, %v1870
    %v1872 = vrot.slane %v1844, %v1871
    %v1873 = vcombine.low %v1851, %v1858
    %v1874 = vcombine.low %v1865, %v1872
    %v1876 = vunpack.c.l.s4 1966171168
    %v1877 = vunpack.c.0.s8 %v1876
    %v1878 = vlaneseq
    %v1879 = vshrl.u32 %v1878, 7
    %v1880 = vsub.s32 %v1877, %v1879
    %v1881 = vrot.slane %v1873, %v1880
    %v1883 = vunpack.c.l.s4 1966171168
    %v1884 = vunpack.c.0.s8 %v1883
    %v1885 = vlaneseq
    %v1886 = vshrl.u32 %v1885, 7
    %v1887 = vsub.s32 %v1884, %v1886
    %v1888 = vrot.slane %v1874, %v1887
    %v1889 = vcombine.low %v1881, %v1888
    %v1890 = vcombine.low %v699, %v703
    %v1891 = vcombine.low %v707, %v711
    %v1892 = vcombine.low %v715, %v719
    %v1893 = vcombine.low %v723, %v727
    %v1895 = vunpack.c.l.s4 1966171168
    %v1896 = vunpack.c.0.s8 %v1895
    %v1897 = vlaneseq
    %v1898 = vshrl.u32 %v1897, 7
    %v1899 = vsub.s32 %v1896, %v1898
    %v1900 = vrot.slane %v1890, %v1899
    %v1902 = vunpack.c.l.s4 1966171168
    %v1903 = vunpack.c.0.s8 %v1902
    %v1904 = vlaneseq
    %v1905 = vshrl.u32 %v1904, 7
    %v1906 = vsub.s32 %v1903, %v1905
    %v1907 = vrot.slane %v1891, %v1906
    %v1909 = vunpack.c.l.s4 1966171168
    %v1910 = vunpack.c.0.s8 %v1909
    %v1911 = vlaneseq
    %v1912 = vshrl.u32 %v1911, 7
    %v1913 = vsub.s32 %v1910, %v1912
    %v1914 = vrot.slane %v1892, %v1913
    %v1916 = vunpack.c.l.s4 1966171168
    %v1917 = vunpack.c.0.s8 %v1916
    %v1918 = vlaneseq
    %v1919 = vshrl.u32 %v1918, 7
    %v1920 = vsub.s32 %v1917, %v1919
    %v1921 = vrot.slane %v1893, %v1920
    %v1922 = vcombine.low %v1900, %v1907
    %v1923 = vcombine.low %v1914, %v1921
    %v1925 = vunpack.c.l.s4 1966171168
    %v1926 = vunpack.c.0.s8 %v1925
    %v1927 = vlaneseq
    %v1928 = vshrl.u32 %v1927, 7
    %v1929 = vsub.s32 %v1926, %v1928
    %v1930 = vrot.slane %v1922, %v1929
    %v1932 = vunpack.c.l.s4 1966171168
    %v1933 = vunpack.c.0.s8 %v1932
    %v1934 = vlaneseq
    %v1935 = vshrl.u32 %v1934, 7
    %v1936 = vsub.s32 %v1933, %v1935
    %v1937 = vrot.slane %v1923, %v1936
    %v1938 = vcombine.low %v1930, %v1937
    %v1939 = vcombine.low %v731, %v735
    %v1940 = vcombine.low %v739, %v743
    %v1941 = vcombine.low %v747, %v751
    %v1942 = vcombine.low %v755, %v759
    %v1944 = vunpack.c.l.s4 1966171168
    %v1945 = vunpack.c.0.s8 %v1944
    %v1946 = vlaneseq
    %v1947 = vshrl.u32 %v1946, 7
    %v1948 = vsub.s32 %v1945, %v1947
    %v1949 = vrot.slane %v1939, %v1948
    %v1951 = vunpack.c.l.s4 1966171168
    %v1952 = vunpack.c.0.s8 %v1951
    %v1953 = vlaneseq
    %v1954 = vshrl.u32 %v1953, 7
    %v1955 = vsub.s32 %v1952, %v1954
    %v1956 = vrot.slane %v1940, %v1955
    %v1958 = vunpack.c.l.s4 1966171168
    %v1959 = vunpack.c.0.s8 %v1958
    %v1960 = vlaneseq
    %v1961 = vshrl.u32 %v1960, 7
    %v1962 = vsub.s32 %v1959, %v1961
    %v1963 = vrot.slane %v1941, %v1962
    %v1965 = vunpack.c.l.s4 1966171168
    %v1966 = vunpack.c.0.s8 %v1965
    %v1967 = vlaneseq
    %v1968 = vshrl.u32 %v1967, 7
    %v1969 = vsub.s32 %v1966, %v1968
    %v1970 = vrot.slane %v1942, %v1969
    %v1971 = vcombine.low %v1949, %v1956
    %v1972 = vcombine.low %v1963, %v1970
    %v1974 = vunpack.c.l.s4 1966171168
    %v1975 = vunpack.c.0.s8 %v1974
    %v1976 = vlaneseq
    %v1977 = vshrl.u32 %v1976, 7
    %v1978 = vsub.s32 %v1975, %v1977
    %v1979 = vrot.slane %v1971, %v1978
    %v1981 = vunpack.c.l.s4 1966171168
    %v1982 = vunpack.c.0.s8 %v1981
    %v1983 = vlaneseq
    %v1984 = vshrl.u32 %v1983, 7
    %v1985 = vsub.s32 %v1982, %v1984
    %v1986 = vrot.slane %v1972, %v1985
    %v1987 = vcombine.low %v1979, %v1986
    %v1988 = vcombine.low %v763, %v767
    %v1989 = vcombine.low %v771, %v775
    %v1990 = vcombine.low %v779, %v783
    %v1991 = vcombine.low %v787, %v791
    %v1993 = vunpack.c.l.s4 1966171168
    %v1994 = vunpack.c.0.s8 %v1993
    %v1995 = vlaneseq
    %v1996 = vshrl.u32 %v1995, 7
    %v1997 = vsub.s32 %v1994, %v1996
    %v1998 = vrot.slane %v1988, %v1997
    %v2000 = vunpack.c.l.s4 1966171168
    %v2001 = vunpack.c.0.s8 %v2000
    %v2002 = vlaneseq
    %v2003 = vshrl.u32 %v2002, 7
    %v2004 = vsub.s32 %v2001, %v2003
    %v2005 = vrot.slane %v1989, %v2004
    %v2007 = vunpack.c.l.s4 1966171168
    %v2008 = vunpack.c.0.s8 %v2007
    %v2009 = vlaneseq
    %v2010 = vshrl.u32 %v2009, 7
    %v2011 = vsub.s32 %v2008, %v2010
    %v2012 = vrot.slane %v1990, %v2011
    %v2014 = vunpack.c.l.s4 1966171168
    %v2015 = vunpack.c.0.s8 %v2014
    %v2016 = vlaneseq
    %v2017 = vshrl.u32 %v2016, 7
    %v2018 = vsub.s32 %v2015, %v2017
    %v2019 = vrot.slane %v1991, %v2018
    %v2020 = vcombine.low %v1998, %v2005
    %v2021 = vcombine.low %v2012, %v2019
    %v2023 = vunpack.c.l.s4 1966171168
    %v2024 = vunpack.c.0.s8 %v2023
    %v2025 = vlaneseq
    %v2026 = vshrl.u32 %v2025, 7
    %v2027 = vsub.s32 %v2024, %v2026
    %v2028 = vrot.slane %v2020, %v2027
    %v2030 = vunpack.c.l.s4 1966171168
    %v2031 = vunpack.c.0.s8 %v2030
    %v2032 = vlaneseq
    %v2033 = vshrl.u32 %v2032, 7
    %v2034 = vsub.s32 %v2031, %v2033
    %v2035 = vrot.slane %v2021, %v2034
    %v2036 = vcombine.low %v2028, %v2035
    %v2037 = vcombine.low %v795, %v799
    %v2038 = vcombine.low %v803, %v807
    %v2039 = vcombine.low %v811, %v815
    %v2040 = vcombine.low %v819, %v823
    %v2042 = vunpack.c.l.s4 1966171168
    %v2043 = vunpack.c.0.s8 %v2042
    %v2044 = vlaneseq
    %v2045 = vshrl.u32 %v2044, 7
    %v2046 = vsub.s32 %v2043, %v2045
    %v2047 = vrot.slane %v2037, %v2046
    %v2049 = vunpack.c.l.s4 1966171168
    %v2050 = vunpack.c.0.s8 %v2049
    %v2051 = vlaneseq
    %v2052 = vshrl.u32 %v2051, 7
    %v2053 = vsub.s32 %v2050, %v2052
    %v2054 = vrot.slane %v2038, %v2053
    %v2056 = vunpack.c.l.s4 1966171168
    %v2057 = vunpack.c.0.s8 %v2056
    %v2058 = vlaneseq
    %v2059 = vshrl.u32 %v2058, 7
    %v2060 = vsub.s32 %v2057, %v2059
    %v2061 = vrot.slane %v2039, %v2060
    %v2063 = vunpack.c.l.s4 1966171168
    %v2064 = vunpack.c.0.s8 %v2063
    %v2065 = vlaneseq
    %v2066 = vshrl.u32 %v2065, 7
    %v2067 = vsub.s32 %v2064, %v2066
    %v2068 = vrot.slane %v2040, %v2067
    %v2069 = vcombine.low %v2047, %v2054
    %v2070 = vcombine.low %v2061, %v2068
    %v2072 = vunpack.c.l.s4 1966171168
    %v2073 = vunpack.c.0.s8 %v2072
    %v2074 = vlaneseq
    %v2075 = vshrl.u32 %v2074, 7
    %v2076 = vsub.s32 %v2073, %v2075
    %v2077 = vrot.slane %v2069, %v2076
    %v2079 = vunpack.c.l.s4 1966171168
    %v2080 = vunpack.c.0.s8 %v2079
    %v2081 = vlaneseq
    %v2082 = vshrl.u32 %v2081, 7
    %v2083 = vsub.s32 %v2080, %v2082
    %v2084 = vrot.slane %v2070, %v2083
    %v2085 = vcombine.low %v2077, %v2084
    %v2086 = vcombine.low %v827, %v831
    %v2087 = vcombine.low %v835, %v839
    %v2088 = vcombine.low %v843, %v847
    %v2089 = vcombine.low %v851, %v855
    %v2091 = vunpack.c.l.s4 1966171168
    %v2092 = vunpack.c.0.s8 %v2091
    %v2093 = vlaneseq
    %v2094 = vshrl.u32 %v2093, 7
    %v2095 = vsub.s32 %v2092, %v2094
    %v2096 = vrot.slane %v2086, %v2095
    %v2098 = vunpack.c.l.s4 1966171168
    %v2099 = vunpack.c.0.s8 %v2098
    %v2100 = vlaneseq
    %v2101 = vshrl.u32 %v2100, 7
    %v2102 = vsub.s32 %v2099, %v2101
    %v2103 = vrot.slane %v2087, %v2102
    %v2105 = vunpack.c.l.s4 1966171168
    %v2106 = vunpack.c.0.s8 %v2105
    %v2107 = vlaneseq
    %v2108 = vshrl.u32 %v2107, 7
    %v2109 = vsub.s32 %v2106, %v2108
    %v2110 = vrot.slane %v2088, %v2109
    %v2112 = vunpack.c.l.s4 1966171168
    %v2113 = vunpack.c.0.s8 %v2112
    %v2114 = vlaneseq
    %v2115 = vshrl.u32 %v2114, 7
    %v2116 = vsub.s32 %v2113, %v2115
    %v2117 = vrot.slane %v2089, %v2116
    %v2118 = vcombine.low %v2096, %v2103
    %v2119 = vcombine.low %v2110, %v2117
    %v2121 = vunpack.c.l.s4 1966171168
    %v2122 = vunpack.c.0.s8 %v2121
    %v2123 = vlaneseq
    %v2124 = vshrl.u32 %v2123, 7
    %v2125 = vsub.s32 %v2122, %v2124
    %v2126 = vrot.slane %v2118, %v2125
    %v2128 = vunpack.c.l.s4 1966171168
    %v2129 = vunpack.c.0.s8 %v2128
    %v2130 = vlaneseq
    %v2131 = vshrl.u32 %v2130, 7
    %v2132 = vsub.s32 %v2129, %v2131
    %v2133 = vrot.slane %v2119, %v2132
    %v2134 = vcombine.low %v2126, %v2133
    %v2135 = vcombine.low %v859, %v863
    %v2136 = vcombine.low %v867, %v871
    %v2137 = vcombine.low %v875, %v879
    %v2138 = vcombine.low %v883, %v887
    %v2140 = vunpack.c.l.s4 1966171168
    %v2141 = vunpack.c.0.s8 %v2140
    %v2142 = vlaneseq
    %v2143 = vshrl.u32 %v2142, 7
    %v2144 = vsub.s32 %v2141, %v2143
    %v2145 = vrot.slane %v2135, %v2144
    %v2147 = vunpack.c.l.s4 1966171168
    %v2148 = vunpack.c.0.s8 %v2147
    %v2149 = vlaneseq
    %v2150 = vshrl.u32 %v2149, 7
    %v2151 = vsub.s32 %v2148, %v2150
    %v2152 = vrot.slane %v2136, %v2151
    %v2154 = vunpack.c.l.s4 1966171168
    %v2155 = vunpack.c.0.s8 %v2154
    %v2156 = vlaneseq
    %v2157 = vshrl.u32 %v2156, 7
    %v2158 = vsub.s32 %v2155, %v2157
    %v2159 = vrot.slane %v2137, %v2158
    %v2161 = vunpack.c.l.s4 1966171168
    %v2162 = vunpack.c.0.s8 %v2161
    %v2163 = vlaneseq
    %v2164 = vshrl.u32 %v2163, 7
    %v2165 = vsub.s32 %v2162, %v2164
    %v2166 = vrot.slane %v2138, %v2165
    %v2167 = vcombine.low %v2145, %v2152
    %v2168 = vcombine.low %v2159, %v2166
    %v2170 = vunpack.c.l.s4 1966171168
    %v2171 = vunpack.c.0.s8 %v2170
    %v2172 = vlaneseq
    %v2173 = vshrl.u32 %v2172, 7
    %v2174 = vsub.s32 %v2171, %v2173
    %v2175 = vrot.slane %v2167, %v2174
    %v2177 = vunpack.c.l.s4 1966171168
    %v2178 = vunpack.c.0.s8 %v2177
    %v2179 = vlaneseq
    %v2180 = vshrl.u32 %v2179, 7
    %v2181 = vsub.s32 %v2178, %v2180
    %v2182 = vrot.slane %v2168, %v2181
    %v2183 = vcombine.low %v2175, %v2182
    %v2184 = vcombine.low %v891, %v895
    %v2185 = vcombine.low %v899, %v903
    %v2186 = vcombine.low %v907, %v911
    %v2187 = vcombine.low %v915, %v919
    %v2189 = vunpack.c.l.s4 1966171168
    %v2190 = vunpack.c.0.s8 %v2189
    %v2191 = vlaneseq
    %v2192 = vshrl.u32 %v2191, 7
    %v2193 = vsub.s32 %v2190, %v2192
    %v2194 = vrot.slane %v2184, %v2193
    %v2196 = vunpack.c.l.s4 1966171168
    %v2197 = vunpack.c.0.s8 %v2196
    %v2198 = vlaneseq
    %v2199 = vshrl.u32 %v2198, 7
    %v2200 = vsub.s32 %v2197, %v2199
    %v2201 = vrot.slane %v2185, %v2200
    %v2203 = vunpack.c.l.s4 1966171168
    %v2204 = vunpack.c.0.s8 %v2203
    %v2205 = vlaneseq
    %v2206 = vshrl.u32 %v2205, 7
    %v2207 = vsub.s32 %v2204, %v2206
    %v2208 = vrot.slane %v2186, %v2207
    %v2210 = vunpack.c.l.s4 1966171168
    %v2211 = vunpack.c.0.s8 %v2210
    %v2212 = vlaneseq
    %v2213 = vshrl.u32 %v2212, 7
    %v2214 = vsub.s32 %v2211, %v2213
    %v2215 = vrot.slane %v2187, %v2214
    %v2216 = vcombine.low %v2194, %v2201
    %v2217 = vcombine.low %v2208, %v2215
    %v2219 = vunpack.c.l.s4 1966171168
    %v2220 = vunpack.c.0.s8 %v2219
    %v2221 = vlaneseq
    %v2222 = vshrl.u32 %v2221, 7
    %v2223 = vsub.s32 %v2220, %v2222
    %v2224 = vrot.slane %v2216, %v2223
    %v2226 = vunpack.c.l.s4 1966171168
    %v2227 = vunpack.c.0.s8 %v2226
    %v2228 = vlaneseq
    %v2229 = vshrl.u32 %v2228, 7
    %v2230 = vsub.s32 %v2227, %v2229
    %v2231 = vrot.slane %v2217, %v2230
    %v2232 = vcombine.low %v2224, %v2231
    %v2233 = vcombine.low %v923, %v927
    %v2234 = vcombine.low %v931, %v935
    %v2235 = vcombine.low %v939, %v943
    %v2236 = vcombine.low %v947, %v951
    %v2238 = vunpack.c.l.s4 1966171168
    %v2239 = vunpack.c.0.s8 %v2238
    %v2240 = vlaneseq
    %v2241 = vshrl.u32 %v2240, 7
    %v2242 = vsub.s32 %v2239, %v2241
    %v2243 = vrot.slane %v2233, %v2242
    %v2245 = vunpack.c.l.s4 1966171168
    %v2246 = vunpack.c.0.s8 %v2245
    %v2247 = vlaneseq
    %v2248 = vshrl.u32 %v2247, 7
    %v2249 = vsub.s32 %v2246, %v2248
    %v2250 = vrot.slane %v2234, %v2249
    %v2252 = vunpack.c.l.s4 1966171168
    %v2253 = vunpack.c.0.s8 %v2252
    %v2254 = vlaneseq
    %v2255 = vshrl.u32 %v2254, 7
    %v2256 = vsub.s32 %v2253, %v2255
    %v2257 = vrot.slane %v2235, %v2256
    %v2259 = vunpack.c.l.s4 1966171168
    %v2260 = vunpack.c.0.s8 %v2259
    %v2261 = vlaneseq
    %v2262 = vshrl.u32 %v2261, 7
    %v2263 = vsub.s32 %v2260, %v2262
    %v2264 = vrot.slane %v2236, %v2263
    %v2265 = vcombine.low %v2243, %v2250
    %v2266 = vcombine.low %v2257, %v2264
    %v2268 = vunpack.c.l.s4 1966171168
    %v2269 = vunpack.c.0.s8 %v2268
    %v2270 = vlaneseq
    %v2271 = vshrl.u32 %v2270, 7
    %v2272 = vsub.s32 %v2269, %v2271
    %v2273 = vrot.slane %v2265, %v2272
    %v2275 = vunpack.c.l.s4 1966171168
    %v2276 = vunpack.c.0.s8 %v2275
    %v2277 = vlaneseq
    %v2278 = vshrl.u32 %v2277, 7
    %v2279 = vsub.s32 %v2276, %v2278
    %v2280 = vrot.slane %v2266, %v2279
    %v2281 = vcombine.low %v2273, %v2280
    %v2282 = vcombine.low %v955, %v959
    %v2283 = vcombine.low %v963, %v967
    %v2284 = vcombine.low %v971, %v975
    %v2285 = vcombine.low %v979, %v983
    %v2287 = vunpack.c.l.s4 1966171168
    %v2288 = vunpack.c.0.s8 %v2287
    %v2289 = vlaneseq
    %v2290 = vshrl.u32 %v2289, 7
    %v2291 = vsub.s32 %v2288, %v2290
    %v2292 = vrot.slane %v2282, %v2291
    %v2294 = vunpack.c.l.s4 1966171168
    %v2295 = vunpack.c.0.s8 %v2294
    %v2296 = vlaneseq
    %v2297 = vshrl.u32 %v2296, 7
    %v2298 = vsub.s32 %v2295, %v2297
    %v2299 = vrot.slane %v2283, %v2298
    %v2301 = vunpack.c.l.s4 1966171168
    %v2302 = vunpack.c.0.s8 %v2301
    %v2303 = vlaneseq
    %v2304 = vshrl.u32 %v2303, 7
    %v2305 = vsub.s32 %v2302, %v2304
    %v2306 = vrot.slane %v2284, %v2305
    %v2308 = vunpack.c.l.s4 1966171168
    %v2309 = vunpack.c.0.s8 %v2308
    %v2310 = vlaneseq
    %v2311 = vshrl.u32 %v2310, 7
    %v2312 = vsub.s32 %v2309, %v2311
    %v2313 = vrot.slane %v2285, %v2312
    %v2314 = vcombine.low %v2292, %v2299
    %v2315 = vcombine.low %v2306, %v2313
    %v2317 = vunpack.c.l.s4 1966171168
    %v2318 = vunpack.c.0.s8 %v2317
    %v2319 = vlaneseq
    %v2320 = vshrl.u32 %v2319, 7
    %v2321 = vsub.s32 %v2318, %v2320
    %v2322 = vrot.slane %v2314, %v2321
    %v2324 = vunpack.c.l.s4 1966171168
    %v2325 = vunpack.c.0.s8 %v2324
    %v2326 = vlaneseq
    %v2327 = vshrl.u32 %v2326, 7
    %v2328 = vsub.s32 %v2325, %v2327
    %v2329 = vrot.slane %v2315, %v2328
    %v2330 = vcombine.low %v2322, %v2329
    %v2331 = vcombine.low %v987, %v991
    %v2332 = vcombine.low %v995, %v999
    %v2333 = vcombine.low %v1003, %v1007
    %v2334 = vcombine.low %v1011, %v1015
    %v2336 = vunpack.c.l.s4 1966171168
    %v2337 = vunpack.c.0.s8 %v2336
    %v2338 = vlaneseq
    %v2339 = vshrl.u32 %v2338, 7
    %v2340 = vsub.s32 %v2337, %v2339
    %v2341 = vrot.slane %v2331, %v2340
    %v2343 = vunpack.c.l.s4 1966171168
    %v2344 = vunpack.c.0.s8 %v2343
    %v2345 = vlaneseq
    %v2346 = vshrl.u32 %v2345, 7
    %v2347 = vsub.s32 %v2344, %v2346
    %v2348 = vrot.slane %v2332, %v2347
    %v2350 = vunpack.c.l.s4 1966171168
    %v2351 = vunpack.c.0.s8 %v2350
    %v2352 = vlaneseq
    %v2353 = vshrl.u32 %v2352, 7
    %v2354 = vsub.s32 %v2351, %v2353
    %v2355 = vrot.slane %v2333, %v2354
    %v2357 = vunpack.c.l.s4 1966171168
    %v2358 = vunpack.c.0.s8 %v2357
    %v2359 = vlaneseq
    %v2360 = vshrl.u32 %v2359, 7
    %v2361 = vsub.s32 %v2358, %v2360
    %v2362 = vrot.slane %v2334, %v2361
    %v2363 = vcombine.low %v2341, %v2348
    %v2364 = vcombine.low %v2355, %v2362
    %v2366 = vunpack.c.l.s4 1966171168
    %v2367 = vunpack.c.0.s8 %v2366
    %v2368 = vlaneseq
    %v2369 = vshrl.u32 %v2368, 7
    %v2370 = vsub.s32 %v2367, %v2369
    %v2371 = vrot.slane %v2363, %v2370
    %v2373 = vunpack.c.l.s4 1966171168
    %v2374 = vunpack.c.0.s8 %v2373
    %v2375 = vlaneseq
    %v2376 = vshrl.u32 %v2375, 7
    %v2377 = vsub.s32 %v2374, %v2376
    %v2378 = vrot.slane %v2364, %v2377
    %v2379 = vcombine.low %v2371, %v2378
    %v2380 = vcombine.low %v1019, %v1023
    %v2381 = vcombine.low %v1027, %v1031
    %v2382 = vcombine.low %v1035, %v1039
    %v2383 = vcombine.low %v1043, %v1047
    %v2385 = vunpack.c.l.s4 1966171168
    %v2386 = vunpack.c.0.s8 %v2385
    %v2387 = vlaneseq
    %v2388 = vshrl.u32 %v2387, 7
    %v2389 = vsub.s32 %v2386, %v2388
    %v2390 = vrot.slane %v2380, %v2389
    %v2392 = vunpack.c.l.s4 1966171168
    %v2393 = vunpack.c.0.s8 %v2392
    %v2394 = vlaneseq
    %v2395 = vshrl.u32 %v2394, 7
    %v2396 = vsub.s32 %v2393, %v2395
    %v2397 = vrot.slane %v2381, %v2396
    %v2399 = vunpack.c.l.s4 1966171168
    %v2400 = vunpack.c.0.s8 %v2399
    %v2401 = vlaneseq
    %v2402 = vshrl.u32 %v2401, 7
    %v2403 = vsub.s32 %v2400, %v2402
    %v2404 = vrot.slane %v2382, %v2403
    %v2406 = vunpack.c.l.s4 1966171168
    %v2407 = vunpack.c.0.s8 %v2406
    %v2408 = vlaneseq
    %v2409 = vshrl.u32 %v2408, 7
    %v2410 = vsub.s32 %v2407, %v2409
    %v2411 = vrot.slane %v2383, %v2410
    %v2412 = vcombine.low %v2390, %v2397
    %v2413 = vcombine.low %v2404, %v2411
    %v2415 = vunpack.c.l.s4 1966171168
    %v2416 = vunpack.c.0.s8 %v2415
    %v2417 = vlaneseq
    %v2418 = vshrl.u32 %v2417, 7
    %v2419 = vsub.s32 %v2416, %v2418
    %v2420 = vrot.slane %v2412, %v2419
    %v2422 = vunpack.c.l.s4 1966171168
    %v2423 = vunpack.c.0.s8 %v2422
    %v2424 = vlaneseq
    %v2425 = vshrl.u32 %v2424, 7
    %v2426 = vsub.s32 %v2423, %v2425
    %v2427 = vrot.slane %v2413, %v2426
    %v2428 = vcombine.low %v2420, %v2427
    %v2429 = vcombine.low %v1051, %v1055
    %v2430 = vcombine.low %v1059, %v1063
    %v2431 = vcombine.low %v1067, %v1071
    %v2432 = vcombine.low %v1075, %v1079
    %v2434 = vunpack.c.l.s4 1966171168
    %v2435 = vunpack.c.0.s8 %v2434
    %v2436 = vlaneseq
    %v2437 = vshrl.u32 %v2436, 7
    %v2438 = vsub.s32 %v2435, %v2437
    %v2439 = vrot.slane %v2429, %v2438
    %v2441 = vunpack.c.l.s4 1966171168
    %v2442 = vunpack.c.0.s8 %v2441
    %v2443 = vlaneseq
    %v2444 = vshrl.u32 %v2443, 7
    %v2445 = vsub.s32 %v2442, %v2444
    %v2446 = vrot.slane %v2430, %v2445
    %v2448 = vunpack.c.l.s4 1966171168
    %v2449 = vunpack.c.0.s8 %v2448
    %v2450 = vlaneseq
    %v2451 = vshrl.u32 %v2450, 7
    %v2452 = vsub.s32 %v2449, %v2451
    %v2453 = vrot.slane %v2431, %v2452
    %v2455 = vunpack.c.l.s4 1966171168
    %v2456 = vunpack.c.0.s8 %v2455
    %v2457 = vlaneseq
    %v2458 = vshrl.u32 %v2457, 7
    %v2459 = vsub.s32 %v2456, %v2458
    %v2460 = vrot.slane %v2432, %v2459
    %v2461 = vcombine.low %v2439, %v2446
    %v2462 = vcombine.low %v2453, %v2460
    %v2464 = vunpack.c.l.s4 1966171168
    %v2465 = vunpack.c.0.s8 %v2464
    %v2466 = vlaneseq
    %v2467 = vshrl.u32 %v2466, 7
    %v2468 = vsub.s32 %v2465, %v2467
    %v2469 = vrot.slane %v2461, %v2468
    %v2471 = vunpack.c.l.s4 1966171168
    %v2472 = vunpack.c.0.s8 %v2471
    %v2473 = vlaneseq
    %v2474 = vshrl.u32 %v2473, 7
    %v2475 = vsub.s32 %v2472, %v2474
    %v2476 = vrot.slane %v2462, %v2475
    %v2477 = vcombine.low %v2469, %v2476
    %v2478 = vcombine.low %v1083, %v1087
    %v2479 = vcombine.low %v1091, %v1095
    %v2480 = vcombine.low %v1099, %v1103
    %v2481 = vcombine.low %v1107, %v1111
    %v2483 = vunpack.c.l.s4 1966171168
    %v2484 = vunpack.c.0.s8 %v2483
    %v2485 = vlaneseq
    %v2486 = vshrl.u32 %v2485, 7
    %v2487 = vsub.s32 %v2484, %v2486
    %v2488 = vrot.slane %v2478, %v2487
    %v2490 = vunpack.c.l.s4 1966171168
    %v2491 = vunpack.c.0.s8 %v2490
    %v2492 = vlaneseq
    %v2493 = vshrl.u32 %v2492, 7
    %v2494 = vsub.s32 %v2491, %v2493
    %v2495 = vrot.slane %v2479, %v2494
    %v2497 = vunpack.c.l.s4 1966171168
    %v2498 = vunpack.c.0.s8 %v2497
    %v2499 = vlaneseq
    %v2500 = vshrl.u32 %v2499, 7
    %v2501 = vsub.s32 %v2498, %v2500
    %v2502 = vrot.slane %v2480, %v2501
    %v2504 = vunpack.c.l.s4 1966171168
    %v2505 = vunpack.c.0.s8 %v2504
    %v2506 = vlaneseq
    %v2507 = vshrl.u32 %v2506, 7
    %v2508 = vsub.s32 %v2505, %v2507
    %v2509 = vrot.slane %v2481, %v2508
    %v2510 = vcombine.low %v2488, %v2495
    %v2511 = vcombine.low %v2502, %v2509
    %v2513 = vunpack.c.l.s4 1966171168
    %v2514 = vunpack.c.0.s8 %v2513
    %v2515 = vlaneseq
    %v2516 = vshrl.u32 %v2515, 7
    %v2517 = vsub.s32 %v2514, %v2516
    %v2518 = vrot.slane %v2510, %v2517
    %v2520 = vunpack.c.l.s4 1966171168
    %v2521 = vunpack.c.0.s8 %v2520
    %v2522 = vlaneseq
    %v2523 = vshrl.u32 %v2522, 7
    %v2524 = vsub.s32 %v2521, %v2523
    %v2525 = vrot.slane %v2511, %v2524
    %v2526 = vcombine.low %v2518, %v2525
    %v2527 = vcombine.low %v1115, %v1119
    %v2528 = vcombine.low %v1123, %v1127
    %v2529 = vcombine.low %v1131, %v1135
    %v2530 = vcombine.low %v1139, %v1143
    %v2532 = vunpack.c.l.s4 1966171168
    %v2533 = vunpack.c.0.s8 %v2532
    %v2534 = vlaneseq
    %v2535 = vshrl.u32 %v2534, 7
    %v2536 = vsub.s32 %v2533, %v2535
    %v2537 = vrot.slane %v2527, %v2536
    %v2539 = vunpack.c.l.s4 1966171168
    %v2540 = vunpack.c.0.s8 %v2539
    %v2541 = vlaneseq
    %v2542 = vshrl.u32 %v2541, 7
    %v2543 = vsub.s32 %v2540, %v2542
    %v2544 = vrot.slane %v2528, %v2543
    %v2546 = vunpack.c.l.s4 1966171168
    %v2547 = vunpack.c.0.s8 %v2546
    %v2548 = vlaneseq
    %v2549 = vshrl.u32 %v2548, 7
    %v2550 = vsub.s32 %v2547, %v2549
    %v2551 = vrot.slane %v2529, %v2550
    %v2553 = vunpack.c.l.s4 1966171168
    %v2554 = vunpack.c.0.s8 %v2553
    %v2555 = vlaneseq
    %v2556 = vshrl.u32 %v2555, 7
    %v2557 = vsub.s32 %v2554, %v2556
    %v2558 = vrot.slane %v2530, %v2557
    %v2559 = vcombine.low %v2537, %v2544
    %v2560 = vcombine.low %v2551, %v2558
    %v2562 = vunpack.c.l.s4 1966171168
    %v2563 = vunpack.c.0.s8 %v2562
    %v2564 = vlaneseq
    %v2565 = vshrl.u32 %v2564, 7
    %v2566 = vsub.s32 %v2563, %v2565
    %v2567 = vrot.slane %v2559, %v2566
    %v2569 = vunpack.c.l.s4 1966171168
    %v2570 = vunpack.c.0.s8 %v2569
    %v2571 = vlaneseq
    %v2572 = vshrl.u32 %v2571, 7
    %v2573 = vsub.s32 %v2570, %v2572
    %v2574 = vrot.slane %v2560, %v2573
    %v2575 = vcombine.low %v2567, %v2574
    %v2576 = vcombine.low %v1147, %v1151
    %v2577 = vcombine.low %v1155, %v1159
    %v2578 = vcombine.low %v1163, %v1167
    %v2579 = vcombine.low %v1171, %v1175
    %v2581 = vunpack.c.l.s4 1966171168
    %v2582 = vunpack.c.0.s8 %v2581
    %v2583 = vlaneseq
    %v2584 = vshrl.u32 %v2583, 7
    %v2585 = vsub.s32 %v2582, %v2584
    %v2586 = vrot.slane %v2576, %v2585
    %v2588 = vunpack.c.l.s4 1966171168
    %v2589 = vunpack.c.0.s8 %v2588
    %v2590 = vlaneseq
    %v2591 = vshrl.u32 %v2590, 7
    %v2592 = vsub.s32 %v2589, %v2591
    %v2593 = vrot.slane %v2577, %v2592
    %v2595 = vunpack.c.l.s4 1966171168
    %v2596 = vunpack.c.0.s8 %v2595
    %v2597 = vlaneseq
    %v2598 = vshrl.u32 %v2597, 7
    %v2599 = vsub.s32 %v2596, %v2598
    %v2600 = vrot.slane %v2578, %v2599
    %v2602 = vunpack.c.l.s4 1966171168
    %v2603 = vunpack.c.0.s8 %v2602
    %v2604 = vlaneseq
    %v2605 = vshrl.u32 %v2604, 7
    %v2606 = vsub.s32 %v2603, %v2605
    %v2607 = vrot.slane %v2579, %v2606
    %v2608 = vcombine.low %v2586, %v2593
    %v2609 = vcombine.low %v2600, %v2607
    %v2611 = vunpack.c.l.s4 1966171168
    %v2612 = vunpack.c.0.s8 %v2611
    %v2613 = vlaneseq
    %v2614 = vshrl.u32 %v2613, 7
    %v2615 = vsub.s32 %v2612, %v2614
    %v2616 = vrot.slane %v2608, %v2615
    %v2618 = vunpack.c.l.s4 1966171168
    %v2619 = vunpack.c.0.s8 %v2618
    %v2620 = vlaneseq
    %v2621 = vshrl.u32 %v2620, 7
    %v2622 = vsub.s32 %v2619, %v2621
    %v2623 = vrot.slane %v2609, %v2622
    %v2624 = vcombine.low %v2616, %v2623
    %v2625 = vcombine.low %v1179, %v1183
    %v2626 = vcombine.low %v1187, %v1191
    %v2627 = vcombine.low %v1195, %v1199
    %v2628 = vcombine.low %v1203, %v1207
    %v2630 = vunpack.c.l.s4 1966171168
    %v2631 = vunpack.c.0.s8 %v2630
    %v2632 = vlaneseq
    %v2633 = vshrl.u32 %v2632, 7
    %v2634 = vsub.s32 %v2631, %v2633
    %v2635 = vrot.slane %v2625, %v2634
    %v2637 = vunpack.c.l.s4 1966171168
    %v2638 = vunpack.c.0.s8 %v2637
    %v2639 = vlaneseq
    %v2640 = vshrl.u32 %v2639, 7
    %v2641 = vsub.s32 %v2638, %v2640
    %v2642 = vrot.slane %v2626, %v2641
    %v2644 = vunpack.c.l.s4 1966171168
    %v2645 = vunpack.c.0.s8 %v2644
    %v2646 = vlaneseq
    %v2647 = vshrl.u32 %v2646, 7
    %v2648 = vsub.s32 %v2645, %v2647
    %v2649 = vrot.slane %v2627, %v2648
    %v2651 = vunpack.c.l.s4 1966171168
    %v2652 = vunpack.c.0.s8 %v2651
    %v2653 = vlaneseq
    %v2654 = vshrl.u32 %v2653, 7
    %v2655 = vsub.s32 %v2652, %v2654
    %v2656 = vrot.slane %v2628, %v2655
    %v2657 = vcombine.low %v2635, %v2642
    %v2658 = vcombine.low %v2649, %v2656
    %v2660 = vunpack.c.l.s4 1966171168
    %v2661 = vunpack.c.0.s8 %v2660
    %v2662 = vlaneseq
    %v2663 = vshrl.u32 %v2662, 7
    %v2664 = vsub.s32 %v2661, %v2663
    %v2665 = vrot.slane %v2657, %v2664
    %v2667 = vunpack.c.l.s4 1966171168
    %v2668 = vunpack.c.0.s8 %v2667
    %v2669 = vlaneseq
    %v2670 = vshrl.u32 %v2669, 7
    %v2671 = vsub.s32 %v2668, %v2670
    %v2672 = vrot.slane %v2658, %v2671
    %v2673 = vcombine.low %v2665, %v2672
    %v2674 = vcombine.low %v1211, %v1215
    %v2675 = vcombine.low %v1219, %v1223
    %v2676 = vcombine.low %v1227, %v1231
    %v2677 = vcombine.low %v1235, %v1239
    %v2679 = vunpack.c.l.s4 1966171168
    %v2680 = vunpack.c.0.s8 %v2679
    %v2681 = vlaneseq
    %v2682 = vshrl.u32 %v2681, 7
    %v2683 = vsub.s32 %v2680, %v2682
    %v2684 = vrot.slane %v2674, %v2683
    %v2686 = vunpack.c.l.s4 1966171168
    %v2687 = vunpack.c.0.s8 %v2686
    %v2688 = vlaneseq
    %v2689 = vshrl.u32 %v2688, 7
    %v2690 = vsub.s32 %v2687, %v2689
    %v2691 = vrot.slane %v2675, %v2690
    %v2693 = vunpack.c.l.s4 1966171168
    %v2694 = vunpack.c.0.s8 %v2693
    %v2695 = vlaneseq
    %v2696 = vshrl.u32 %v2695, 7
    %v2697 = vsub.s32 %v2694, %v2696
    %v2698 = vrot.slane %v2676, %v2697
    %v2700 = vunpack.c.l.s4 1966171168
    %v2701 = vunpack.c.0.s8 %v2700
    %v2702 = vlaneseq
    %v2703 = vshrl.u32 %v2702, 7
    %v2704 = vsub.s32 %v2701, %v2703
    %v2705 = vrot.slane %v2677, %v2704
    %v2706 = vcombine.low %v2684, %v2691
    %v2707 = vcombine.low %v2698, %v2705
    %v2709 = vunpack.c.l.s4 1966171168
    %v2710 = vunpack.c.0.s8 %v2709
    %v2711 = vlaneseq
    %v2712 = vshrl.u32 %v2711, 7
    %v2713 = vsub.s32 %v2710, %v2712
    %v2714 = vrot.slane %v2706, %v2713
    %v2716 = vunpack.c.l.s4 1966171168
    %v2717 = vunpack.c.0.s8 %v2716
    %v2718 = vlaneseq
    %v2719 = vshrl.u32 %v2718, 7
    %v2720 = vsub.s32 %v2717, %v2719
    %v2721 = vrot.slane %v2707, %v2720
    %v2722 = vcombine.low %v2714, %v2721
    %v2723 = vcombine.low %v1243, %v1247
    %v2724 = vcombine.low %v1251, %v1255
    %v2725 = vcombine.low %v1259, %v1263
    %v2726 = vcombine.low %v1267, %v1271
    %v2728 = vunpack.c.l.s4 1966171168
    %v2729 = vunpack.c.0.s8 %v2728
    %v2730 = vlaneseq
    %v2731 = vshrl.u32 %v2730, 7
    %v2732 = vsub.s32 %v2729, %v2731
    %v2733 = vrot.slane %v2723, %v2732
    %v2735 = vunpack.c.l.s4 1966171168
    %v2736 = vunpack.c.0.s8 %v2735
    %v2737 = vlaneseq
    %v2738 = vshrl.u32 %v2737, 7
    %v2739 = vsub.s32 %v2736, %v2738
    %v2740 = vrot.slane %v2724, %v2739
    %v2742 = vunpack.c.l.s4 1966171168
    %v2743 = vunpack.c.0.s8 %v2742
    %v2744 = vlaneseq
    %v2745 = vshrl.u32 %v2744, 7
    %v2746 = vsub.s32 %v2743, %v2745
    %v2747 = vrot.slane %v2725, %v2746
    %v2749 = vunpack.c.l.s4 1966171168
    %v2750 = vunpack.c.0.s8 %v2749
    %v2751 = vlaneseq
    %v2752 = vshrl.u32 %v2751, 7
    %v2753 = vsub.s32 %v2750, %v2752
    %v2754 = vrot.slane %v2726, %v2753
    %v2755 = vcombine.low %v2733, %v2740
    %v2756 = vcombine.low %v2747, %v2754
    %v2758 = vunpack.c.l.s4 1966171168
    %v2759 = vunpack.c.0.s8 %v2758
    %v2760 = vlaneseq
    %v2761 = vshrl.u32 %v2760, 7
    %v2762 = vsub.s32 %v2759, %v2761
    %v2763 = vrot.slane %v2755, %v2762
    %v2765 = vunpack.c.l.s4 1966171168
    %v2766 = vunpack.c.0.s8 %v2765
    %v2767 = vlaneseq
    %v2768 = vshrl.u32 %v2767, 7
    %v2769 = vsub.s32 %v2766, %v2768
    %v2770 = vrot.slane %v2756, %v2769
    %v2771 = vcombine.low %v2763, %v2770
    %v2772 = vcombine.low %v1275, %v1279
    %v2773 = vcombine.low %v1283, %v1287
    %v2774 = vcombine.low %v1291, %v1295
    %v2775 = vcombine.low %v1299, %v1303
    %v2777 = vunpack.c.l.s4 1966171168
    %v2778 = vunpack.c.0.s8 %v2777
    %v2779 = vlaneseq
    %v2780 = vshrl.u32 %v2779, 7
    %v2781 = vsub.s32 %v2778, %v2780
    %v2782 = vrot.slane %v2772, %v2781
    %v2784 = vunpack.c.l.s4 1966171168
    %v2785 = vunpack.c.0.s8 %v2784
    %v2786 = vlaneseq
    %v2787 = vshrl.u32 %v2786, 7
    %v2788 = vsub.s32 %v2785, %v2787
    %v2789 = vrot.slane %v2773, %v2788
    %v2791 = vunpack.c.l.s4 1966171168
    %v2792 = vunpack.c.0.s8 %v2791
    %v2793 = vlaneseq
    %v2794 = vshrl.u32 %v2793, 7
    %v2795 = vsub.s32 %v2792, %v2794
    %v2796 = vrot.slane %v2774, %v2795
    %v2798 = vunpack.c.l.s4 1966171168
    %v2799 = vunpack.c.0.s8 %v2798
    %v2800 = vlaneseq
    %v2801 = vshrl.u32 %v2800, 7
    %v2802 = vsub.s32 %v2799, %v2801
    %v2803 = vrot.slane %v2775, %v2802
    %v2804 = vcombine.low %v2782, %v2789
    %v2805 = vcombine.low %v2796, %v2803
    %v2807 = vunpack.c.l.s4 1966171168
    %v2808 = vunpack.c.0.s8 %v2807
    %v2809 = vlaneseq
    %v2810 = vshrl.u32 %v2809, 7
    %v2811 = vsub.s32 %v2808, %v2810
    %v2812 = vrot.slane %v2804, %v2811
    %v2814 = vunpack.c.l.s4 1966171168
    %v2815 = vunpack.c.0.s8 %v2814
    %v2816 = vlaneseq
    %v2817 = vshrl.u32 %v2816, 7
    %v2818 = vsub.s32 %v2815, %v2817
    %v2819 = vrot.slane %v2805, %v2818
    %v2820 = vcombine.low %v2812, %v2819
    %v2821 = vcombine.low %v1307, %v1311
    %v2822 = vcombine.low %v1315, %v1319
    %v2823 = vcombine.low %v1323, %v1327
    %v2824 = vcombine.low %v1331, %v1335
    %v2826 = vunpack.c.l.s4 1966171168
    %v2827 = vunpack.c.0.s8 %v2826
    %v2828 = vlaneseq
    %v2829 = vshrl.u32 %v2828, 7
    %v2830 = vsub.s32 %v2827, %v2829
    %v2831 = vrot.slane %v2821, %v2830
    %v2833 = vunpack.c.l.s4 1966171168
    %v2834 = vunpack.c.0.s8 %v2833
    %v2835 = vlaneseq
    %v2836 = vshrl.u32 %v2835, 7
    %v2837 = vsub.s32 %v2834, %v2836
    %v2838 = vrot.slane %v2822, %v2837
    %v2840 = vunpack.c.l.s4 1966171168
    %v2841 = vunpack.c.0.s8 %v2840
    %v2842 = vlaneseq
    %v2843 = vshrl.u32 %v2842, 7
    %v2844 = vsub.s32 %v2841, %v2843
    %v2845 = vrot.slane %v2823, %v2844
    %v2847 = vunpack.c.l.s4 1966171168
    %v2848 = vunpack.c.0.s8 %v2847
    %v2849 = vlaneseq
    %v2850 = vshrl.u32 %v2849, 7
    %v2851 = vsub.s32 %v2848, %v2850
    %v2852 = vrot.slane %v2824, %v2851
    %v2853 = vcombine.low %v2831, %v2838
    %v2854 = vcombine.low %v2845, %v2852
    %v2856 = vunpack.c.l.s4 1966171168
    %v2857 = vunpack.c.0.s8 %v2856
    %v2858 = vlaneseq
    %v2859 = vshrl.u32 %v2858, 7
    %v2860 = vsub.s32 %v2857, %v2859
    %v2861 = vrot.slane %v2853, %v2860
    %v2863 = vunpack.c.l.s4 1966171168
    %v2864 = vunpack.c.0.s8 %v2863
    %v2865 = vlaneseq
    %v2866 = vshrl.u32 %v2865, 7
    %v2867 = vsub.s32 %v2864, %v2866
    %v2868 = vrot.slane %v2854, %v2867
    %v2869 = vcombine.low %v2861, %v2868
    %v2870 = vcombine.low %v1339, %v1343
    %v2871 = vcombine.low %v1347, %v1351
    %v2872 = vcombine.low %v1355, %v1359
    %v2873 = vcombine.low %v1363, %v1367
    %v2875 = vunpack.c.l.s4 1966171168
    %v2876 = vunpack.c.0.s8 %v2875
    %v2877 = vlaneseq
    %v2878 = vshrl.u32 %v2877, 7
    %v2879 = vsub.s32 %v2876, %v2878
    %v2880 = vrot.slane %v2870, %v2879
    %v2882 = vunpack.c.l.s4 1966171168
    %v2883 = vunpack.c.0.s8 %v2882
    %v2884 = vlaneseq
    %v2885 = vshrl.u32 %v2884, 7
    %v2886 = vsub.s32 %v2883, %v2885
    %v2887 = vrot.slane %v2871, %v2886
    %v2889 = vunpack.c.l.s4 1966171168
    %v2890 = vunpack.c.0.s8 %v2889
    %v2891 = vlaneseq
    %v2892 = vshrl.u32 %v2891, 7
    %v2893 = vsub.s32 %v2890, %v2892
    %v2894 = vrot.slane %v2872, %v2893
    %v2896 = vunpack.c.l.s4 1966171168
    %v2897 = vunpack.c.0.s8 %v2896
    %v2898 = vlaneseq
    %v2899 = vshrl.u32 %v2898, 7
    %v2900 = vsub.s32 %v2897, %v2899
    %v2901 = vrot.slane %v2873, %v2900
    %v2902 = vcombine.low %v2880, %v2887
    %v2903 = vcombine.low %v2894, %v2901
    %v2905 = vunpack.c.l.s4 1966171168
    %v2906 = vunpack.c.0.s8 %v2905
    %v2907 = vlaneseq
    %v2908 = vshrl.u32 %v2907, 7
    %v2909 = vsub.s32 %v2906, %v2908
    %v2910 = vrot.slane %v2902, %v2909
    %v2912 = vunpack.c.l.s4 1966171168
    %v2913 = vunpack.c.0.s8 %v2912
    %v2914 = vlaneseq
    %v2915 = vshrl.u32 %v2914, 7
    %v2916 = vsub.s32 %v2913, %v2915
    %v2917 = vrot.slane %v2903, %v2916
    %v2918 = vcombine.low %v2910, %v2917
    %v2919 = vcombine.low %v1371, %v1375
    %v2920 = vcombine.low %v1379, %v1383
    %v2921 = vcombine.low %v1387, %v1391
    %v2922 = vcombine.low %v1395, %v1399
    %v2924 = vunpack.c.l.s4 1966171168
    %v2925 = vunpack.c.0.s8 %v2924
    %v2926 = vlaneseq
    %v2927 = vshrl.u32 %v2926, 7
    %v2928 = vsub.s32 %v2925, %v2927
    %v2929 = vrot.slane %v2919, %v2928
    %v2931 = vunpack.c.l.s4 1966171168
    %v2932 = vunpack.c.0.s8 %v2931
    %v2933 = vlaneseq
    %v2934 = vshrl.u32 %v2933, 7
    %v2935 = vsub.s32 %v2932, %v2934
    %v2936 = vrot.slane %v2920, %v2935
    %v2938 = vunpack.c.l.s4 1966171168
    %v2939 = vunpack.c.0.s8 %v2938
    %v2940 = vlaneseq
    %v2941 = vshrl.u32 %v2940, 7
    %v2942 = vsub.s32 %v2939, %v2941
    %v2943 = vrot.slane %v2921, %v2942
    %v2945 = vunpack.c.l.s4 1966171168
    %v2946 = vunpack.c.0.s8 %v2945
    %v2947 = vlaneseq
    %v2948 = vshrl.u32 %v2947, 7
    %v2949 = vsub.s32 %v2946, %v2948
    %v2950 = vrot.slane %v2922, %v2949
    %v2951 = vcombine.low %v2929, %v2936
    %v2952 = vcombine.low %v2943, %v2950
    %v2954 = vunpack.c.l.s4 1966171168
    %v2955 = vunpack.c.0.s8 %v2954
    %v2956 = vlaneseq
    %v2957 = vshrl.u32 %v2956, 7
    %v2958 = vsub.s32 %v2955, %v2957
    %v2959 = vrot.slane %v2951, %v2958
    %v2961 = vunpack.c.l.s4 1966171168
    %v2962 = vunpack.c.0.s8 %v2961
    %v2963 = vlaneseq
    %v2964 = vshrl.u32 %v2963, 7
    %v2965 = vsub.s32 %v2962, %v2964
    %v2966 = vrot.slane %v2952, %v2965
    %v2967 = vcombine.low %v2959, %v2966
    %2968 = vset.pattern.permute.xlu0 0
    %2969 = vperm.xlu0 %2968, %v1448
    %v2970 = vpop.permute.xlu0 %2969
    %2971 = vset.pattern.permute.xlu0 0
    %2972 = vperm.xlu0 %2971, %v1497
    %v2973 = vpop.permute.xlu0 %2972
    %2974 = vset.pattern.permute.xlu0 0
    %2975 = vperm.xlu0 %2974, %v1546
    %v2976 = vpop.permute.xlu0 %2975
    %2977 = vset.pattern.permute.xlu0 0
    %2978 = vperm.xlu0 %2977, %v1595
    %v2979 = vpop.permute.xlu0 %2978
    %2980 = vset.pattern.permute.xlu0 0
    %2981 = vperm.xlu0 %2980, %v1644
    %v2982 = vpop.permute.xlu0 %2981
    %2983 = vset.pattern.permute.xlu0 0
    %2984 = vperm.xlu0 %2983, %v1693
    %v2985 = vpop.permute.xlu0 %2984
    %2986 = vset.pattern.permute.xlu0 0
    %2987 = vperm.xlu0 %2986, %v1742
    %v2988 = vpop.permute.xlu0 %2987
    %2989 = vset.pattern.permute.xlu0 0
    %2990 = vperm.xlu0 %2989, %v1791
    %v2991 = vpop.permute.xlu0 %2990
    %2992 = vset.pattern.permute.xlu0 0
    %2993 = vperm.xlu0 %2992, %v1840
    %v2994 = vpop.permute.xlu0 %2993
    %2995 = vset.pattern.permute.xlu0 0
    %2996 = vperm.xlu0 %2995, %v1889
    %v2997 = vpop.permute.xlu0 %2996
    %2998 = vset.pattern.permute.xlu0 0
    %2999 = vperm.xlu0 %2998, %v1938
    %v3000 = vpop.permute.xlu0 %2999
    %3001 = vset.pattern.permute.xlu0 0
    %3002 = vperm.xlu0 %3001, %v1987
    %v3003 = vpop.permute.xlu0 %3002
    %3004 = vset.pattern.permute.xlu0 0
    %3005 = vperm.xlu0 %3004, %v2036
    %v3006 = vpop.permute.xlu0 %3005
    %3007 = vset.pattern.permute.xlu0 0
    %3008 = vperm.xlu0 %3007, %v2085
    %v3009 = vpop.permute.xlu0 %3008
    %3010 = vset.pattern.permute.xlu0 0
    %3011 = vperm.xlu0 %3010, %v2134
    %v3012 = vpop.permute.xlu0 %3011
    %3013 = vset.pattern.permute.xlu0 0
    %3014 = vperm.xlu0 %3013, %v2183
    %v3015 = vpop.permute.xlu0 %3014
    %3016 = vset.pattern.permute.xlu0 0
    %3017 = vperm.xlu0 %3016, %v2232
    %v3018 = vpop.permute.xlu0 %3017
    %3019 = vset.pattern.permute.xlu0 0
    %3020 = vperm.xlu0 %3019, %v2281
    %v3021 = vpop.permute.xlu0 %3020
    %3022 = vset.pattern.permute.xlu0 0
    %3023 = vperm.xlu0 %3022, %v2330
    %v3024 = vpop.permute.xlu0 %3023
    %3025 = vset.pattern.permute.xlu0 0
    %3026 = vperm.xlu0 %3025, %v2379
    %v3027 = vpop.permute.xlu0 %3026
    %3028 = vset.pattern.permute.xlu0 0
    %3029 = vperm.xlu0 %3028, %v2428
    %v3030 = vpop.permute.xlu0 %3029
    %3031 = vset.pattern.permute.xlu0 0
    %3032 = vperm.xlu0 %3031, %v2477
    %v3033 = vpop.permute.xlu0 %3032
    %3034 = vset.pattern.permute.xlu0 0
    %3035 = vperm.xlu0 %3034, %v2526
    %v3036 = vpop.permute.xlu0 %3035
    %3037 = vset.pattern.permute.xlu0 0
    %3038 = vperm.xlu0 %3037, %v2575
    %v3039 = vpop.permute.xlu0 %3038
    %3040 = vset.pattern.permute.xlu0 0
    %3041 = vperm.xlu0 %3040, %v2624
    %v3042 = vpop.permute.xlu0 %3041
    %3043 = vset.pattern.permute.xlu0 0
    %3044 = vperm.xlu0 %3043, %v2673
    %v3045 = vpop.permute.xlu0 %3044
    %3046 = vset.pattern.permute.xlu0 0
    %3047 = vperm.xlu0 %3046, %v2722
    %v3048 = vpop.permute.xlu0 %3047
    %3049 = vset.pattern.permute.xlu0 0
    %3050 = vperm.xlu0 %3049, %v2771
    %v3051 = vpop.permute.xlu0 %3050
    %3052 = vset.pattern.permute.xlu0 0
    %3053 = vperm.xlu0 %3052, %v2820
    %v3054 = vpop.permute.xlu0 %3053
    %3055 = vset.pattern.permute.xlu0 0
    %3056 = vperm.xlu0 %3055, %v2869
    %v3057 = vpop.permute.xlu0 %3056
    %3058 = vset.pattern.permute.xlu0 0
    %3059 = vperm.xlu0 %3058, %v2918
    %v3060 = vpop.permute.xlu0 %3059
    %3061 = vset.pattern.permute.xlu0 0
    %3062 = vperm.xlu0 %3061, %v2967
    %v3063 = vpop.permute.xlu0 %3062
    %v3064 = vlaneseq
    %v3065 = vand.u32 %v3064, 127
    %v3066 = vlaneseq
    %v3067 = vshrl.u32 %v3066, 7
    %v3068 = vsub.s32 %v3065, %v3067
    %v3069 = vrot.slane %v2970, %v3068
    %v3070 = vadd.s32 %v3065, 4294967288
    %v3071 = vlaneseq
    %v3072 = vshrl.u32 %v3071, 7
    %v3073 = vsub.s32 %v3070, %v3072
    %v3074 = vrot.slane %v2973, %v3073
    %vm3075 = vcmask 130112
    %v3076 = vsel %vm3075, %v3074, %v3069
    %v3077 = vlaneseq
    %v3078 = vshrl.u32 %v3077, 7
    %v3079 = vsub.s32 %v3065, %v3078
    %v3080 = vrot.slane %v2976, %v3079
    %v3081 = vlaneseq
    %v3082 = vshrl.u32 %v3081, 7
    %v3083 = vsub.s32 %v3070, %v3082
    %v3084 = vrot.slane %v2979, %v3083
    %v3085 = vsel %vm3075, %v3084, %v3080
    %v3086 = vlaneseq
    %v3087 = vshrl.u32 %v3086, 7
    %v3088 = vsub.s32 %v3065, %v3087
    %v3089 = vrot.slane %v2982, %v3088
    %v3090 = vlaneseq
    %v3091 = vshrl.u32 %v3090, 7
    %v3092 = vsub.s32 %v3070, %v3091
    %v3093 = vrot.slane %v2985, %v3092
    %v3094 = vsel %vm3075, %v3093, %v3089
    %v3095 = vlaneseq
    %v3096 = vshrl.u32 %v3095, 7
    %v3097 = vsub.s32 %v3065, %v3096
    %v3098 = vrot.slane %v2988, %v3097
    %v3099 = vlaneseq
    %v3100 = vshrl.u32 %v3099, 7
    %v3101 = vsub.s32 %v3070, %v3100
    %v3102 = vrot.slane %v2991, %v3101
    %v3103 = vsel %vm3075, %v3102, %v3098
    %v3104 = vlaneseq
    %v3105 = vshrl.u32 %v3104, 7
    %v3106 = vsub.s32 %v3065, %v3105
    %v3107 = vrot.slane %v2994, %v3106
    %v3108 = vlaneseq
    %v3109 = vshrl.u32 %v3108, 7
    %v3110 = vsub.s32 %v3070, %v3109
    %v3111 = vrot.slane %v2997, %v3110
    %v3112 = vsel %vm3075, %v3111, %v3107
    %v3113 = vlaneseq
    %v3114 = vshrl.u32 %v3113, 7
    %v3115 = vsub.s32 %v3065, %v3114
    %v3116 = vrot.slane %v3000, %v3115
    %v3117 = vlaneseq
    %v3118 = vshrl.u32 %v3117, 7
    %v3119 = vsub.s32 %v3070, %v3118
    %v3120 = vrot.slane %v3003, %v3119
    %v3121 = vsel %vm3075, %v3120, %v3116
    %v3122 = vlaneseq
    %v3123 = vshrl.u32 %v3122, 7
    %v3124 = vsub.s32 %v3065, %v3123
    %v3125 = vrot.slane %v3006, %v3124
    %v3126 = vlaneseq
    %v3127 = vshrl.u32 %v3126, 7
    %v3128 = vsub.s32 %v3070, %v3127
    %v3129 = vrot.slane %v3009, %v3128
    %v3130 = vsel %vm3075, %v3129, %v3125
    %v3131 = vlaneseq
    %v3132 = vshrl.u32 %v3131, 7
    %v3133 = vsub.s32 %v3065, %v3132
    %v3134 = vrot.slane %v3012, %v3133
    %v3135 = vlaneseq
    %v3136 = vshrl.u32 %v3135, 7
    %v3137 = vsub.s32 %v3070, %v3136
    %v3138 = vrot.slane %v3015, %v3137
    %v3139 = vsel %vm3075, %v3138, %v3134
    %v3140 = vlaneseq
    %v3141 = vshrl.u32 %v3140, 7
    %v3142 = vsub.s32 %v3065, %v3141
    %v3143 = vrot.slane %v3018, %v3142
    %v3144 = vlaneseq
    %v3145 = vshrl.u32 %v3144, 7
    %v3146 = vsub.s32 %v3070, %v3145
    %v3147 = vrot.slane %v3021, %v3146
    %v3148 = vsel %vm3075, %v3147, %v3143
    %v3149 = vlaneseq
    %v3150 = vshrl.u32 %v3149, 7
    %v3151 = vsub.s32 %v3065, %v3150
    %v3152 = vrot.slane %v3024, %v3151
    %v3153 = vlaneseq
    %v3154 = vshrl.u32 %v3153, 7
    %v3155 = vsub.s32 %v3070, %v3154
    %v3156 = vrot.slane %v3027, %v3155
    %v3157 = vsel %vm3075, %v3156, %v3152
    %v3158 = vlaneseq
    %v3159 = vshrl.u32 %v3158, 7
    %v3160 = vsub.s32 %v3065, %v3159
    %v3161 = vrot.slane %v3030, %v3160
    %v3162 = vlaneseq
    %v3163 = vshrl.u32 %v3162, 7
    %v3164 = vsub.s32 %v3070, %v3163
    %v3165 = vrot.slane %v3033, %v3164
    %v3166 = vsel %vm3075, %v3165, %v3161
    %v3167 = vlaneseq
    %v3168 = vshrl.u32 %v3167, 7
    %v3169 = vsub.s32 %v3065, %v3168
    %v3170 = vrot.slane %v3036, %v3169
    %v3171 = vlaneseq
    %v3172 = vshrl.u32 %v3171, 7
    %v3173 = vsub.s32 %v3070, %v3172
    %v3174 = vrot.slane %v3039, %v3173
    %v3175 = vsel %vm3075, %v3174, %v3170
    %v3176 = vlaneseq
    %v3177 = vshrl.u32 %v3176, 7
    %v3178 = vsub.s32 %v3065, %v3177
    %v3179 = vrot.slane %v3042, %v3178
    %v3180 = vlaneseq
    %v3181 = vshrl.u32 %v3180, 7
    %v3182 = vsub.s32 %v3070, %v3181
    %v3183 = vrot.slane %v3045, %v3182
    %v3184 = vsel %vm3075, %v3183, %v3179
    %v3185 = vlaneseq
    %v3186 = vshrl.u32 %v3185, 7
    %v3187 = vsub.s32 %v3065, %v3186
    %v3188 = vrot.slane %v3048, %v3187
    %v3189 = vlaneseq
    %v3190 = vshrl.u32 %v3189, 7
    %v3191 = vsub.s32 %v3070, %v3190
    %v3192 = vrot.slane %v3051, %v3191
    %v3193 = vsel %vm3075, %v3192, %v3188
    %v3194 = vlaneseq
    %v3195 = vshrl.u32 %v3194, 7
    %v3196 = vsub.s32 %v3065, %v3195
    %v3197 = vrot.slane %v3054, %v3196
    %v3198 = vlaneseq
    %v3199 = vshrl.u32 %v3198, 7
    %v3200 = vsub.s32 %v3070, %v3199
    %v3201 = vrot.slane %v3057, %v3200
    %v3202 = vsel %vm3075, %v3201, %v3197
    %v3203 = vlaneseq
    %v3204 = vshrl.u32 %v3203, 7
    %v3205 = vsub.s32 %v3065, %v3204
    %v3206 = vrot.slane %v3060, %v3205
    %v3207 = vlaneseq
    %v3208 = vshrl.u32 %v3207, 7
    %v3209 = vsub.s32 %v3070, %v3208
    %v3210 = vrot.slane %v3063, %v3209
    %v3211 = vsel %vm3075, %v3210, %v3206
    %v3213 = vunpack.c.l.s4 1966171168
    %v3214 = vunpack.c.0.s8 %v3213
    %v3215 = vlaneseq
    %v3216 = vshrl.u32 %v3215, 7
    %v3217 = vsub.s32 %v3214, %v3216
    %v3218 = vrot.slane %v3076, %v3217
    %v3220 = vunpack.c.l.s4 1966171168
    %v3221 = vunpack.c.0.s8 %v3220
    %v3222 = vlaneseq
    %v3223 = vshrl.u32 %v3222, 7
    %v3224 = vsub.s32 %v3221, %v3223
    %v3225 = vrot.slane %v3218, %v3224
    %v3227 = vunpack.c.l.s4 1966171168
    %v3228 = vunpack.c.0.s8 %v3227
    %v3229 = vlaneseq
    %v3230 = vshrl.u32 %v3229, 7
    %v3231 = vsub.s32 %v3228, %v3230
    %v3232 = vrot.slane %v3085, %v3231
    %v3234 = vunpack.c.l.s4 1966171168
    %v3235 = vunpack.c.0.s8 %v3234
    %v3236 = vlaneseq
    %v3237 = vshrl.u32 %v3236, 7
    %v3238 = vsub.s32 %v3235, %v3237
    %v3239 = vrot.slane %v3232, %v3238
    %v3241 = vunpack.c.l.s4 1966171168
    %v3242 = vunpack.c.0.s8 %v3241
    %v3243 = vlaneseq
    %v3244 = vshrl.u32 %v3243, 7
    %v3245 = vsub.s32 %v3242, %v3244
    %v3246 = vrot.slane %v3094, %v3245
    %v3248 = vunpack.c.l.s4 1966171168
    %v3249 = vunpack.c.0.s8 %v3248
    %v3250 = vlaneseq
    %v3251 = vshrl.u32 %v3250, 7
    %v3252 = vsub.s32 %v3249, %v3251
    %v3253 = vrot.slane %v3246, %v3252
    %v3255 = vunpack.c.l.s4 1966171168
    %v3256 = vunpack.c.0.s8 %v3255
    %v3257 = vlaneseq
    %v3258 = vshrl.u32 %v3257, 7
    %v3259 = vsub.s32 %v3256, %v3258
    %v3260 = vrot.slane %v3103, %v3259
    %v3262 = vunpack.c.l.s4 1966171168
    %v3263 = vunpack.c.0.s8 %v3262
    %v3264 = vlaneseq
    %v3265 = vshrl.u32 %v3264, 7
    %v3266 = vsub.s32 %v3263, %v3265
    %v3267 = vrot.slane %v3260, %v3266
    %v3269 = vunpack.c.l.s4 1966171168
    %v3270 = vunpack.c.0.s8 %v3269
    %v3271 = vlaneseq
    %v3272 = vshrl.u32 %v3271, 7
    %v3273 = vsub.s32 %v3270, %v3272
    %v3274 = vrot.slane %v3112, %v3273
    %v3276 = vunpack.c.l.s4 1966171168
    %v3277 = vunpack.c.0.s8 %v3276
    %v3278 = vlaneseq
    %v3279 = vshrl.u32 %v3278, 7
    %v3280 = vsub.s32 %v3277, %v3279
    %v3281 = vrot.slane %v3274, %v3280
    %v3283 = vunpack.c.l.s4 1966171168
    %v3284 = vunpack.c.0.s8 %v3283
    %v3285 = vlaneseq
    %v3286 = vshrl.u32 %v3285, 7
    %v3287 = vsub.s32 %v3284, %v3286
    %v3288 = vrot.slane %v3121, %v3287
    %v3290 = vunpack.c.l.s4 1966171168
    %v3291 = vunpack.c.0.s8 %v3290
    %v3292 = vlaneseq
    %v3293 = vshrl.u32 %v3292, 7
    %v3294 = vsub.s32 %v3291, %v3293
    %v3295 = vrot.slane %v3288, %v3294
    %v3297 = vunpack.c.l.s4 1966171168
    %v3298 = vunpack.c.0.s8 %v3297
    %v3299 = vlaneseq
    %v3300 = vshrl.u32 %v3299, 7
    %v3301 = vsub.s32 %v3298, %v3300
    %v3302 = vrot.slane %v3130, %v3301
    %v3304 = vunpack.c.l.s4 1966171168
    %v3305 = vunpack.c.0.s8 %v3304
    %v3306 = vlaneseq
    %v3307 = vshrl.u32 %v3306, 7
    %v3308 = vsub.s32 %v3305, %v3307
    %v3309 = vrot.slane %v3302, %v3308
    %v3311 = vunpack.c.l.s4 1966171168
    %v3312 = vunpack.c.0.s8 %v3311
    %v3313 = vlaneseq
    %v3314 = vshrl.u32 %v3313, 7
    %v3315 = vsub.s32 %v3312, %v3314
    %v3316 = vrot.slane %v3139, %v3315
    %v3318 = vunpack.c.l.s4 1966171168
    %v3319 = vunpack.c.0.s8 %v3318
    %v3320 = vlaneseq
    %v3321 = vshrl.u32 %v3320, 7
    %v3322 = vsub.s32 %v3319, %v3321
    %v3323 = vrot.slane %v3316, %v3322
    %v3325 = vunpack.c.l.s4 1966171168
    %v3326 = vunpack.c.0.s8 %v3325
    %v3327 = vlaneseq
    %v3328 = vshrl.u32 %v3327, 7
    %v3329 = vsub.s32 %v3326, %v3328
    %v3330 = vrot.slane %v3148, %v3329
    %v3332 = vunpack.c.l.s4 1966171168
    %v3333 = vunpack.c.0.s8 %v3332
    %v3334 = vlaneseq
    %v3335 = vshrl.u32 %v3334, 7
    %v3336 = vsub.s32 %v3333, %v3335
    %v3337 = vrot.slane %v3330, %v3336
    %v3339 = vunpack.c.l.s4 1966171168
    %v3340 = vunpack.c.0.s8 %v3339
    %v3341 = vlaneseq
    %v3342 = vshrl.u32 %v3341, 7
    %v3343 = vsub.s32 %v3340, %v3342
    %v3344 = vrot.slane %v3157, %v3343
    %v3346 = vunpack.c.l.s4 1966171168
    %v3347 = vunpack.c.0.s8 %v3346
    %v3348 = vlaneseq
    %v3349 = vshrl.u32 %v3348, 7
    %v3350 = vsub.s32 %v3347, %v3349
    %v3351 = vrot.slane %v3344, %v3350
    %v3353 = vunpack.c.l.s4 1966171168
    %v3354 = vunpack.c.0.s8 %v3353
    %v3355 = vlaneseq
    %v3356 = vshrl.u32 %v3355, 7
    %v3357 = vsub.s32 %v3354, %v3356
    %v3358 = vrot.slane %v3166, %v3357
    %v3360 = vunpack.c.l.s4 1966171168
    %v3361 = vunpack.c.0.s8 %v3360
    %v3362 = vlaneseq
    %v3363 = vshrl.u32 %v3362, 7
    %v3364 = vsub.s32 %v3361, %v3363
    %v3365 = vrot.slane %v3358, %v3364
    %v3367 = vunpack.c.l.s4 1966171168
    %v3368 = vunpack.c.0.s8 %v3367
    %v3369 = vlaneseq
    %v3370 = vshrl.u32 %v3369, 7
    %v3371 = vsub.s32 %v3368, %v3370
    %v3372 = vrot.slane %v3175, %v3371
    %v3374 = vunpack.c.l.s4 1966171168
    %v3375 = vunpack.c.0.s8 %v3374
    %v3376 = vlaneseq
    %v3377 = vshrl.u32 %v3376, 7
    %v3378 = vsub.s32 %v3375, %v3377
    %v3379 = vrot.slane %v3372, %v3378
    %v3381 = vunpack.c.l.s4 1966171168
    %v3382 = vunpack.c.0.s8 %v3381
    %v3383 = vlaneseq
    %v3384 = vshrl.u32 %v3383, 7
    %v3385 = vsub.s32 %v3382, %v3384
    %v3386 = vrot.slane %v3184, %v3385
    %v3388 = vunpack.c.l.s4 1966171168
    %v3389 = vunpack.c.0.s8 %v3388
    %v3390 = vlaneseq
    %v3391 = vshrl.u32 %v3390, 7
    %v3392 = vsub.s32 %v3389, %v3391
    %v3393 = vrot.slane %v3386, %v3392
    %v3395 = vunpack.c.l.s4 1966171168
    %v3396 = vunpack.c.0.s8 %v3395
    %v3397 = vlaneseq
    %v3398 = vshrl.u32 %v3397, 7
    %v3399 = vsub.s32 %v3396, %v3398
    %v3400 = vrot.slane %v3193, %v3399
    %v3402 = vunpack.c.l.s4 1966171168
    %v3403 = vunpack.c.0.s8 %v3402
    %v3404 = vlaneseq
    %v3405 = vshrl.u32 %v3404, 7
    %v3406 = vsub.s32 %v3403, %v3405
    %v3407 = vrot.slane %v3400, %v3406
    %v3409 = vunpack.c.l.s4 1966171168
    %v3410 = vunpack.c.0.s8 %v3409
    %v3411 = vlaneseq
    %v3412 = vshrl.u32 %v3411, 7
    %v3413 = vsub.s32 %v3410, %v3412
    %v3414 = vrot.slane %v3202, %v3413
    %v3416 = vunpack.c.l.s4 1966171168
    %v3417 = vunpack.c.0.s8 %v3416
    %v3418 = vlaneseq
    %v3419 = vshrl.u32 %v3418, 7
    %v3420 = vsub.s32 %v3417, %v3419
    %v3421 = vrot.slane %v3414, %v3420
    %v3423 = vunpack.c.l.s4 1966171168
    %v3424 = vunpack.c.0.s8 %v3423
    %v3425 = vlaneseq
    %v3426 = vshrl.u32 %v3425, 7
    %v3427 = vsub.s32 %v3424, %v3426
    %v3428 = vrot.slane %v3211, %v3427
    %v3430 = vunpack.c.l.s4 1966171168
    %v3431 = vunpack.c.0.s8 %v3430
    %v3432 = vlaneseq
    %v3433 = vshrl.u32 %v3432, 7
    %v3434 = vsub.s32 %v3431, %v3433
    %v3435 = vrot.slane %v3428, %v3434
    %v3452 = vsel %vm328, %v3225, -1e+09
    %v3453 = vsel %vm329, %v3239, -1e+09
    %v3454 = vsel %vm330, %v3253, -1e+09
    %v3455 = vsel %vm331, %v3267, -1e+09
    %v3456 = vsel %vm332, %v3281, -1e+09
    %v3457 = vsel %vm333, %v3295, -1e+09
    %v3458 = vsel %vm334, %v3309, -1e+09
    %v3459 = vsel %vm335, %v3323, -1e+09
    %v3460 = vsel %vm336, %v3337, -1e+09
    %v3461 = vsel %vm337, %v3351, -1e+09
    %v3462 = vsel %vm338, %v3365, -1e+09
    %v3463 = vsel %vm339, %v3379, -1e+09
    %v3464 = vsel %vm340, %v3393, -1e+09
    %v3465 = vsel %vm341, %v3407, -1e+09
    %v3466 = vsel %vm342, %v3421, -1e+09
    %v3467 = vsel %vm343, %v3435, -1e+09
    %v3484 = vcombine.low %v3452, %v3453
    %v3485 = vcombine.low %v3454, %v3455
    %v3486 = vcombine.low %v3456, %v3457
    %v3487 = vcombine.low %v3458, %v3459
    %v3489 = vunpack.c.l.s4 1966171168
    %v3490 = vunpack.c.0.s8 %v3489
    %v3491 = vlaneseq
    %v3492 = vshrl.u32 %v3491, 7
    %v3493 = vsub.s32 %v3490, %v3492
    %v3494 = vrot.slane %v3484, %v3493
    %v3496 = vunpack.c.l.s4 1966171168
    %v3497 = vunpack.c.0.s8 %v3496
    %v3498 = vlaneseq
    %v3499 = vshrl.u32 %v3498, 7
    %v3500 = vsub.s32 %v3497, %v3499
    %v3501 = vrot.slane %v3485, %v3500
    %v3503 = vunpack.c.l.s4 1966171168
    %v3504 = vunpack.c.0.s8 %v3503
    %v3505 = vlaneseq
    %v3506 = vshrl.u32 %v3505, 7
    %v3507 = vsub.s32 %v3504, %v3506
    %v3508 = vrot.slane %v3486, %v3507
    %v3510 = vunpack.c.l.s4 1966171168
    %v3511 = vunpack.c.0.s8 %v3510
    %v3512 = vlaneseq
    %v3513 = vshrl.u32 %v3512, 7
    %v3514 = vsub.s32 %v3511, %v3513
    %v3515 = vrot.slane %v3487, %v3514
    %v3516 = vcombine.low %v3494, %v3501
    %v3517 = vcombine.low %v3508, %v3515
    %v3519 = vunpack.c.l.s4 1966171168
    %v3520 = vunpack.c.0.s8 %v3519
    %v3521 = vlaneseq
    %v3522 = vshrl.u32 %v3521, 7
    %v3523 = vsub.s32 %v3520, %v3522
    %v3524 = vrot.slane %v3516, %v3523
    %v3526 = vunpack.c.l.s4 1966171168
    %v3527 = vunpack.c.0.s8 %v3526
    %v3528 = vlaneseq
    %v3529 = vshrl.u32 %v3528, 7
    %v3530 = vsub.s32 %v3527, %v3529
    %v3531 = vrot.slane %v3517, %v3530
    %v3532 = vcombine.low %v3524, %v3531
    %v3533 = vcombine.low %v3460, %v3461
    %v3534 = vcombine.low %v3462, %v3463
    %v3535 = vcombine.low %v3464, %v3465
    %v3536 = vcombine.low %v3466, %v3467
    %v3538 = vunpack.c.l.s4 1966171168
    %v3539 = vunpack.c.0.s8 %v3538
    %v3540 = vlaneseq
    %v3541 = vshrl.u32 %v3540, 7
    %v3542 = vsub.s32 %v3539, %v3541
    %v3543 = vrot.slane %v3533, %v3542
    %v3545 = vunpack.c.l.s4 1966171168
    %v3546 = vunpack.c.0.s8 %v3545
    %v3547 = vlaneseq
    %v3548 = vshrl.u32 %v3547, 7
    %v3549 = vsub.s32 %v3546, %v3548
    %v3550 = vrot.slane %v3534, %v3549
    %v3552 = vunpack.c.l.s4 1966171168
    %v3553 = vunpack.c.0.s8 %v3552
    %v3554 = vlaneseq
    %v3555 = vshrl.u32 %v3554, 7
    %v3556 = vsub.s32 %v3553, %v3555
    %v3557 = vrot.slane %v3535, %v3556
    %v3559 = vunpack.c.l.s4 1966171168
    %v3560 = vunpack.c.0.s8 %v3559
    %v3561 = vlaneseq
    %v3562 = vshrl.u32 %v3561, 7
    %v3563 = vsub.s32 %v3560, %v3562
    %v3564 = vrot.slane %v3536, %v3563
    %v3565 = vcombine.low %v3543, %v3550
    %v3566 = vcombine.low %v3557, %v3564
    %v3568 = vunpack.c.l.s4 1966171168
    %v3569 = vunpack.c.0.s8 %v3568
    %v3570 = vlaneseq
    %v3571 = vshrl.u32 %v3570, 7
    %v3572 = vsub.s32 %v3569, %v3571
    %v3573 = vrot.slane %v3565, %v3572
    %v3575 = vunpack.c.l.s4 1966171168
    %v3576 = vunpack.c.0.s8 %v3575
    %v3577 = vlaneseq
    %v3578 = vshrl.u32 %v3577, 7
    %v3579 = vsub.s32 %v3576, %v3578
    %v3580 = vrot.slane %v3566, %v3579
    %v3581 = vcombine.low %v3573, %v3580
    %vm3584 = vcmask 130048
    %v3585 = vsel %vm3584, %v3532, -inf
    %3586 = vmax.xlane.f32.xlu0 %v3585
    %v3587 = vpop.xlane.xlu0 %3586
    %v3588 = vsel %vm3584, %v3581, -inf
    %3589 = vmax.xlane.f32.xlu0 %v3588
    %v3590 = vpop.xlane.xlu0 %3589
    %v3593 = vlaneseq
    %v3594 = vshrl.u32 %v3593, 7
    %v3595 = vsub.s32 0, %v3594
    %v3596 = vrot.slane %v3587, %v3595
    %v3597 = vlaneseq
    %v3598 = vshrl.u32 %v3597, 7
    %v3599 = vsub.s32 1, %v3598
    %v3600 = vrot.slane %v3587, %v3599
    %v3601 = vlaneseq
    %v3602 = vshrl.u32 %v3601, 7
    %v3603 = vsub.s32 2, %v3602
    %v3604 = vrot.slane %v3587, %v3603
    %v3605 = vlaneseq
    %v3606 = vshrl.u32 %v3605, 7
    %v3607 = vsub.s32 3, %v3606
    %v3608 = vrot.slane %v3587, %v3607
    %v3609 = vlaneseq
    %v3610 = vshrl.u32 %v3609, 7
    %v3611 = vsub.s32 4, %v3610
    %v3612 = vrot.slane %v3587, %v3611
    %v3613 = vlaneseq
    %v3614 = vshrl.u32 %v3613, 7
    %v3615 = vsub.s32 5, %v3614
    %v3616 = vrot.slane %v3587, %v3615
    %v3617 = vlaneseq
    %v3618 = vshrl.u32 %v3617, 7
    %v3619 = vsub.s32 6, %v3618
    %v3620 = vrot.slane %v3587, %v3619
    %v3621 = vlaneseq
    %v3622 = vshrl.u32 %v3621, 7
    %v3623 = vsub.s32 7, %v3622
    %v3624 = vrot.slane %v3587, %v3623
    %v3625 = vlaneseq
    %v3626 = vshrl.u32 %v3625, 7
    %v3627 = vsub.s32 0, %v3626
    %v3628 = vrot.slane %v3590, %v3627
    %v3629 = vlaneseq
    %v3630 = vshrl.u32 %v3629, 7
    %v3631 = vsub.s32 1, %v3630
    %v3632 = vrot.slane %v3590, %v3631
    %v3633 = vlaneseq
    %v3634 = vshrl.u32 %v3633, 7
    %v3635 = vsub.s32 2, %v3634
    %v3636 = vrot.slane %v3590, %v3635
    %v3637 = vlaneseq
    %v3638 = vshrl.u32 %v3637, 7
    %v3639 = vsub.s32 3, %v3638
    %v3640 = vrot.slane %v3590, %v3639
    %v3641 = vlaneseq
    %v3642 = vshrl.u32 %v3641, 7
    %v3643 = vsub.s32 4, %v3642
    %v3644 = vrot.slane %v3590, %v3643
    %v3645 = vlaneseq
    %v3646 = vshrl.u32 %v3645, 7
    %v3647 = vsub.s32 5, %v3646
    %v3648 = vrot.slane %v3590, %v3647
    %v3649 = vlaneseq
    %v3650 = vshrl.u32 %v3649, 7
    %v3651 = vsub.s32 6, %v3650
    %v3652 = vrot.slane %v3590, %v3651
    %v3653 = vlaneseq
    %v3654 = vshrl.u32 %v3653, 7
    %v3655 = vsub.s32 7, %v3654
    %v3656 = vrot.slane %v3590, %v3655
    %v3673 = vsub.f32 %v3452, %v3596
    %v3674 = vsub.f32 %v3453, %v3600
    %v3675 = vsub.f32 %v3454, %v3604
    %v3676 = vsub.f32 %v3455, %v3608
    %v3677 = vsub.f32 %v3456, %v3612
    %v3678 = vsub.f32 %v3457, %v3616
    %v3679 = vsub.f32 %v3458, %v3620
    %v3680 = vsub.f32 %v3459, %v3624
    %v3681 = vsub.f32 %v3460, %v3628
    %v3682 = vsub.f32 %v3461, %v3632
    %v3683 = vsub.f32 %v3462, %v3636
    %v3684 = vsub.f32 %v3463, %v3640
    %v3685 = vsub.f32 %v3464, %v3644
    %v3686 = vsub.f32 %v3465, %v3648
    %v3687 = vsub.f32 %v3466, %v3652
    %v3688 = vsub.f32 %v3467, %v3656
    %v3689 = vmul.f32 %v3673, 1.442695
    %v3690 = vpow.pop %v3689
    %v3691 = vmul.f32 %v3674, 1.442695
    %v3692 = vpow.pop %v3691
    %v3693 = vmul.f32 %v3675, 1.442695
    %v3694 = vpow.pop %v3693
    %v3695 = vmul.f32 %v3676, 1.442695
    %v3696 = vpow.pop %v3695
    %v3697 = vmul.f32 %v3677, 1.442695
    %v3698 = vpow.pop %v3697
    %v3699 = vmul.f32 %v3678, 1.442695
    %v3700 = vpow.pop %v3699
    %v3701 = vmul.f32 %v3679, 1.442695
    %v3702 = vpow.pop %v3701
    %v3703 = vmul.f32 %v3680, 1.442695
    %v3704 = vpow.pop %v3703
    %v3705 = vmul.f32 %v3681, 1.442695
    %v3706 = vpow.pop %v3705
    %v3707 = vmul.f32 %v3682, 1.442695
    %v3708 = vpow.pop %v3707
    %v3709 = vmul.f32 %v3683, 1.442695
    %v3710 = vpow.pop %v3709
    %v3711 = vmul.f32 %v3684, 1.442695
    %v3712 = vpow.pop %v3711
    %v3713 = vmul.f32 %v3685, 1.442695
    %v3714 = vpow.pop %v3713
    %v3715 = vmul.f32 %v3686, 1.442695
    %v3716 = vpow.pop %v3715
    %v3717 = vmul.f32 %v3687, 1.442695
    %v3718 = vpow.pop %v3717
    %v3719 = vmul.f32 %v3688, 1.442695
    %v3720 = vpow.pop %v3719
    %v3737 = vcombine.low %v3690, %v3692
    %v3738 = vcombine.low %v3694, %v3696
    %v3739 = vcombine.low %v3698, %v3700
    %v3740 = vcombine.low %v3702, %v3704
    %v3742 = vunpack.c.l.s4 1966171168
    %v3743 = vunpack.c.0.s8 %v3742
    %v3744 = vlaneseq
    %v3745 = vshrl.u32 %v3744, 7
    %v3746 = vsub.s32 %v3743, %v3745
    %v3747 = vrot.slane %v3737, %v3746
    %v3749 = vunpack.c.l.s4 1966171168
    %v3750 = vunpack.c.0.s8 %v3749
    %v3751 = vlaneseq
    %v3752 = vshrl.u32 %v3751, 7
    %v3753 = vsub.s32 %v3750, %v3752
    %v3754 = vrot.slane %v3738, %v3753
    %v3756 = vunpack.c.l.s4 1966171168
    %v3757 = vunpack.c.0.s8 %v3756
    %v3758 = vlaneseq
    %v3759 = vshrl.u32 %v3758, 7
    %v3760 = vsub.s32 %v3757, %v3759
    %v3761 = vrot.slane %v3739, %v3760
    %v3763 = vunpack.c.l.s4 1966171168
    %v3764 = vunpack.c.0.s8 %v3763
    %v3765 = vlaneseq
    %v3766 = vshrl.u32 %v3765, 7
    %v3767 = vsub.s32 %v3764, %v3766
    %v3768 = vrot.slane %v3740, %v3767
    %v3769 = vcombine.low %v3747, %v3754
    %v3770 = vcombine.low %v3761, %v3768
    %v3772 = vunpack.c.l.s4 1966171168
    %v3773 = vunpack.c.0.s8 %v3772
    %v3774 = vlaneseq
    %v3775 = vshrl.u32 %v3774, 7
    %v3776 = vsub.s32 %v3773, %v3775
    %v3777 = vrot.slane %v3769, %v3776
    %v3779 = vunpack.c.l.s4 1966171168
    %v3780 = vunpack.c.0.s8 %v3779
    %v3781 = vlaneseq
    %v3782 = vshrl.u32 %v3781, 7
    %v3783 = vsub.s32 %v3780, %v3782
    %v3784 = vrot.slane %v3770, %v3783
    %v3785 = vcombine.low %v3777, %v3784
    %v3786 = vcombine.low %v3706, %v3708
    %v3787 = vcombine.low %v3710, %v3712
    %v3788 = vcombine.low %v3714, %v3716
    %v3789 = vcombine.low %v3718, %v3720
    %v3791 = vunpack.c.l.s4 1966171168
    %v3792 = vunpack.c.0.s8 %v3791
    %v3793 = vlaneseq
    %v3794 = vshrl.u32 %v3793, 7
    %v3795 = vsub.s32 %v3792, %v3794
    %v3796 = vrot.slane %v3786, %v3795
    %v3798 = vunpack.c.l.s4 1966171168
    %v3799 = vunpack.c.0.s8 %v3798
    %v3800 = vlaneseq
    %v3801 = vshrl.u32 %v3800, 7
    %v3802 = vsub.s32 %v3799, %v3801
    %v3803 = vrot.slane %v3787, %v3802
    %v3805 = vunpack.c.l.s4 1966171168
    %v3806 = vunpack.c.0.s8 %v3805
    %v3807 = vlaneseq
    %v3808 = vshrl.u32 %v3807, 7
    %v3809 = vsub.s32 %v3806, %v3808
    %v3810 = vrot.slane %v3788, %v3809
    %v3812 = vunpack.c.l.s4 1966171168
    %v3813 = vunpack.c.0.s8 %v3812
    %v3814 = vlaneseq
    %v3815 = vshrl.u32 %v3814, 7
    %v3816 = vsub.s32 %v3813, %v3815
    %v3817 = vrot.slane %v3789, %v3816
    %v3818 = vcombine.low %v3796, %v3803
    %v3819 = vcombine.low %v3810, %v3817
    %v3821 = vunpack.c.l.s4 1966171168
    %v3822 = vunpack.c.0.s8 %v3821
    %v3823 = vlaneseq
    %v3824 = vshrl.u32 %v3823, 7
    %v3825 = vsub.s32 %v3822, %v3824
    %v3826 = vrot.slane %v3818, %v3825
    %v3828 = vunpack.c.l.s4 1966171168
    %v3829 = vunpack.c.0.s8 %v3828
    %v3830 = vlaneseq
    %v3831 = vshrl.u32 %v3830, 7
    %v3832 = vsub.s32 %v3829, %v3831
    %v3833 = vrot.slane %v3819, %v3832
    %v3834 = vcombine.low %v3826, %v3833
    %v3837 = vsel %vm3584, %v3785, 0.0
    %3838 = vadd.xlane.f32.xlu0 %v3837
    %v3839 = vpop.xlane.xlu0 %3838
    %v3840 = vsel %vm3584, %v3834, 0.0
    %3841 = vadd.xlane.f32.xlu0 %v3840
    %v3842 = vpop.xlane.xlu0 %3841
    %v3843 = vrcp.pop %v3839
    %v3844 = vrcp.pop %v3842
    %v3847 = vlaneseq
    %v3848 = vshrl.u32 %v3847, 7
    %v3849 = vsub.s32 0, %v3848
    %v3850 = vrot.slane %v3843, %v3849
    %v3851 = vlaneseq
    %v3852 = vshrl.u32 %v3851, 7
    %v3853 = vsub.s32 1, %v3852
    %v3854 = vrot.slane %v3843, %v3853
    %v3855 = vlaneseq
    %v3856 = vshrl.u32 %v3855, 7
    %v3857 = vsub.s32 2, %v3856
    %v3858 = vrot.slane %v3843, %v3857
    %v3859 = vlaneseq
    %v3860 = vshrl.u32 %v3859, 7
    %v3861 = vsub.s32 3, %v3860
    %v3862 = vrot.slane %v3843, %v3861
    %v3863 = vlaneseq
    %v3864 = vshrl.u32 %v3863, 7
    %v3865 = vsub.s32 4, %v3864
    %v3866 = vrot.slane %v3843, %v3865
    %v3867 = vlaneseq
    %v3868 = vshrl.u32 %v3867, 7
    %v3869 = vsub.s32 5, %v3868
    %v3870 = vrot.slane %v3843, %v3869
    %v3871 = vlaneseq
    %v3872 = vshrl.u32 %v3871, 7
    %v3873 = vsub.s32 6, %v3872
    %v3874 = vrot.slane %v3843, %v3873
    %v3875 = vlaneseq
    %v3876 = vshrl.u32 %v3875, 7
    %v3877 = vsub.s32 7, %v3876
    %v3878 = vrot.slane %v3843, %v3877
    %v3879 = vlaneseq
    %v3880 = vshrl.u32 %v3879, 7
    %v3881 = vsub.s32 0, %v3880
    %v3882 = vrot.slane %v3844, %v3881
    %v3883 = vlaneseq
    %v3884 = vshrl.u32 %v3883, 7
    %v3885 = vsub.s32 1, %v3884
    %v3886 = vrot.slane %v3844, %v3885
    %v3887 = vlaneseq
    %v3888 = vshrl.u32 %v3887, 7
    %v3889 = vsub.s32 2, %v3888
    %v3890 = vrot.slane %v3844, %v3889
    %v3891 = vlaneseq
    %v3892 = vshrl.u32 %v3891, 7
    %v3893 = vsub.s32 3, %v3892
    %v3894 = vrot.slane %v3844, %v3893
    %v3895 = vlaneseq
    %v3896 = vshrl.u32 %v3895, 7
    %v3897 = vsub.s32 4, %v3896
    %v3898 = vrot.slane %v3844, %v3897
    %v3899 = vlaneseq
    %v3900 = vshrl.u32 %v3899, 7
    %v3901 = vsub.s32 5, %v3900
    %v3902 = vrot.slane %v3844, %v3901
    %v3903 = vlaneseq
    %v3904 = vshrl.u32 %v3903, 7
    %v3905 = vsub.s32 6, %v3904
    %v3906 = vrot.slane %v3844, %v3905
    %v3907 = vlaneseq
    %v3908 = vshrl.u32 %v3907, 7
    %v3909 = vsub.s32 7, %v3908
    %v3910 = vrot.slane %v3844, %v3909
    %v3927 = vmul.f32 %v3690, %v3850
    %v3928 = vmul.f32 %v3692, %v3854
    %v3929 = vmul.f32 %v3694, %v3858
    %v3930 = vmul.f32 %v3696, %v3862
    %v3931 = vmul.f32 %v3698, %v3866
    %v3932 = vmul.f32 %v3700, %v3870
    %v3933 = vmul.f32 %v3702, %v3874
    %v3934 = vmul.f32 %v3704, %v3878
    %v3935 = vmul.f32 %v3706, %v3882
    %v3936 = vmul.f32 %v3708, %v3886
    %v3937 = vmul.f32 %v3710, %v3890
    %v3938 = vmul.f32 %v3712, %v3894
    %v3939 = vmul.f32 %v3714, %v3898
    %v3940 = vmul.f32 %v3716, %v3902
    %v3941 = vmul.f32 %v3718, %v3906
    %v3942 = vmul.f32 %v3720, %v3910
    %v3943 = vpack.c.bf16 %v3927, %v3927
    %v3944 = vpack.c.bf16 %v3928, %v3928
    %v3945 = vpack.c.bf16 %v3929, %v3929
    %v3946 = vpack.c.bf16 %v3930, %v3930
    %v3947 = vpack.c.bf16 %v3931, %v3931
    %v3948 = vpack.c.bf16 %v3932, %v3932
    %v3949 = vpack.c.bf16 %v3933, %v3933
    %v3950 = vpack.c.bf16 %v3934, %v3934
    %v3951 = vpack.c.bf16 %v3935, %v3935
    %v3952 = vpack.c.bf16 %v3936, %v3936
    %v3953 = vpack.c.bf16 %v3937, %v3937
    %v3954 = vpack.c.bf16 %v3938, %v3938
    %v3955 = vpack.c.bf16 %v3939, %v3939
    %v3956 = vpack.c.bf16 %v3940, %v3940
    %v3957 = vpack.c.bf16 %v3941, %v3941
    %v3958 = vpack.c.bf16 %v3942, %v3942
    %v3961 = vunpack.c.l.b16 %v109
    %v3962 = vunpack.c.l.b16 %v110
    %v3963 = vpack.c.b16 %v3962, %v3961
    %v3966 = vsel %vm3584, %v3943, 0
    %3968 = vmatprep.subr.bf16.mxu0 0
    %3969 = vmatpush1.bf16.msra.mxu0 0
    %3970 = vmatprep.subr.bf16.mxu0 0
    %3971 = vmatpush1.bf16.msra.mxu0 0
    %3972 = vmatprep.subr.bf16.mxu0 0
    %3973 = vmatpush1.bf16.msra.mxu0 0
    %3974 = vmatprep.subr.bf16.mxu0 0
    %3975 = vmatpush1.bf16.msra.mxu0 0
    %3976 = vmatprep.subr.bf16.mxu0 0
    %3977 = vmatpush1.bf16.msra.mxu0 0
    %3978 = vmatprep.subr.bf16.mxu0 0
    %3979 = vmatpush1.bf16.msra.mxu0 0
    %3980 = vmatprep.subr.bf16.mxu0 0
    %3981 = vmatpush1.bf16.msra.mxu0 0
    %3982 = vmatprep.subr.bf16.mxu0 0
    %3983 = vmatpush1.bf16.msra.mxu0 %v3963
    %3984 = vmatprep.subr.bf16.mxu0 0
    %3985 = vmatpush2.bf16.msra.mxu0 0
    %3986 = vmatprep.subr.bf16.mxu0 0
    %3987 = vmatpush2.bf16.msra.mxu0 0
    %3988 = vmatprep.subr.bf16.mxu0 0
    %3989 = vmatpush2.bf16.msra.mxu0 0
    %3990 = vmatprep.subr.bf16.mxu0 0
    %3991 = vmatpush2.bf16.msra.mxu0 0
    %3992 = vmatprep.subr.bf16.mxu0 0
    %3993 = vmatpush2.bf16.msra.mxu0 0
    %3994 = vmatprep.subr.bf16.mxu0 0
    %3995 = vmatpush2.bf16.msra.mxu0 0
    %3996 = vmatprep.subr.bf16.mxu0 0
    %3997 = vmatpush2.bf16.msra.mxu0 0
    %3998 = vmatprep.subr.bf16.mxu0 0
    %3999 = vmatpush2.bf16.msra.mxu0 0
    %4000 = vmatprep.mubr.bf16.mxu0 0
    %4001 = vmatmul.mubr.bf16.gmra.mxu0 %v3966
    %v4002 = vpop.f32.mrf.mxu0
    %v4003 = vadd.f32 0.0, %v4002
    %v4004 = vpop.f32.mrf.mxu0
    %v4005 = vpop.f32.mrf.mxu0
    %v4006 = vpop.f32.mrf.mxu0
    %4007 = vdwg.mxu0
    %v4010 = vunpack.c.l.b16 %v111
    %v4011 = vunpack.c.l.b16 %v112
    %v4012 = vpack.c.b16 %v4011, %v4010
    %v4015 = vsel %vm3584, %v3944, 0
    %4017 = vmatprep.subr.bf16.mxu0 0
    %4018 = vmatpush1.bf16.msra.mxu0 0
    %4019 = vmatprep.subr.bf16.mxu0 0
    %4020 = vmatpush1.bf16.msra.mxu0 0
    %4021 = vmatprep.subr.bf16.mxu0 0
    %4022 = vmatpush1.bf16.msra.mxu0 0
    %4023 = vmatprep.subr.bf16.mxu0 0
    %4024 = vmatpush1.bf16.msra.mxu0 0
    %4025 = vmatprep.subr.bf16.mxu0 0
    %4026 = vmatpush1.bf16.msra.mxu0 0
    %4027 = vmatprep.subr.bf16.mxu0 0
    %4028 = vmatpush1.bf16.msra.mxu0 0
    %4029 = vmatprep.subr.bf16.mxu0 0
    %4030 = vmatpush1.bf16.msra.mxu0 0
    %4031 = vmatprep.subr.bf16.mxu0 0
    %4032 = vmatpush1.bf16.msra.mxu0 %v4012
    %4033 = vmatprep.subr.bf16.mxu0 0
    %4034 = vmatpush2.bf16.msra.mxu0 0
    %4035 = vmatprep.subr.bf16.mxu0 0
    %4036 = vmatpush2.bf16.msra.mxu0 0
    %4037 = vmatprep.subr.bf16.mxu0 0
    %4038 = vmatpush2.bf16.msra.mxu0 0
    %4039 = vmatprep.subr.bf16.mxu0 0
    %4040 = vmatpush2.bf16.msra.mxu0 0
    %4041 = vmatprep.subr.bf16.mxu0 0
    %4042 = vmatpush2.bf16.msra.mxu0 0
    %4043 = vmatprep.subr.bf16.mxu0 0
    %4044 = vmatpush2.bf16.msra.mxu0 0
    %4045 = vmatprep.subr.bf16.mxu0 0
    %4046 = vmatpush2.bf16.msra.mxu0 0
    %4047 = vmatprep.subr.bf16.mxu0 0
    %4048 = vmatpush2.bf16.msra.mxu0 0
    %4049 = vmatprep.mubr.bf16.mxu0 0
    %4050 = vmatmul.mubr.bf16.gmra.mxu0 %v4015
    %v4051 = vpop.f32.mrf.mxu0
    %v4052 = vadd.f32 0.0, %v4051
    %v4053 = vpop.f32.mrf.mxu0
    %v4054 = vpop.f32.mrf.mxu0
    %v4055 = vpop.f32.mrf.mxu0
    %4056 = vdwg.mxu0
    %v4059 = vunpack.c.l.b16 %v113
    %v4060 = vunpack.c.l.b16 %v114
    %v4061 = vpack.c.b16 %v4060, %v4059
    %v4064 = vsel %vm3584, %v3945, 0
    %4066 = vmatprep.subr.bf16.mxu0 0
    %4067 = vmatpush1.bf16.msra.mxu0 0
    %4068 = vmatprep.subr.bf16.mxu0 0
    %4069 = vmatpush1.bf16.msra.mxu0 0
    %4070 = vmatprep.subr.bf16.mxu0 0
    %4071 = vmatpush1.bf16.msra.mxu0 0
    %4072 = vmatprep.subr.bf16.mxu0 0
    %4073 = vmatpush1.bf16.msra.mxu0 0
    %4074 = vmatprep.subr.bf16.mxu0 0
    %4075 = vmatpush1.bf16.msra.mxu0 0
    %4076 = vmatprep.subr.bf16.mxu0 0
    %4077 = vmatpush1.bf16.msra.mxu0 0
    %4078 = vmatprep.subr.bf16.mxu0 0
    %4079 = vmatpush1.bf16.msra.mxu0 0
    %4080 = vmatprep.subr.bf16.mxu0 0
    %4081 = vmatpush1.bf16.msra.mxu0 %v4061
    %4082 = vmatprep.subr.bf16.mxu0 0
    %4083 = vmatpush2.bf16.msra.mxu0 0
    %4084 = vmatprep.subr.bf16.mxu0 0
    %4085 = vmatpush2.bf16.msra.mxu0 0
    %4086 = vmatprep.subr.bf16.mxu0 0
    %4087 = vmatpush2.bf16.msra.mxu0 0
    %4088 = vmatprep.subr.bf16.mxu0 0
    %4089 = vmatpush2.bf16.msra.mxu0 0
    %4090 = vmatprep.subr.bf16.mxu0 0
    %4091 = vmatpush2.bf16.msra.mxu0 0
    %4092 = vmatprep.subr.bf16.mxu0 0
    %4093 = vmatpush2.bf16.msra.mxu0 0
    %4094 = vmatprep.subr.bf16.mxu0 0
    %4095 = vmatpush2.bf16.msra.mxu0 0
    %4096 = vmatprep.subr.bf16.mxu0 0
    %4097 = vmatpush2.bf16.msra.mxu0 0
    %4098 = vmatprep.mubr.bf16.mxu0 0
    %4099 = vmatmul.mubr.bf16.gmra.mxu0 %v4064
    %v4100 = vpop.f32.mrf.mxu0
    %v4101 = vadd.f32 0.0, %v4100
    %v4102 = vpop.f32.mrf.mxu0
    %v4103 = vpop.f32.mrf.mxu0
    %v4104 = vpop.f32.mrf.mxu0
    %4105 = vdwg.mxu0
    %v4108 = vunpack.c.l.b16 %v115
    %v4109 = vunpack.c.l.b16 %v116
    %v4110 = vpack.c.b16 %v4109, %v4108
    %v4113 = vsel %vm3584, %v3946, 0
    %4115 = vmatprep.subr.bf16.mxu0 0
    %4116 = vmatpush1.bf16.msra.mxu0 0
    %4117 = vmatprep.subr.bf16.mxu0 0
    %4118 = vmatpush1.bf16.msra.mxu0 0
    %4119 = vmatprep.subr.bf16.mxu0 0
    %4120 = vmatpush1.bf16.msra.mxu0 0
    %4121 = vmatprep.subr.bf16.mxu0 0
    %4122 = vmatpush1.bf16.msra.mxu0 0
    %4123 = vmatprep.subr.bf16.mxu0 0
    %4124 = vmatpush1.bf16.msra.mxu0 0
    %4125 = vmatprep.subr.bf16.mxu0 0
    %4126 = vmatpush1.bf16.msra.mxu0 0
    %4127 = vmatprep.subr.bf16.mxu0 0
    %4128 = vmatpush1.bf16.msra.mxu0 0
    %4129 = vmatprep.subr.bf16.mxu0 0
    %4130 = vmatpush1.bf16.msra.mxu0 %v4110
    %4131 = vmatprep.subr.bf16.mxu0 0
    %4132 = vmatpush2.bf16.msra.mxu0 0
    %4133 = vmatprep.subr.bf16.mxu0 0
    %4134 = vmatpush2.bf16.msra.mxu0 0
    %4135 = vmatprep.subr.bf16.mxu0 0
    %4136 = vmatpush2.bf16.msra.mxu0 0
    %4137 = vmatprep.subr.bf16.mxu0 0
    %4138 = vmatpush2.bf16.msra.mxu0 0
    %4139 = vmatprep.subr.bf16.mxu0 0
    %4140 = vmatpush2.bf16.msra.mxu0 0
    %4141 = vmatprep.subr.bf16.mxu0 0
    %4142 = vmatpush2.bf16.msra.mxu0 0
    %4143 = vmatprep.subr.bf16.mxu0 0
    %4144 = vmatpush2.bf16.msra.mxu0 0
    %4145 = vmatprep.subr.bf16.mxu0 0
    %4146 = vmatpush2.bf16.msra.mxu0 0
    %4147 = vmatprep.mubr.bf16.mxu0 0
    %4148 = vmatmul.mubr.bf16.gmra.mxu0 %v4113
    %v4149 = vpop.f32.mrf.mxu0
    %v4150 = vadd.f32 0.0, %v4149
    %v4151 = vpop.f32.mrf.mxu0
    %v4152 = vpop.f32.mrf.mxu0
    %v4153 = vpop.f32.mrf.mxu0
    %4154 = vdwg.mxu0
    %v4157 = vunpack.c.l.b16 %v117
    %v4158 = vunpack.c.l.b16 %v118
    %v4159 = vpack.c.b16 %v4158, %v4157
    %v4162 = vsel %vm3584, %v3947, 0
    %4164 = vmatprep.subr.bf16.mxu0 0
    %4165 = vmatpush1.bf16.msra.mxu0 0
    %4166 = vmatprep.subr.bf16.mxu0 0
    %4167 = vmatpush1.bf16.msra.mxu0 0
    %4168 = vmatprep.subr.bf16.mxu0 0
    %4169 = vmatpush1.bf16.msra.mxu0 0
    %4170 = vmatprep.subr.bf16.mxu0 0
    %4171 = vmatpush1.bf16.msra.mxu0 0
    %4172 = vmatprep.subr.bf16.mxu0 0
    %4173 = vmatpush1.bf16.msra.mxu0 0
    %4174 = vmatprep.subr.bf16.mxu0 0
    %4175 = vmatpush1.bf16.msra.mxu0 0
    %4176 = vmatprep.subr.bf16.mxu0 0
    %4177 = vmatpush1.bf16.msra.mxu0 0
    %4178 = vmatprep.subr.bf16.mxu0 0
    %4179 = vmatpush1.bf16.msra.mxu0 %v4159
    %4180 = vmatprep.subr.bf16.mxu0 0
    %4181 = vmatpush2.bf16.msra.mxu0 0
    %4182 = vmatprep.subr.bf16.mxu0 0
    %4183 = vmatpush2.bf16.msra.mxu0 0
    %4184 = vmatprep.subr.bf16.mxu0 0
    %4185 = vmatpush2.bf16.msra.mxu0 0
    %4186 = vmatprep.subr.bf16.mxu0 0
    %4187 = vmatpush2.bf16.msra.mxu0 0
    %4188 = vmatprep.subr.bf16.mxu0 0
    %4189 = vmatpush2.bf16.msra.mxu0 0
    %4190 = vmatprep.subr.bf16.mxu0 0
    %4191 = vmatpush2.bf16.msra.mxu0 0
    %4192 = vmatprep.subr.bf16.mxu0 0
    %4193 = vmatpush2.bf16.msra.mxu0 0
    %4194 = vmatprep.subr.bf16.mxu0 0
    %4195 = vmatpush2.bf16.msra.mxu0 0
    %4196 = vmatprep.mubr.bf16.mxu0 0
    %4197 = vmatmul.mubr.bf16.gmra.mxu0 %v4162
    %v4198 = vpop.f32.mrf.mxu0
    %v4199 = vadd.f32 0.0, %v4198
    %v4200 = vpop.f32.mrf.mxu0
    %v4201 = vpop.f32.mrf.mxu0
    %v4202 = vpop.f32.mrf.mxu0
    %4203 = vdwg.mxu0
    %v4206 = vunpack.c.l.b16 %v119
    %v4207 = vunpack.c.l.b16 %v120
    %v4208 = vpack.c.b16 %v4207, %v4206
    %v4211 = vsel %vm3584, %v3948, 0
    %4213 = vmatprep.subr.bf16.mxu0 0
    %4214 = vmatpush1.bf16.msra.mxu0 0
    %4215 = vmatprep.subr.bf16.mxu0 0
    %4216 = vmatpush1.bf16.msra.mxu0 0
    %4217 = vmatprep.subr.bf16.mxu0 0
    %4218 = vmatpush1.bf16.msra.mxu0 0
    %4219 = vmatprep.subr.bf16.mxu0 0
    %4220 = vmatpush1.bf16.msra.mxu0 0
    %4221 = vmatprep.subr.bf16.mxu0 0
    %4222 = vmatpush1.bf16.msra.mxu0 0
    %4223 = vmatprep.subr.bf16.mxu0 0
    %4224 = vmatpush1.bf16.msra.mxu0 0
    %4225 = vmatprep.subr.bf16.mxu0 0
    %4226 = vmatpush1.bf16.msra.mxu0 0
    %4227 = vmatprep.subr.bf16.mxu0 0
    %4228 = vmatpush1.bf16.msra.mxu0 %v4208
    %4229 = vmatprep.subr.bf16.mxu0 0
    %4230 = vmatpush2.bf16.msra.mxu0 0
    %4231 = vmatprep.subr.bf16.mxu0 0
    %4232 = vmatpush2.bf16.msra.mxu0 0
    %4233 = vmatprep.subr.bf16.mxu0 0
    %4234 = vmatpush2.bf16.msra.mxu0 0
    %4235 = vmatprep.subr.bf16.mxu0 0
    %4236 = vmatpush2.bf16.msra.mxu0 0
    %4237 = vmatprep.subr.bf16.mxu0 0
    %4238 = vmatpush2.bf16.msra.mxu0 0
    %4239 = vmatprep.subr.bf16.mxu0 0
    %4240 = vmatpush2.bf16.msra.mxu0 0
    %4241 = vmatprep.subr.bf16.mxu0 0
    %4242 = vmatpush2.bf16.msra.mxu0 0
    %4243 = vmatprep.subr.bf16.mxu0 0
    %4244 = vmatpush2.bf16.msra.mxu0 0
    %4245 = vmatprep.mubr.bf16.mxu0 0
    %4246 = vmatmul.mubr.bf16.gmra.mxu0 %v4211
    %v4247 = vpop.f32.mrf.mxu0
    %v4248 = vadd.f32 0.0, %v4247
    %v4249 = vpop.f32.mrf.mxu0
    %v4250 = vpop.f32.mrf.mxu0
    %v4251 = vpop.f32.mrf.mxu0
    %4252 = vdwg.mxu0
    %v4255 = vunpack.c.l.b16 %v121
    %v4256 = vunpack.c.l.b16 %v122
    %v4257 = vpack.c.b16 %v4256, %v4255
    %v4260 = vsel %vm3584, %v3949, 0
    %4262 = vmatprep.subr.bf16.mxu0 0
    %4263 = vmatpush1.bf16.msra.mxu0 0
    %4264 = vmatprep.subr.bf16.mxu0 0
    %4265 = vmatpush1.bf16.msra.mxu0 0
    %4266 = vmatprep.subr.bf16.mxu0 0
    %4267 = vmatpush1.bf16.msra.mxu0 0
    %4268 = vmatprep.subr.bf16.mxu0 0
    %4269 = vmatpush1.bf16.msra.mxu0 0
    %4270 = vmatprep.subr.bf16.mxu0 0
    %4271 = vmatpush1.bf16.msra.mxu0 0
    %4272 = vmatprep.subr.bf16.mxu0 0
    %4273 = vmatpush1.bf16.msra.mxu0 0
    %4274 = vmatprep.subr.bf16.mxu0 0
    %4275 = vmatpush1.bf16.msra.mxu0 0
    %4276 = vmatprep.subr.bf16.mxu0 0
    %4277 = vmatpush1.bf16.msra.mxu0 %v4257
    %4278 = vmatprep.subr.bf16.mxu0 0
    %4279 = vmatpush2.bf16.msra.mxu0 0
    %4280 = vmatprep.subr.bf16.mxu0 0
    %4281 = vmatpush2.bf16.msra.mxu0 0
    %4282 = vmatprep.subr.bf16.mxu0 0
    %4283 = vmatpush2.bf16.msra.mxu0 0
    %4284 = vmatprep.subr.bf16.mxu0 0
    %4285 = vmatpush2.bf16.msra.mxu0 0
    %4286 = vmatprep.subr.bf16.mxu0 0
    %4287 = vmatpush2.bf16.msra.mxu0 0
    %4288 = vmatprep.subr.bf16.mxu0 0
    %4289 = vmatpush2.bf16.msra.mxu0 0
    %4290 = vmatprep.subr.bf16.mxu0 0
    %4291 = vmatpush2.bf16.msra.mxu0 0
    %4292 = vmatprep.subr.bf16.mxu0 0
    %4293 = vmatpush2.bf16.msra.mxu0 0
    %4294 = vmatprep.mubr.bf16.mxu0 0
    %4295 = vmatmul.mubr.bf16.gmra.mxu0 %v4260
    %v4296 = vpop.f32.mrf.mxu0
    %v4297 = vadd.f32 0.0, %v4296
    %v4298 = vpop.f32.mrf.mxu0
    %v4299 = vpop.f32.mrf.mxu0
    %v4300 = vpop.f32.mrf.mxu0
    %4301 = vdwg.mxu0
    %v4304 = vunpack.c.l.b16 %v123
    %v4305 = vunpack.c.l.b16 %v124
    %v4306 = vpack.c.b16 %v4305, %v4304
    %v4309 = vsel %vm3584, %v3950, 0
    %4311 = vmatprep.subr.bf16.mxu0 0
    %4312 = vmatpush1.bf16.msra.mxu0 0
    %4313 = vmatprep.subr.bf16.mxu0 0
    %4314 = vmatpush1.bf16.msra.mxu0 0
    %4315 = vmatprep.subr.bf16.mxu0 0
    %4316 = vmatpush1.bf16.msra.mxu0 0
    %4317 = vmatprep.subr.bf16.mxu0 0
    %4318 = vmatpush1.bf16.msra.mxu0 0
    %4319 = vmatprep.subr.bf16.mxu0 0
    %4320 = vmatpush1.bf16.msra.mxu0 0
    %4321 = vmatprep.subr.bf16.mxu0 0
    %4322 = vmatpush1.bf16.msra.mxu0 0
    %4323 = vmatprep.subr.bf16.mxu0 0
    %4324 = vmatpush1.bf16.msra.mxu0 0
    %4325 = vmatprep.subr.bf16.mxu0 0
    %4326 = vmatpush1.bf16.msra.mxu0 %v4306
    %4327 = vmatprep.subr.bf16.mxu0 0
    %4328 = vmatpush2.bf16.msra.mxu0 0
    %4329 = vmatprep.subr.bf16.mxu0 0
    %4330 = vmatpush2.bf16.msra.mxu0 0
    %4331 = vmatprep.subr.bf16.mxu0 0
    %4332 = vmatpush2.bf16.msra.mxu0 0
    %4333 = vmatprep.subr.bf16.mxu0 0
    %4334 = vmatpush2.bf16.msra.mxu0 0
    %4335 = vmatprep.subr.bf16.mxu0 0
    %4336 = vmatpush2.bf16.msra.mxu0 0
    %4337 = vmatprep.subr.bf16.mxu0 0
    %4338 = vmatpush2.bf16.msra.mxu0 0
    %4339 = vmatprep.subr.bf16.mxu0 0
    %4340 = vmatpush2.bf16.msra.mxu0 0
    %4341 = vmatprep.subr.bf16.mxu0 0
    %4342 = vmatpush2.bf16.msra.mxu0 0
    %4343 = vmatprep.mubr.bf16.mxu0 0
    %4344 = vmatmul.mubr.bf16.gmra.mxu0 %v4309
    %v4345 = vpop.f32.mrf.mxu0
    %v4346 = vadd.f32 0.0, %v4345
    %v4347 = vpop.f32.mrf.mxu0
    %v4348 = vpop.f32.mrf.mxu0
    %v4349 = vpop.f32.mrf.mxu0
    %4350 = vdwg.mxu0
    %v4353 = vunpack.c.l.b16 %v125
    %v4354 = vunpack.c.l.b16 %v126
    %v4355 = vpack.c.b16 %v4354, %v4353
    %v4358 = vsel %vm3584, %v3951, 0
    %4360 = vmatprep.subr.bf16.mxu0 0
    %4361 = vmatpush1.bf16.msra.mxu0 0
    %4362 = vmatprep.subr.bf16.mxu0 0
    %4363 = vmatpush1.bf16.msra.mxu0 0
    %4364 = vmatprep.subr.bf16.mxu0 0
    %4365 = vmatpush1.bf16.msra.mxu0 0
    %4366 = vmatprep.subr.bf16.mxu0 0
    %4367 = vmatpush1.bf16.msra.mxu0 0
    %4368 = vmatprep.subr.bf16.mxu0 0
    %4369 = vmatpush1.bf16.msra.mxu0 0
    %4370 = vmatprep.subr.bf16.mxu0 0
    %4371 = vmatpush1.bf16.msra.mxu0 0
    %4372 = vmatprep.subr.bf16.mxu0 0
    %4373 = vmatpush1.bf16.msra.mxu0 0
    %4374 = vmatprep.subr.bf16.mxu0 0
    %4375 = vmatpush1.bf16.msra.mxu0 %v4355
    %4376 = vmatprep.subr.bf16.mxu0 0
    %4377 = vmatpush2.bf16.msra.mxu0 0
    %4378 = vmatprep.subr.bf16.mxu0 0
    %4379 = vmatpush2.bf16.msra.mxu0 0
    %4380 = vmatprep.subr.bf16.mxu0 0
    %4381 = vmatpush2.bf16.msra.mxu0 0
    %4382 = vmatprep.subr.bf16.mxu0 0
    %4383 = vmatpush2.bf16.msra.mxu0 0
    %4384 = vmatprep.subr.bf16.mxu0 0
    %4385 = vmatpush2.bf16.msra.mxu0 0
    %4386 = vmatprep.subr.bf16.mxu0 0
    %4387 = vmatpush2.bf16.msra.mxu0 0
    %4388 = vmatprep.subr.bf16.mxu0 0
    %4389 = vmatpush2.bf16.msra.mxu0 0
    %4390 = vmatprep.subr.bf16.mxu0 0
    %4391 = vmatpush2.bf16.msra.mxu0 0
    %4392 = vmatprep.mubr.bf16.mxu0 0
    %4393 = vmatmul.mubr.bf16.gmra.mxu0 %v4358
    %v4394 = vpop.f32.mrf.mxu0
    %v4395 = vadd.f32 0.0, %v4394
    %v4396 = vpop.f32.mrf.mxu0
    %v4397 = vpop.f32.mrf.mxu0
    %v4398 = vpop.f32.mrf.mxu0
    %4399 = vdwg.mxu0
    %v4402 = vunpack.c.l.b16 %v127
    %v4403 = vunpack.c.l.b16 %v128
    %v4404 = vpack.c.b16 %v4403, %v4402
    %v4407 = vsel %vm3584, %v3952, 0
    %4409 = vmatprep.subr.bf16.mxu0 0
    %4410 = vmatpush1.bf16.msra.mxu0 0
    %4411 = vmatprep.subr.bf16.mxu0 0
    %4412 = vmatpush1.bf16.msra.mxu0 0
    %4413 = vmatprep.subr.bf16.mxu0 0
    %4414 = vmatpush1.bf16.msra.mxu0 0
    %4415 = vmatprep.subr.bf16.mxu0 0
    %4416 = vmatpush1.bf16.msra.mxu0 0
    %4417 = vmatprep.subr.bf16.mxu0 0
    %4418 = vmatpush1.bf16.msra.mxu0 0
    %4419 = vmatprep.subr.bf16.mxu0 0
    %4420 = vmatpush1.bf16.msra.mxu0 0
    %4421 = vmatprep.subr.bf16.mxu0 0
    %4422 = vmatpush1.bf16.msra.mxu0 0
    %4423 = vmatprep.subr.bf16.mxu0 0
    %4424 = vmatpush1.bf16.msra.mxu0 %v4404
    %4425 = vmatprep.subr.bf16.mxu0 0
    %4426 = vmatpush2.bf16.msra.mxu0 0
    %4427 = vmatprep.subr.bf16.mxu0 0
    %4428 = vmatpush2.bf16.msra.mxu0 0
    %4429 = vmatprep.subr.bf16.mxu0 0
    %4430 = vmatpush2.bf16.msra.mxu0 0
    %4431 = vmatprep.subr.bf16.mxu0 0
    %4432 = vmatpush2.bf16.msra.mxu0 0
    %4433 = vmatprep.subr.bf16.mxu0 0
    %4434 = vmatpush2.bf16.msra.mxu0 0
    %4435 = vmatprep.subr.bf16.mxu0 0
    %4436 = vmatpush2.bf16.msra.mxu0 0
    %4437 = vmatprep.subr.bf16.mxu0 0
    %4438 = vmatpush2.bf16.msra.mxu0 0
    %4439 = vmatprep.subr.bf16.mxu0 0
    %4440 = vmatpush2.bf16.msra.mxu0 0
    %4441 = vmatprep.mubr.bf16.mxu0 0
    %4442 = vmatmul.mubr.bf16.gmra.mxu0 %v4407
    %v4443 = vpop.f32.mrf.mxu0
    %v4444 = vadd.f32 0.0, %v4443
    %v4445 = vpop.f32.mrf.mxu0
    %v4446 = vpop.f32.mrf.mxu0
    %v4447 = vpop.f32.mrf.mxu0
    %4448 = vdwg.mxu0
    %v4451 = vunpack.c.l.b16 %v129
    %v4452 = vunpack.c.l.b16 %v130
    %v4453 = vpack.c.b16 %v4452, %v4451
    %v4456 = vsel %vm3584, %v3953, 0
    %4458 = vmatprep.subr.bf16.mxu0 0
    %4459 = vmatpush1.bf16.msra.mxu0 0
    %4460 = vmatprep.subr.bf16.mxu0 0
    %4461 = vmatpush1.bf16.msra.mxu0 0
    %4462 = vmatprep.subr.bf16.mxu0 0
    %4463 = vmatpush1.bf16.msra.mxu0 0
    %4464 = vmatprep.subr.bf16.mxu0 0
    %4465 = vmatpush1.bf16.msra.mxu0 0
    %4466 = vmatprep.subr.bf16.mxu0 0
    %4467 = vmatpush1.bf16.msra.mxu0 0
    %4468 = vmatprep.subr.bf16.mxu0 0
    %4469 = vmatpush1.bf16.msra.mxu0 0
    %4470 = vmatprep.subr.bf16.mxu0 0
    %4471 = vmatpush1.bf16.msra.mxu0 0
    %4472 = vmatprep.subr.bf16.mxu0 0
    %4473 = vmatpush1.bf16.msra.mxu0 %v4453
    %4474 = vmatprep.subr.bf16.mxu0 0
    %4475 = vmatpush2.bf16.msra.mxu0 0
    %4476 = vmatprep.subr.bf16.mxu0 0
    %4477 = vmatpush2.bf16.msra.mxu0 0
    %4478 = vmatprep.subr.bf16.mxu0 0
    %4479 = vmatpush2.bf16.msra.mxu0 0
    %4480 = vmatprep.subr.bf16.mxu0 0
    %4481 = vmatpush2.bf16.msra.mxu0 0
    %4482 = vmatprep.subr.bf16.mxu0 0
    %4483 = vmatpush2.bf16.msra.mxu0 0
    %4484 = vmatprep.subr.bf16.mxu0 0
    %4485 = vmatpush2.bf16.msra.mxu0 0
    %4486 = vmatprep.subr.bf16.mxu0 0
    %4487 = vmatpush2.bf16.msra.mxu0 0
    %4488 = vmatprep.subr.bf16.mxu0 0
    %4489 = vmatpush2.bf16.msra.mxu0 0
    %4490 = vmatprep.mubr.bf16.mxu0 0
    %4491 = vmatmul.mubr.bf16.gmra.mxu0 %v4456
    %v4492 = vpop.f32.mrf.mxu0
    %v4493 = vadd.f32 0.0, %v4492
    %v4494 = vpop.f32.mrf.mxu0
    %v4495 = vpop.f32.mrf.mxu0
    %v4496 = vpop.f32.mrf.mxu0
    %4497 = vdwg.mxu0
    %v4500 = vunpack.c.l.b16 %v131
    %v4501 = vunpack.c.l.b16 %v132
    %v4502 = vpack.c.b16 %v4501, %v4500
    %v4505 = vsel %vm3584, %v3954, 0
    %4507 = vmatprep.subr.bf16.mxu0 0
    %4508 = vmatpush1.bf16.msra.mxu0 0
    %4509 = vmatprep.subr.bf16.mxu0 0
    %4510 = vmatpush1.bf16.msra.mxu0 0
    %4511 = vmatprep.subr.bf16.mxu0 0
    %4512 = vmatpush1.bf16.msra.mxu0 0
    %4513 = vmatprep.subr.bf16.mxu0 0
    %4514 = vmatpush1.bf16.msra.mxu0 0
    %4515 = vmatprep.subr.bf16.mxu0 0
    %4516 = vmatpush1.bf16.msra.mxu0 0
    %4517 = vmatprep.subr.bf16.mxu0 0
    %4518 = vmatpush1.bf16.msra.mxu0 0
    %4519 = vmatprep.subr.bf16.mxu0 0
    %4520 = vmatpush1.bf16.msra.mxu0 0
    %4521 = vmatprep.subr.bf16.mxu0 0
    %4522 = vmatpush1.bf16.msra.mxu0 %v4502
    %4523 = vmatprep.subr.bf16.mxu0 0
    %4524 = vmatpush2.bf16.msra.mxu0 0
    %4525 = vmatprep.subr.bf16.mxu0 0
    %4526 = vmatpush2.bf16.msra.mxu0 0
    %4527 = vmatprep.subr.bf16.mxu0 0
    %4528 = vmatpush2.bf16.msra.mxu0 0
    %4529 = vmatprep.subr.bf16.mxu0 0
    %4530 = vmatpush2.bf16.msra.mxu0 0
    %4531 = vmatprep.subr.bf16.mxu0 0
    %4532 = vmatpush2.bf16.msra.mxu0 0
    %4533 = vmatprep.subr.bf16.mxu0 0
    %4534 = vmatpush2.bf16.msra.mxu0 0
    %4535 = vmatprep.subr.bf16.mxu0 0
    %4536 = vmatpush2.bf16.msra.mxu0 0
    %4537 = vmatprep.subr.bf16.mxu0 0
    %4538 = vmatpush2.bf16.msra.mxu0 0
    %4539 = vmatprep.mubr.bf16.mxu0 0
    %4540 = vmatmul.mubr.bf16.gmra.mxu0 %v4505
    %v4541 = vpop.f32.mrf.mxu0
    %v4542 = vadd.f32 0.0, %v4541
    %v4543 = vpop.f32.mrf.mxu0
    %v4544 = vpop.f32.mrf.mxu0
    %v4545 = vpop.f32.mrf.mxu0
    %4546 = vdwg.mxu0
    %v4549 = vunpack.c.l.b16 %v133
    %v4550 = vunpack.c.l.b16 %v134
    %v4551 = vpack.c.b16 %v4550, %v4549
    %v4554 = vsel %vm3584, %v3955, 0
    %4556 = vmatprep.subr.bf16.mxu0 0
    %4557 = vmatpush1.bf16.msra.mxu0 0
    %4558 = vmatprep.subr.bf16.mxu0 0
    %4559 = vmatpush1.bf16.msra.mxu0 0
    %4560 = vmatprep.subr.bf16.mxu0 0
    %4561 = vmatpush1.bf16.msra.mxu0 0
    %4562 = vmatprep.subr.bf16.mxu0 0
    %4563 = vmatpush1.bf16.msra.mxu0 0
    %4564 = vmatprep.subr.bf16.mxu0 0
    %4565 = vmatpush1.bf16.msra.mxu0 0
    %4566 = vmatprep.subr.bf16.mxu0 0
    %4567 = vmatpush1.bf16.msra.mxu0 0
    %4568 = vmatprep.subr.bf16.mxu0 0
    %4569 = vmatpush1.bf16.msra.mxu0 0
    %4570 = vmatprep.subr.bf16.mxu0 0
    %4571 = vmatpush1.bf16.msra.mxu0 %v4551
    %4572 = vmatprep.subr.bf16.mxu0 0
    %4573 = vmatpush2.bf16.msra.mxu0 0
    %4574 = vmatprep.subr.bf16.mxu0 0
    %4575 = vmatpush2.bf16.msra.mxu0 0
    %4576 = vmatprep.subr.bf16.mxu0 0
    %4577 = vmatpush2.bf16.msra.mxu0 0
    %4578 = vmatprep.subr.bf16.mxu0 0
    %4579 = vmatpush2.bf16.msra.mxu0 0
    %4580 = vmatprep.subr.bf16.mxu0 0
    %4581 = vmatpush2.bf16.msra.mxu0 0
    %4582 = vmatprep.subr.bf16.mxu0 0
    %4583 = vmatpush2.bf16.msra.mxu0 0
    %4584 = vmatprep.subr.bf16.mxu0 0
    %4585 = vmatpush2.bf16.msra.mxu0 0
    %4586 = vmatprep.subr.bf16.mxu0 0
    %4587 = vmatpush2.bf16.msra.mxu0 0
    %4588 = vmatprep.mubr.bf16.mxu0 0
    %4589 = vmatmul.mubr.bf16.gmra.mxu0 %v4554
    %v4590 = vpop.f32.mrf.mxu0
    %v4591 = vadd.f32 0.0, %v4590
    %v4592 = vpop.f32.mrf.mxu0
    %v4593 = vpop.f32.mrf.mxu0
    %v4594 = vpop.f32.mrf.mxu0
    %4595 = vdwg.mxu0
    %v4598 = vunpack.c.l.b16 %v135
    %v4599 = vunpack.c.l.b16 %v136
    %v4600 = vpack.c.b16 %v4599, %v4598
    %v4603 = vsel %vm3584, %v3956, 0
    %4605 = vmatprep.subr.bf16.mxu0 0
    %4606 = vmatpush1.bf16.msra.mxu0 0
    %4607 = vmatprep.subr.bf16.mxu0 0
    %4608 = vmatpush1.bf16.msra.mxu0 0
    %4609 = vmatprep.subr.bf16.mxu0 0
    %4610 = vmatpush1.bf16.msra.mxu0 0
    %4611 = vmatprep.subr.bf16.mxu0 0
    %4612 = vmatpush1.bf16.msra.mxu0 0
    %4613 = vmatprep.subr.bf16.mxu0 0
    %4614 = vmatpush1.bf16.msra.mxu0 0
    %4615 = vmatprep.subr.bf16.mxu0 0
    %4616 = vmatpush1.bf16.msra.mxu0 0
    %4617 = vmatprep.subr.bf16.mxu0 0
    %4618 = vmatpush1.bf16.msra.mxu0 0
    %4619 = vmatprep.subr.bf16.mxu0 0
    %4620 = vmatpush1.bf16.msra.mxu0 %v4600
    %4621 = vmatprep.subr.bf16.mxu0 0
    %4622 = vmatpush2.bf16.msra.mxu0 0
    %4623 = vmatprep.subr.bf16.mxu0 0
    %4624 = vmatpush2.bf16.msra.mxu0 0
    %4625 = vmatprep.subr.bf16.mxu0 0
    %4626 = vmatpush2.bf16.msra.mxu0 0
    %4627 = vmatprep.subr.bf16.mxu0 0
    %4628 = vmatpush2.bf16.msra.mxu0 0
    %4629 = vmatprep.subr.bf16.mxu0 0
    %4630 = vmatpush2.bf16.msra.mxu0 0
    %4631 = vmatprep.subr.bf16.mxu0 0
    %4632 = vmatpush2.bf16.msra.mxu0 0
    %4633 = vmatprep.subr.bf16.mxu0 0
    %4634 = vmatpush2.bf16.msra.mxu0 0
    %4635 = vmatprep.subr.bf16.mxu0 0
    %4636 = vmatpush2.bf16.msra.mxu0 0
    %4637 = vmatprep.mubr.bf16.mxu0 0
    %4638 = vmatmul.mubr.bf16.gmra.mxu0 %v4603
    %v4639 = vpop.f32.mrf.mxu0
    %v4640 = vadd.f32 0.0, %v4639
    %v4641 = vpop.f32.mrf.mxu0
    %v4642 = vpop.f32.mrf.mxu0
    %v4643 = vpop.f32.mrf.mxu0
    %4644 = vdwg.mxu0
    %v4647 = vunpack.c.l.b16 %v137
    %v4648 = vunpack.c.l.b16 %v138
    %v4649 = vpack.c.b16 %v4648, %v4647
    %v4652 = vsel %vm3584, %v3957, 0
    %4654 = vmatprep.subr.bf16.mxu0 0
    %4655 = vmatpush1.bf16.msra.mxu0 0
    %4656 = vmatprep.subr.bf16.mxu0 0
    %4657 = vmatpush1.bf16.msra.mxu0 0
    %4658 = vmatprep.subr.bf16.mxu0 0
    %4659 = vmatpush1.bf16.msra.mxu0 0
    %4660 = vmatprep.subr.bf16.mxu0 0
    %4661 = vmatpush1.bf16.msra.mxu0 0
    %4662 = vmatprep.subr.bf16.mxu0 0
    %4663 = vmatpush1.bf16.msra.mxu0 0
    %4664 = vmatprep.subr.bf16.mxu0 0
    %4665 = vmatpush1.bf16.msra.mxu0 0
    %4666 = vmatprep.subr.bf16.mxu0 0
    %4667 = vmatpush1.bf16.msra.mxu0 0
    %4668 = vmatprep.subr.bf16.mxu0 0
    %4669 = vmatpush1.bf16.msra.mxu0 %v4649
    %4670 = vmatprep.subr.bf16.mxu0 0
    %4671 = vmatpush2.bf16.msra.mxu0 0
    %4672 = vmatprep.subr.bf16.mxu0 0
    %4673 = vmatpush2.bf16.msra.mxu0 0
    %4674 = vmatprep.subr.bf16.mxu0 0
    %4675 = vmatpush2.bf16.msra.mxu0 0
    %4676 = vmatprep.subr.bf16.mxu0 0
    %4677 = vmatpush2.bf16.msra.mxu0 0
    %4678 = vmatprep.subr.bf16.mxu0 0
    %4679 = vmatpush2.bf16.msra.mxu0 0
    %4680 = vmatprep.subr.bf16.mxu0 0
    %4681 = vmatpush2.bf16.msra.mxu0 0
    %4682 = vmatprep.subr.bf16.mxu0 0
    %4683 = vmatpush2.bf16.msra.mxu0 0
    %4684 = vmatprep.subr.bf16.mxu0 0
    %4685 = vmatpush2.bf16.msra.mxu0 0
    %4686 = vmatprep.mubr.bf16.mxu0 0
    %4687 = vmatmul.mubr.bf16.gmra.mxu0 %v4652
    %v4688 = vpop.f32.mrf.mxu0
    %v4689 = vadd.f32 0.0, %v4688
    %v4690 = vpop.f32.mrf.mxu0
    %v4691 = vpop.f32.mrf.mxu0
    %v4692 = vpop.f32.mrf.mxu0
    %4693 = vdwg.mxu0
    %v4696 = vunpack.c.l.b16 %v139
    %v4697 = vunpack.c.l.b16 %v140
    %v4698 = vpack.c.b16 %v4697, %v4696
    %v4701 = vsel %vm3584, %v3958, 0
    %4703 = vmatprep.subr.bf16.mxu0 0
    %4704 = vmatpush1.bf16.msra.mxu0 0
    %4705 = vmatprep.subr.bf16.mxu0 0
    %4706 = vmatpush1.bf16.msra.mxu0 0
    %4707 = vmatprep.subr.bf16.mxu0 0
    %4708 = vmatpush1.bf16.msra.mxu0 0
    %4709 = vmatprep.subr.bf16.mxu0 0
    %4710 = vmatpush1.bf16.msra.mxu0 0
    %4711 = vmatprep.subr.bf16.mxu0 0
    %4712 = vmatpush1.bf16.msra.mxu0 0
    %4713 = vmatprep.subr.bf16.mxu0 0
    %4714 = vmatpush1.bf16.msra.mxu0 0
    %4715 = vmatprep.subr.bf16.mxu0 0
    %4716 = vmatpush1.bf16.msra.mxu0 0
    %4717 = vmatprep.subr.bf16.mxu0 0
    %4718 = vmatpush1.bf16.msra.mxu0 %v4698
    %4719 = vmatprep.subr.bf16.mxu0 0
    %4720 = vmatpush2.bf16.msra.mxu0 0
    %4721 = vmatprep.subr.bf16.mxu0 0
    %4722 = vmatpush2.bf16.msra.mxu0 0
    %4723 = vmatprep.subr.bf16.mxu0 0
    %4724 = vmatpush2.bf16.msra.mxu0 0
    %4725 = vmatprep.subr.bf16.mxu0 0
    %4726 = vmatpush2.bf16.msra.mxu0 0
    %4727 = vmatprep.subr.bf16.mxu0 0
    %4728 = vmatpush2.bf16.msra.mxu0 0
    %4729 = vmatprep.subr.bf16.mxu0 0
    %4730 = vmatpush2.bf16.msra.mxu0 0
    %4731 = vmatprep.subr.bf16.mxu0 0
    %4732 = vmatpush2.bf16.msra.mxu0 0
    %4733 = vmatprep.subr.bf16.mxu0 0
    %4734 = vmatpush2.bf16.msra.mxu0 0
    %4735 = vmatprep.mubr.bf16.mxu0 0
    %4736 = vmatmul.mubr.bf16.gmra.mxu0 %v4701
    %v4737 = vpop.f32.mrf.mxu0
    %v4738 = vadd.f32 0.0, %v4737
    %v4739 = vpop.f32.mrf.mxu0
    %v4740 = vpop.f32.mrf.mxu0
    %v4741 = vpop.f32.mrf.mxu0
    %4742 = vdwg.mxu0
    %v4743 = vpack.c.bf16 %v4003, %v4003
    %v4744 = vpack.c.bf16 %v4052, %v4052
    %v4745 = vpack.c.bf16 %v4101, %v4101
    %v4746 = vpack.c.bf16 %v4150, %v4150
    %v4747 = vpack.c.bf16 %v4199, %v4199
    %v4748 = vpack.c.bf16 %v4248, %v4248
    %v4749 = vpack.c.bf16 %v4297, %v4297
    %v4750 = vpack.c.bf16 %v4346, %v4346
    %v4751 = vpack.c.bf16 %v4395, %v4395
    %v4752 = vpack.c.bf16 %v4444, %v4444
    %v4753 = vpack.c.bf16 %v4493, %v4493
    %v4754 = vpack.c.bf16 %v4542, %v4542
    %v4755 = vpack.c.bf16 %v4591, %v4591
    %v4756 = vpack.c.bf16 %v4640, %v4640
    %v4757 = vpack.c.bf16 %v4689, %v4689
    %v4758 = vpack.c.bf16 %v4738, %v4738
    %v4759 = vld [vmem:[#allocation9] sm:$0xf]
    %v4760 = vld [vmem:[#allocation9 + $0x4] sm:$0xf]
    %v4761 = vld [vmem:[#allocation9 + $0x8] sm:$0xf]
    %v4762 = vld [vmem:[#allocation9 + $0xc] sm:$0xf]
    %v4763 = vld [vmem:[#allocation9 + $0x10] sm:$0xf]
    %v4764 = vld [vmem:[#allocation9 + $0x14] sm:$0xf]
    %v4765 = vld [vmem:[#allocation9 + $0x18] sm:$0xf]
    %v4766 = vld [vmem:[#allocation9 + $0x1c] sm:$0xf]
    %v4767 = vld [vmem:[#allocation9 + $0x20] sm:$0xf]
    %v4768 = vld [vmem:[#allocation9 + $0x24] sm:$0xf]
    %v4769 = vld [vmem:[#allocation9 + $0x28] sm:$0xf]
    %v4770 = vld [vmem:[#allocation9 + $0x2c] sm:$0xf]
    %v4771 = vld [vmem:[#allocation9 + $0x30] sm:$0xf]
    %v4772 = vld [vmem:[#allocation9 + $0x34] sm:$0xf]
    %v4773 = vld [vmem:[#allocation9 + $0x38] sm:$0xf]
    %v4774 = vld [vmem:[#allocation9 + $0x3c] sm:$0xf]
    %v4775 = vlaneseq
    %v4776 = vshrl.u32 %v4775, 7
    %v4777 = vsub.s32 0, %v4776
    %v4778 = vrot.slane %v144, %v4777
    %v4795 = vunpack.c.l.b16 %v4743
    %v4796 = vunpack.c.l.b16 %v4744
    %v4797 = vunpack.c.l.b16 %v4745
    %v4798 = vunpack.c.l.b16 %v4746
    %v4799 = vunpack.c.l.b16 %v4747
    %v4800 = vunpack.c.l.b16 %v4748
    %v4801 = vunpack.c.l.b16 %v4749
    %v4802 = vunpack.c.l.b16 %v4750
    %v4803 = vunpack.c.l.b16 %v4751
    %v4804 = vunpack.c.l.b16 %v4752
    %v4805 = vunpack.c.l.b16 %v4753
    %v4806 = vunpack.c.l.b16 %v4754
    %v4807 = vunpack.c.l.b16 %v4755
    %v4808 = vunpack.c.l.b16 %v4756
    %v4809 = vunpack.c.l.b16 %v4757
    %v4810 = vunpack.c.l.b16 %v4758
    %v4811 = vrot.slane %v4796, 7
    %vm4812 = vcmask 1041409
    %v4813 = vsel %vm4812, %v4811, %v4795
    %v4814 = vrot.slane %v4797, 6
    %vm4815 = vcmask 1042434
    %v4816 = vsel %vm4815, %v4814, %v4813
    %v4817 = vrot.slane %v4798, 5
    %vm4818 = vcmask 1043459
    %v4819 = vsel %vm4818, %v4817, %v4816
    %v4820 = vrot.slane %v4799, 4
    %vm4821 = vcmask 1044484
    %v4822 = vsel %vm4821, %v4820, %v4819
    %v4823 = vrot.slane %v4800, 3
    %vm4824 = vcmask 1045509
    %v4825 = vsel %vm4824, %v4823, %v4822
    %v4826 = vrot.slane %v4801, 2
    %vm4827 = vcmask 1046534
    %v4828 = vsel %vm4827, %v4826, %v4825
    %v4829 = vrot.slane %v4802, 1
    %vm4830 = vcmask 1047559
    %v4831 = vsel %vm4830, %v4829, %v4828
    %v4832 = vrot.slane %v4804, 7
    %v4833 = vsel %vm4812, %v4832, %v4803
    %v4834 = vrot.slane %v4805, 6
    %v4835 = vsel %vm4815, %v4834, %v4833
    %v4836 = vrot.slane %v4806, 5
    %v4837 = vsel %vm4818, %v4836, %v4835
    %v4838 = vrot.slane %v4807, 4
    %v4839 = vsel %vm4821, %v4838, %v4837
    %v4840 = vrot.slane %v4808, 3
    %v4841 = vsel %vm4824, %v4840, %v4839
    %v4842 = vrot.slane %v4809, 2
    %v4843 = vsel %vm4827, %v4842, %v4841
    %v4844 = vrot.slane %v4810, 1
    %v4845 = vsel %vm4830, %v4844, %v4843
    %v4846 = vpack.c.b16 %v4845, %v4831
    %v4864 = vunpack.c.l.b16 %v4759
    %v4865 = vunpack.c.l.b16 %v4760
    %v4866 = vunpack.c.l.b16 %v4761
    %v4867 = vunpack.c.l.b16 %v4762
    %v4868 = vunpack.c.l.b16 %v4763
    %v4869 = vunpack.c.l.b16 %v4764
    %v4870 = vunpack.c.l.b16 %v4765
    %v4871 = vunpack.c.l.b16 %v4766
    %v4872 = vunpack.c.l.b16 %v4767
    %v4873 = vunpack.c.l.b16 %v4768
    %v4874 = vunpack.c.l.b16 %v4769
    %v4875 = vunpack.c.l.b16 %v4770
    %v4876 = vunpack.c.l.b16 %v4771
    %v4877 = vunpack.c.l.b16 %v4772
    %v4878 = vunpack.c.l.b16 %v4773
    %v4879 = vunpack.c.l.b16 %v4774
    %v4880 = vpack.c.b16 %v4865, %v4864
    %v4881 = vpack.c.b16 %v4867, %v4866
    %v4882 = vpack.c.b16 %v4869, %v4868
    %v4883 = vpack.c.b16 %v4871, %v4870
    %v4884 = vpack.c.b16 %v4873, %v4872
    %v4885 = vpack.c.b16 %v4875, %v4874
    %v4886 = vpack.c.b16 %v4877, %v4876
    %v4887 = vpack.c.b16 %v4879, %v4878
    %4896 = vmatprep.subr.bf16.mxu0 0
    %4897 = vmatpush1.bf16.msra.mxu0 %v4887
    %4898 = vmatprep.subr.bf16.mxu0 0
    %4899 = vmatpush1.bf16.msra.mxu0 %v4886
    %4900 = vmatprep.subr.bf16.mxu0 0
    %4901 = vmatpush1.bf16.msra.mxu0 %v4885
    %4902 = vmatprep.subr.bf16.mxu0 0
    %4903 = vmatpush1.bf16.msra.mxu0 %v4884
    %4904 = vmatprep.subr.bf16.mxu0 0
    %4905 = vmatpush1.bf16.msra.mxu0 %v4883
    %4906 = vmatprep.subr.bf16.mxu0 0
    %4907 = vmatpush1.bf16.msra.mxu0 %v4882
    %4908 = vmatprep.subr.bf16.mxu0 0
    %4909 = vmatpush1.bf16.msra.mxu0 %v4881
    %4910 = vmatprep.subr.bf16.mxu0 0
    %4911 = vmatpush1.bf16.msra.mxu0 %v4880
    %4912 = vmatprep.subr.bf16.mxu0 0
    %4913 = vmatpush2.bf16.msra.mxu0 0
    %4914 = vmatprep.subr.bf16.mxu0 0
    %4915 = vmatpush2.bf16.msra.mxu0 0
    %4916 = vmatprep.subr.bf16.mxu0 0
    %4917 = vmatpush2.bf16.msra.mxu0 0
    %4918 = vmatprep.subr.bf16.mxu0 0
    %4919 = vmatpush2.bf16.msra.mxu0 0
    %4920 = vmatprep.subr.bf16.mxu0 0
    %4921 = vmatpush2.bf16.msra.mxu0 0
    %4922 = vmatprep.subr.bf16.mxu0 0
    %4923 = vmatpush2.bf16.msra.mxu0 0
    %4924 = vmatprep.subr.bf16.mxu0 0
    %4925 = vmatpush2.bf16.msra.mxu0 0
    %4926 = vmatprep.subr.bf16.mxu0 0
    %4927 = vmatpush2.bf16.msra.mxu0 0
    %4928 = vmatprep.mubr.bf16.mxu0 0
    %4929 = vmatmul.mubr.bf16.gmra.mxu0 %v4846
    %v4930 = vpop.f32.mrf.mxu0
    %v4931 = vadd.f32 %v4778, %v4930
    %v4932 = vpop.f32.mrf.mxu0
    %v4933 = vpop.f32.mrf.mxu0
    %v4934 = vadd.f32 %v4778, %v4933
    %v4935 = vpop.f32.mrf.mxu0
    %4936 = vdwg.mxu0
    %v4937 = vlaneseq
    %v4938 = vshrl.u32 %v4937, 7
    %v4939 = vsub.s32 0, %v4938
    %v4940 = vrot.slane %v142, %v4939
    %v4941 = vmul.f32 %v4931, %v4940
    %v4942 = vmul.f32 %v4934, %v4940
    %4943 = vadd.xlane.f32.xlu0 %v4941
    %v4944 = vpop.xlane.xlu0 %4943
    %4945 = vadd.xlane.f32.xlu0 %v4942
    %v4946 = vpop.xlane.xlu0 %4945
    %v4947 = vlaneseq
    %v4948 = vshrl.u32 %v4947, 7
    %v4949 = vsub.s32 0, %v4948
    %v4950 = vrot.slane %v143, %v4949
    %v4951 = vmul.f32 %v93, %v4950
    %v4952 = vmul.f32 %v94, %v4950
    %v4953 = vmul.f32 %v95, %v4950
    %v4954 = vmul.f32 %v96, %v4950
    %v4955 = vmul.f32 %v97, %v4950
    %v4956 = vmul.f32 %v98, %v4950
    %v4957 = vmul.f32 %v99, %v4950
    %v4958 = vmul.f32 %v100, %v4950
    %v4959 = vmul.f32 %v101, %v4950
    %v4960 = vmul.f32 %v102, %v4950
    %v4961 = vmul.f32 %v103, %v4950
    %v4962 = vmul.f32 %v104, %v4950
    %v4963 = vmul.f32 %v105, %v4950
    %v4964 = vmul.f32 %v106, %v4950
    %v4965 = vmul.f32 %v107, %v4950
    %v4966 = vmul.f32 %v108, %v4950
    %4967 = vadd.xlane.f32.xlu0 %v4951
    %v4968 = vpop.xlane.xlu0 %4967
    %4969 = vadd.xlane.f32.xlu0 %v4952
    %v4970 = vpop.xlane.xlu0 %4969
    %4971 = vadd.xlane.f32.xlu0 %v4953
    %v4972 = vpop.xlane.xlu0 %4971
    %4973 = vadd.xlane.f32.xlu0 %v4954
    %v4974 = vpop.xlane.xlu0 %4973
    %4975 = vadd.xlane.f32.xlu0 %v4955
    %v4976 = vpop.xlane.xlu0 %4975
    %4977 = vadd.xlane.f32.xlu0 %v4956
    %v4978 = vpop.xlane.xlu0 %4977
    %4979 = vadd.xlane.f32.xlu0 %v4957
    %v4980 = vpop.xlane.xlu0 %4979
    %4981 = vadd.xlane.f32.xlu0 %v4958
    %v4982 = vpop.xlane.xlu0 %4981
    %4983 = vadd.xlane.f32.xlu0 %v4959
    %v4984 = vpop.xlane.xlu0 %4983
    %4985 = vadd.xlane.f32.xlu0 %v4960
    %v4986 = vpop.xlane.xlu0 %4985
    %4987 = vadd.xlane.f32.xlu0 %v4961
    %v4988 = vpop.xlane.xlu0 %4987
    %4989 = vadd.xlane.f32.xlu0 %v4962
    %v4990 = vpop.xlane.xlu0 %4989
    %4991 = vadd.xlane.f32.xlu0 %v4963
    %v4992 = vpop.xlane.xlu0 %4991
    %4993 = vadd.xlane.f32.xlu0 %v4964
    %v4994 = vpop.xlane.xlu0 %4993
    %4995 = vadd.xlane.f32.xlu0 %v4965
    %v4996 = vpop.xlane.xlu0 %4995
    %4997 = vadd.xlane.f32.xlu0 %v4966
    %v4998 = vpop.xlane.xlu0 %4997
    %v5001 = vlaneseq
    %v5002 = vshrl.u32 %v5001, 7
    %v5003 = vsub.s32 0, %v5002
    %v5004 = vrot.slane %v4944, %v5003
    %v5005 = vlaneseq
    %v5006 = vshrl.u32 %v5005, 7
    %v5007 = vsub.s32 1, %v5006
    %v5008 = vrot.slane %v4944, %v5007
    %v5009 = vlaneseq
    %v5010 = vshrl.u32 %v5009, 7
    %v5011 = vsub.s32 2, %v5010
    %v5012 = vrot.slane %v4944, %v5011
    %v5013 = vlaneseq
    %v5014 = vshrl.u32 %v5013, 7
    %v5015 = vsub.s32 3, %v5014
    %v5016 = vrot.slane %v4944, %v5015
    %v5017 = vlaneseq
    %v5018 = vshrl.u32 %v5017, 7
    %v5019 = vsub.s32 4, %v5018
    %v5020 = vrot.slane %v4944, %v5019
    %v5021 = vlaneseq
    %v5022 = vshrl.u32 %v5021, 7
    %v5023 = vsub.s32 5, %v5022
    %v5024 = vrot.slane %v4944, %v5023
    %v5025 = vlaneseq
    %v5026 = vshrl.u32 %v5025, 7
    %v5027 = vsub.s32 6, %v5026
    %v5028 = vrot.slane %v4944, %v5027
    %v5029 = vlaneseq
    %v5030 = vshrl.u32 %v5029, 7
    %v5031 = vsub.s32 7, %v5030
    %v5032 = vrot.slane %v4944, %v5031
    %v5033 = vlaneseq
    %v5034 = vshrl.u32 %v5033, 7
    %v5035 = vsub.s32 0, %v5034
    %v5036 = vrot.slane %v4946, %v5035
    %v5037 = vlaneseq
    %v5038 = vshrl.u32 %v5037, 7
    %v5039 = vsub.s32 1, %v5038
    %v5040 = vrot.slane %v4946, %v5039
    %v5041 = vlaneseq
    %v5042 = vshrl.u32 %v5041, 7
    %v5043 = vsub.s32 2, %v5042
    %v5044 = vrot.slane %v4946, %v5043
    %v5045 = vlaneseq
    %v5046 = vshrl.u32 %v5045, 7
    %v5047 = vsub.s32 3, %v5046
    %v5048 = vrot.slane %v4946, %v5047
    %v5049 = vlaneseq
    %v5050 = vshrl.u32 %v5049, 7
    %v5051 = vsub.s32 4, %v5050
    %v5052 = vrot.slane %v4946, %v5051
    %v5053 = vlaneseq
    %v5054 = vshrl.u32 %v5053, 7
    %v5055 = vsub.s32 5, %v5054
    %v5056 = vrot.slane %v4946, %v5055
    %v5057 = vlaneseq
    %v5058 = vshrl.u32 %v5057, 7
    %v5059 = vsub.s32 6, %v5058
    %v5060 = vrot.slane %v4946, %v5059
    %v5061 = vlaneseq
    %v5062 = vshrl.u32 %v5061, 7
    %v5063 = vsub.s32 7, %v5062
    %v5064 = vrot.slane %v4946, %v5063
    %v5081 = vadd.f32 %v5004, %v4968
    %v5082 = vadd.f32 %v5008, %v4970
    %v5083 = vadd.f32 %v5012, %v4972
    %v5084 = vadd.f32 %v5016, %v4974
    %v5085 = vadd.f32 %v5020, %v4976
    %v5086 = vadd.f32 %v5024, %v4978
    %v5087 = vadd.f32 %v5028, %v4980
    %v5088 = vadd.f32 %v5032, %v4982
    %v5089 = vadd.f32 %v5036, %v4984
    %v5090 = vadd.f32 %v5040, %v4986
    %v5091 = vadd.f32 %v5044, %v4988
    %v5092 = vadd.f32 %v5048, %v4990
    %v5093 = vadd.f32 %v5052, %v4992
    %v5094 = vadd.f32 %v5056, %v4994
    %v5095 = vadd.f32 %v5060, %v4996
    %v5096 = vadd.f32 %v5064, %v4998
    %v5097 = vstv %s146
    %v5098 = vadd.f32 %v5081, %v5097
    %v5099 = vadd.f32 %v5082, %v5097
    %v5100 = vadd.f32 %v5083, %v5097
    %v5101 = vadd.f32 %v5084, %v5097
    %v5102 = vadd.f32 %v5085, %v5097
    %v5103 = vadd.f32 %v5086, %v5097
    %v5104 = vadd.f32 %v5087, %v5097
    %v5105 = vadd.f32 %v5088, %v5097
    %v5106 = vadd.f32 %v5089, %v5097
    %v5107 = vadd.f32 %v5090, %v5097
    %v5108 = vadd.f32 %v5091, %v5097
    %v5109 = vadd.f32 %v5092, %v5097
    %v5110 = vadd.f32 %v5093, %v5097
    %v5111 = vadd.f32 %v5094, %v5097
    %v5112 = vadd.f32 %v5095, %v5097
    %v5113 = vadd.f32 %v5096, %v5097
    %v5114 = vxor.u32 %v5098, 2147483648
    %v5115 = vxor.u32 %v5099, 2147483648
    %v5116 = vxor.u32 %v5100, 2147483648
    %v5117 = vxor.u32 %v5101, 2147483648
    %v5118 = vxor.u32 %v5102, 2147483648
    %v5119 = vxor.u32 %v5103, 2147483648
    %v5120 = vxor.u32 %v5104, 2147483648
    %v5121 = vxor.u32 %v5105, 2147483648
    %v5122 = vxor.u32 %v5106, 2147483648
    %v5123 = vxor.u32 %v5107, 2147483648
    %v5124 = vxor.u32 %v5108, 2147483648
    %v5125 = vxor.u32 %v5109, 2147483648
    %v5126 = vxor.u32 %v5110, 2147483648
    %v5127 = vxor.u32 %v5111, 2147483648
    %v5128 = vxor.u32 %v5112, 2147483648
    %v5129 = vxor.u32 %v5113, 2147483648
    %v5130 = vmul.f32 %v5114, 1.442695
    %v5131 = vpow.pop %v5130
    %v5132 = vmul.f32 %v5115, 1.442695
    %v5133 = vpow.pop %v5132
    %v5134 = vmul.f32 %v5116, 1.442695
    %v5135 = vpow.pop %v5134
    %v5136 = vmul.f32 %v5117, 1.442695
    %v5137 = vpow.pop %v5136
    %v5138 = vmul.f32 %v5118, 1.442695
    %v5139 = vpow.pop %v5138
    %v5140 = vmul.f32 %v5119, 1.442695
    %v5141 = vpow.pop %v5140
    %v5142 = vmul.f32 %v5120, 1.442695
    %v5143 = vpow.pop %v5142
    %v5144 = vmul.f32 %v5121, 1.442695
    %v5145 = vpow.pop %v5144
    %v5146 = vmul.f32 %v5122, 1.442695
    %v5147 = vpow.pop %v5146
    %v5148 = vmul.f32 %v5123, 1.442695
    %v5149 = vpow.pop %v5148
    %v5150 = vmul.f32 %v5124, 1.442695
    %v5151 = vpow.pop %v5150
    %v5152 = vmul.f32 %v5125, 1.442695
    %v5153 = vpow.pop %v5152
    %v5154 = vmul.f32 %v5126, 1.442695
    %v5155 = vpow.pop %v5154
    %v5156 = vmul.f32 %v5127, 1.442695
    %v5157 = vpow.pop %v5156
    %v5158 = vmul.f32 %v5128, 1.442695
    %v5159 = vpow.pop %v5158
    %v5160 = vmul.f32 %v5129, 1.442695
    %v5161 = vpow.pop %v5160
    %v5162 = vadd.f32 %v5131, 1.0
    %v5163 = vadd.f32 %v5133, 1.0
    %v5164 = vadd.f32 %v5135, 1.0
    %v5165 = vadd.f32 %v5137, 1.0
    %v5166 = vadd.f32 %v5139, 1.0
    %v5167 = vadd.f32 %v5141, 1.0
    %v5168 = vadd.f32 %v5143, 1.0
    %v5169 = vadd.f32 %v5145, 1.0
    %v5170 = vadd.f32 %v5147, 1.0
    %v5171 = vadd.f32 %v5149, 1.0
    %v5172 = vadd.f32 %v5151, 1.0
    %v5173 = vadd.f32 %v5153, 1.0
    %v5174 = vadd.f32 %v5155, 1.0
    %v5175 = vadd.f32 %v5157, 1.0
    %v5176 = vadd.f32 %v5159, 1.0
    %v5177 = vadd.f32 %v5161, 1.0
    %v5178 = vrcp.pop %v5162
    %v5179 = vmul.f32 1.0, %v5178
    %v5180 = vrcp.pop %v5163
    %v5181 = vmul.f32 1.0, %v5180
    %v5182 = vrcp.pop %v5164
    %v5183 = vmul.f32 1.0, %v5182
    %v5184 = vrcp.pop %v5165
    %v5185 = vmul.f32 1.0, %v5184
    %v5186 = vrcp.pop %v5166
    %v5187 = vmul.f32 1.0, %v5186
    %v5188 = vrcp.pop %v5167
    %v5189 = vmul.f32 1.0, %v5188
    %v5190 = vrcp.pop %v5168
    %v5191 = vmul.f32 1.0, %v5190
    %v5192 = vrcp.pop %v5169
    %v5193 = vmul.f32 1.0, %v5192
    %v5194 = vrcp.pop %v5170
    %v5195 = vmul.f32 1.0, %v5194
    %v5196 = vrcp.pop %v5171
    %v5197 = vmul.f32 1.0, %v5196
    %v5198 = vrcp.pop %v5172
    %v5199 = vmul.f32 1.0, %v5198
    %v5200 = vrcp.pop %v5173
    %v5201 = vmul.f32 1.0, %v5200
    %v5202 = vrcp.pop %v5174
    %v5203 = vmul.f32 1.0, %v5202
    %v5204 = vrcp.pop %v5175
    %v5205 = vmul.f32 1.0, %v5204
    %v5206 = vrcp.pop %v5176
    %v5207 = vmul.f32 1.0, %v5206
    %v5208 = vrcp.pop %v5177
    %v5209 = vmul.f32 1.0, %v5208
    %v5212 = vcombine.high %v4931, %v4931
    %v5214 = vunpack.c.l.s4 1966171168
    %v5215 = vunpack.c.0.s8 %v5214
    %v5216 = vlaneseq
    %v5217 = vshrl.u32 %v5216, 7
    %v5218 = vsub.s32 %v5215, %v5217
    %v5219 = vrot.slane %v4931, %v5218
    %v5221 = vunpack.c.l.s4 1966171168
    %v5222 = vunpack.c.0.s8 %v5221
    %v5223 = vlaneseq
    %v5224 = vshrl.u32 %v5223, 7
    %v5225 = vsub.s32 %v5222, %v5224
    %v5226 = vrot.slane %v5212, %v5225
    %v5227 = vcombine.high %v5219, %v5219
    %v5228 = vcombine.high %v5226, %v5226
    %v5230 = vunpack.c.l.s4 1966171168
    %v5231 = vunpack.c.0.s8 %v5230
    %v5232 = vlaneseq
    %v5233 = vshrl.u32 %v5232, 7
    %v5234 = vsub.s32 %v5231, %v5233
    %v5235 = vrot.slane %v5219, %v5234
    %v5237 = vunpack.c.l.s4 1966171168
    %v5238 = vunpack.c.0.s8 %v5237
    %v5239 = vlaneseq
    %v5240 = vshrl.u32 %v5239, 7
    %v5241 = vsub.s32 %v5238, %v5240
    %v5242 = vrot.slane %v5226, %v5241
    %v5244 = vunpack.c.l.s4 1966171168
    %v5245 = vunpack.c.0.s8 %v5244
    %v5246 = vlaneseq
    %v5247 = vshrl.u32 %v5246, 7
    %v5248 = vsub.s32 %v5245, %v5247
    %v5249 = vrot.slane %v5227, %v5248
    %v5251 = vunpack.c.l.s4 1966171168
    %v5252 = vunpack.c.0.s8 %v5251
    %v5253 = vlaneseq
    %v5254 = vshrl.u32 %v5253, 7
    %v5255 = vsub.s32 %v5252, %v5254
    %v5256 = vrot.slane %v5228, %v5255
    %v5257 = vcombine.high %v5235, %v5235
    %v5258 = vcombine.high %v5242, %v5242
    %v5259 = vcombine.high %v5249, %v5249
    %v5260 = vcombine.high %v5256, %v5256
    %v5261 = vcombine.high %v4934, %v4934
    %v5263 = vunpack.c.l.s4 1966171168
    %v5264 = vunpack.c.0.s8 %v5263
    %v5265 = vlaneseq
    %v5266 = vshrl.u32 %v5265, 7
    %v5267 = vsub.s32 %v5264, %v5266
    %v5268 = vrot.slane %v4934, %v5267
    %v5270 = vunpack.c.l.s4 1966171168
    %v5271 = vunpack.c.0.s8 %v5270
    %v5272 = vlaneseq
    %v5273 = vshrl.u32 %v5272, 7
    %v5274 = vsub.s32 %v5271, %v5273
    %v5275 = vrot.slane %v5261, %v5274
    %v5276 = vcombine.high %v5268, %v5268
    %v5277 = vcombine.high %v5275, %v5275
    %v5279 = vunpack.c.l.s4 1966171168
    %v5280 = vunpack.c.0.s8 %v5279
    %v5281 = vlaneseq
    %v5282 = vshrl.u32 %v5281, 7
    %v5283 = vsub.s32 %v5280, %v5282
    %v5284 = vrot.slane %v5268, %v5283
    %v5286 = vunpack.c.l.s4 1966171168
    %v5287 = vunpack.c.0.s8 %v5286
    %v5288 = vlaneseq
    %v5289 = vshrl.u32 %v5288, 7
    %v5290 = vsub.s32 %v5287, %v5289
    %v5291 = vrot.slane %v5275, %v5290
    %v5293 = vunpack.c.l.s4 1966171168
    %v5294 = vunpack.c.0.s8 %v5293
    %v5295 = vlaneseq
    %v5296 = vshrl.u32 %v5295, 7
    %v5297 = vsub.s32 %v5294, %v5296
    %v5298 = vrot.slane %v5276, %v5297
    %v5300 = vunpack.c.l.s4 1966171168
    %v5301 = vunpack.c.0.s8 %v5300
    %v5302 = vlaneseq
    %v5303 = vshrl.u32 %v5302, 7
    %v5304 = vsub.s32 %v5301, %v5303
    %v5305 = vrot.slane %v5277, %v5304
    %v5306 = vcombine.high %v5284, %v5284
    %v5307 = vcombine.high %v5291, %v5291
    %v5308 = vcombine.high %v5298, %v5298
    %v5309 = vcombine.high %v5305, %v5305
    %v5310 = vlaneseq
    %v5311 = vshrl.u32 %v5310, 7
    %v5312 = vsub.s32 0, %v5311
    %v5313 = vrot.slane %v5235, %v5312
    %v5314 = vlaneseq
    %v5315 = vshrl.u32 %v5314, 7
    %v5316 = vsub.s32 0, %v5315
    %v5317 = vrot.slane %v5249, %v5316
    %v5318 = vlaneseq
    %v5319 = vshrl.u32 %v5318, 7
    %v5320 = vsub.s32 0, %v5319
    %v5321 = vrot.slane %v5257, %v5320
    %v5322 = vlaneseq
    %v5323 = vshrl.u32 %v5322, 7
    %v5324 = vsub.s32 0, %v5323
    %v5325 = vrot.slane %v5259, %v5324
    %v5326 = vlaneseq
    %v5327 = vshrl.u32 %v5326, 7
    %v5328 = vsub.s32 0, %v5327
    %v5329 = vrot.slane %v5242, %v5328
    %v5330 = vlaneseq
    %v5331 = vshrl.u32 %v5330, 7
    %v5332 = vsub.s32 0, %v5331
    %v5333 = vrot.slane %v5256, %v5332
    %v5334 = vlaneseq
    %v5335 = vshrl.u32 %v5334, 7
    %v5336 = vsub.s32 0, %v5335
    %v5337 = vrot.slane %v5258, %v5336
    %v5338 = vlaneseq
    %v5339 = vshrl.u32 %v5338, 7
    %v5340 = vsub.s32 0, %v5339
    %v5341 = vrot.slane %v5260, %v5340
    %v5342 = vlaneseq
    %v5343 = vshrl.u32 %v5342, 7
    %v5344 = vsub.s32 0, %v5343
    %v5345 = vrot.slane %v5284, %v5344
    %v5346 = vlaneseq
    %v5347 = vshrl.u32 %v5346, 7
    %v5348 = vsub.s32 0, %v5347
    %v5349 = vrot.slane %v5298, %v5348
    %v5350 = vlaneseq
    %v5351 = vshrl.u32 %v5350, 7
    %v5352 = vsub.s32 0, %v5351
    %v5353 = vrot.slane %v5306, %v5352
    %v5354 = vlaneseq
    %v5355 = vshrl.u32 %v5354, 7
    %v5356 = vsub.s32 0, %v5355
    %v5357 = vrot.slane %v5308, %v5356
    %v5358 = vlaneseq
    %v5359 = vshrl.u32 %v5358, 7
    %v5360 = vsub.s32 0, %v5359
    %v5361 = vrot.slane %v5291, %v5360
    %v5362 = vlaneseq
    %v5363 = vshrl.u32 %v5362, 7
    %v5364 = vsub.s32 0, %v5363
    %v5365 = vrot.slane %v5305, %v5364
    %v5366 = vlaneseq
    %v5367 = vshrl.u32 %v5366, 7
    %v5368 = vsub.s32 0, %v5367
    %v5369 = vrot.slane %v5307, %v5368
    %v5370 = vlaneseq
    %v5371 = vshrl.u32 %v5370, 7
    %v5372 = vsub.s32 0, %v5371
    %v5373 = vrot.slane %v5309, %v5372
    %v5390 = vmul.f32 %v5179, %v5313
    %v5391 = vmul.f32 %v5181, %v5317
    %v5392 = vmul.f32 %v5183, %v5321
    %v5393 = vmul.f32 %v5185, %v5325
    %v5394 = vmul.f32 %v5187, %v5329
    %v5395 = vmul.f32 %v5189, %v5333
    %v5396 = vmul.f32 %v5191, %v5337
    %v5397 = vmul.f32 %v5193, %v5341
    %v5398 = vmul.f32 %v5195, %v5345
    %v5399 = vmul.f32 %v5197, %v5349
    %v5400 = vmul.f32 %v5199, %v5353
    %v5401 = vmul.f32 %v5201, %v5357
    %v5402 = vmul.f32 %v5203, %v5361
    %v5403 = vmul.f32 %v5205, %v5365
    %v5404 = vmul.f32 %v5207, %v5369
    %v5405 = vmul.f32 %v5209, %v5373
    %v5406 = vadd.f32 %v93, %v5390
    %v5407 = vadd.f32 %v94, %v5391
    %v5408 = vadd.f32 %v95, %v5392
    %v5409 = vadd.f32 %v96, %v5393
    %v5410 = vadd.f32 %v97, %v5394
    %v5411 = vadd.f32 %v98, %v5395
    %v5412 = vadd.f32 %v99, %v5396
    %v5413 = vadd.f32 %v100, %v5397
    %v5414 = vadd.f32 %v101, %v5398
    %v5415 = vadd.f32 %v102, %v5399
    %v5416 = vadd.f32 %v103, %v5400
    %v5417 = vadd.f32 %v104, %v5401
    %v5418 = vadd.f32 %v105, %v5402
    %v5419 = vadd.f32 %v106, %v5403
    %v5420 = vadd.f32 %v107, %v5404
    %v5421 = vadd.f32 %v108, %v5405
    %5422 = vst [vmem:[#allocation12] sm:$0xff] %v5406
    %5423 = vst [vmem:[#allocation12 + $0x8] sm:$0xff] %v5407
    %5424 = vst [vmem:[#allocation12 + $0x10] sm:$0xff] %v5408
    %5425 = vst [vmem:[#allocation12 + $0x18] sm:$0xff] %v5409
    %5426 = vst [vmem:[#allocation12 + $0x20] sm:$0xff] %v5410
    %5427 = vst [vmem:[#allocation12 + $0x28] sm:$0xff] %v5411
    %5428 = vst [vmem:[#allocation12 + $0x30] sm:$0xff] %v5412
    %5429 = vst [vmem:[#allocation12 + $0x38] sm:$0xff] %v5413
    %5430 = vst [vmem:[#allocation12 + $0x40] sm:$0xff] %v5414
    %5431 = vst [vmem:[#allocation12 + $0x48] sm:$0xff] %v5415
    %5432 = vst [vmem:[#allocation12 + $0x50] sm:$0xff] %v5416
    %5433 = vst [vmem:[#allocation12 + $0x58] sm:$0xff] %v5417
    %5434 = vst [vmem:[#allocation12 + $0x60] sm:$0xff] %v5418
    %5435 = vst [vmem:[#allocation12 + $0x68] sm:$0xff] %v5419
    %5436 = vst [vmem:[#allocation12 + $0x70] sm:$0xff] %v5420
    %5437 = vst [vmem:[#allocation12 + $0x78] sm:$0xff] %v5421
    // Predicated region
    $region46: #{tpu_custom_call.1} parent=1 // pred_check
      _
    $region47: #{tpu_custom_call.1} parent=1 // pred_check_branch
      %5439 = sbr.rel (0) target = $region49
    $region48: #{tpu_custom_call.1} parent=1 // pred_region
      %s5441 = ssub.s32 2048, 2048
      %5442 = vsyncadd [#allocation4], %s5441
      %s5443 = sshll.u32 [#allocation12], 4
      %s5444 = int_to_ptr.vmem [resolvable:$true] %s5443
      %5449 = dma.vmem_to_hbm [thread:$0]  %s5444, 2048, %s6, [#allocation4], 128, 128, 8
    $region49: #{tpu_custom_call.1} parent=1 // pred_fallthru
      _
    // Predicated region
    $region50: #{tpu_custom_call.1} parent=1 // pred_check
      _
    $region51: #{tpu_custom_call.1} parent=1 // pred_check_branch
      %5451 = sbr.rel (0) target = $region53
    $region52: #{tpu_custom_call.1} parent=1 // pred_region
      %5452 = dma.done [#allocation4], 2048
    $region53: #{tpu_custom_call.1} parent=1 // pred_fallthru
      _
    %5453 = vsyncpa [#allocation3], 1
    %5454 = vsyncpa [#allocation7], 1
    %5455 = vsyncpa [#allocation10], 1
    %5456 = vsyncpa [#allocation4], 1
    %5457 = vsyncpa [#allocation5], 1

</llo_original>
